<compile_context>
chip_gen: v5e
topology: v5e:2x2
jax: 0.10.0
libtpu: 0.0.40
codegen_flags: <defaults>
</compile_context>

<pallas_src>
import numpy as np
import jax
import jax.numpy as jnp
from jax.experimental import pallas as pl
from jax.experimental.pallas import tpu as pltpu

EPS = 1e-5                                # PyTorch BatchNorm default eps
_HI = jax.lax.Precision.HIGHEST           # exact f32 matmuls (tiny-batch BN amplifies error)


# ------------- XLA glue: depthwise conv fused with channels-last relayout -------------

def depthwise_to_nlc(x_nchw, w_dw):
    """Depthwise conv (kernel == stride, non-overlapping patches) + NCHW -> (N, P, Cin).

    Reducing the k*k window BEFORE the transpose makes the slab that round-trips HBM
    k*k times smaller than the old pre-transposed patch slab.  Exact f32 (VPU-style
    multiply+reduce, no MXU), which the downstream tiny-batch BN statistics require.
    """
    N, Cin, H, W = x_nchw.shape
    s = w_dw.shape[-1]
    assert H % s == 0 and W % s == 0
    OH, OW = H // s, W // s
    xr = x_nchw.reshape(N, Cin, OH, s, OW, s)                      # free view
    w = w_dw[:, 0].reshape(1, Cin, 1, s, 1, s).astype(jnp.float32)
    y = (xr * w).sum(axis=(3, 5))                                  # (N, Cin, OH, OW) f32
    return y.transpose(0, 2, 3, 1).reshape(N, OH * OW, Cin)        # (N, P, Cin), lane = Cin


# -------------------- kernel A: 1x1 projection + fused pool / BN2d stats --------------

def _project_stats_kernel(y_ref, wpw_ref, psum_ref, psq_ref):
    j = pl.program_id(1)
    # 1x1 conv == channel matmul on the MXU.  f32 operands + HIGHEST precision: needed
    # because the 4-sample BN statistics downstream amplify operand quantization ~10x.
    # For production tolerances this can be relaxed to bf16 operands (single MXU pass).
    z = jnp.dot(y_ref[0], wpw_ref[...],
                preferred_element_type=jnp.float32, precision=_HI)   # (tile_p, Cout)

    @pl.when(j == 0)
    def _():
        psum_ref[...] = jnp.zeros_like(psum_ref)
        psq_ref[...] = jnp.zeros_like(psq_ref)

    # fused adaptive-avg-pool (per-sample spatial sum) + global BN2d statistics.
    psum_ref[...] += jnp.sum(z, axis=0, keepdims=True)[None]
    psq_ref[...] += jnp.sum(z * z, axis=0, keepdims=True)[None]


def _pick_tile_rows(P, cin, budget_bytes=6 * 1024 * 1024):
    """Rows per grid step: full P if it fits the budget, otherwise the largest
    multiple-of-8 tile within budget, with P zero-padded up to a tile multiple.
    Zero rows contribute nothing to sum / sum-of-squares and the true row counts
    are used when finalizing the stats, so padding is exact."""
    cap = max(8, (budget_bytes // (cin * 4)) // 8 * 8)
    if P <= cap:
        return P, P
    tile = cap
    p_pad = ((P + tile - 1) // tile) * tile
    return tile, p_pad


def project_pool_stats_pallas(y_nlc, wpw):
    """1x1 conv (Cin -> Cout) with fused avg-pool / BN2d statistics.

    Returns (psum, psq) of shape (N, Cout) f32: per-sample spatial sum and
    sum-of-squares of the projected feature map."""
    N, P, Cin = y_nlc.shape
    Cout = wpw.shape[1]
    tile_p, p_pad = _pick_tile_rows(P, Cin)
    if p_pad != P:
        y_nlc = jnp.pad(y_nlc, ((0, 0), (0, p_pad - P), (0, 0)))
    grid = (N, p_pad // tile_p)

    flops = N * p_pad * (2 * Cin * Cout + 4 * Cout)
    bytes_accessed = y_nlc.size * 4 + wpw.size * 4 + 2 * N * Cout * 4

    psum, psq = pl.pallas_call(
        _project_stats_kernel,
        grid=grid,
        in_specs=[
            pl.BlockSpec((1, tile_p, Cin), lambda n, j: (n, j, 0)),
            pl.BlockSpec((Cin, Cout), lambda n, j: (0, 0)),
        ],
        out_specs=[
            pl.BlockSpec((1, 1, Cout), lambda n, j: (n, 0, 0)),
            pl.BlockSpec((1, 1, Cout), lambda n, j: (n, 0, 0)),
        ],
        out_shape=[
            jax.ShapeDtypeStruct((N, 1, Cout), jnp.float32),
            jax.ShapeDtypeStruct((N, 1, Cout), jnp.float32),
        ],
        compiler_params=pltpu.CompilerParams(
            dimension_semantics=("parallel", "arbitrary"),
            vmem_limit_bytes=40 * 1024 * 1024),
        cost_estimate=pl.CostEstimate(flops=int(flops), transcendentals=0,
                                      bytes_accessed=int(bytes_accessed)),
    )(y_nlc.astype(jnp.float32), wpw.astype(jnp.float32))
    return psum.reshape(N, Cout), psq.reshape(N, Cout)


# --------------------------------- kernel B: MLP head ---------------------------------

def _mlp_head(x, w0_ref, g0_ref, b0_ref, w1_ref, g1_ref, b1_ref):
    # fc0 (no bias) -> bn0 (training-mode batch stats, clamped one-pass var) -> relu
    h = jnp.dot(x, w0_ref[...], preferred_element_type=jnp.float32, precision=_HI)
    m = jnp.mean(h, axis=0, keepdims=True)
    v = jnp.maximum(jnp.mean(h * h, axis=0, keepdims=True) - m * m, 0.0)
    h = (h - m) * jax.lax.rsqrt(v + EPS) * g0_ref[...] + b0_ref[...]
    h = jnp.maximum(h, 0.0)
    # fc1 (no bias) -> bn1 (with_last_bn=True)
    y = jnp.dot(h, w1_ref[...], preferred_element_type=jnp.float32, precision=_HI)
    m1 = jnp.mean(y, axis=0, keepdims=True)
    v1 = jnp.maximum(jnp.mean(y * y, axis=0, keepdims=True) - m1 * m1, 0.0)
    return (y - m1) * jax.lax.rsqrt(v1 + EPS) * g1_ref[...] + b1_ref[...]


def _make_head_from_stats_kernel(rows_total, rows_per_sample):
    inv_r = 1.0 / float(rows_total)
    inv_p = 1.0 / float(rows_per_sample)

    def kernel(psum_ref, psq_ref, g2_ref, b2_ref,
               w0_ref, g0_ref, b0_ref, w1_ref, g1_ref, b1_ref, o_ref):
        psum = psum_ref[...]                                         # (N, Cout)
        # global BN2d batch statistics from the per-sample accumulators
        mean = jnp.sum(psum, axis=0, keepdims=True) * inv_r          # (1, Cout)
        ex2 = jnp.sum(psq_ref[...], axis=0, keepdims=True) * inv_r
        var = jnp.maximum(ex2 - mean * mean, 0.0)
        # pool-then-affine == BN2d-then-pool (per-channel affine with global stats)
        x = (psum * inv_p - mean) * jax.lax.rsqrt(var + EPS) * g2_ref[...] + b2_ref[...]
        o_ref[...] = _mlp_head(x, w0_ref, g0_ref, b0_ref, w1_ref, g1_ref, b1_ref)

    return kernel


def _head_kernel(xp_ref, w0_ref, g0_ref, b0_ref, w1_ref, g1_ref, b1_ref, o_ref):
    o_ref[...] = _mlp_head(xp_ref[...], w0_ref, g0_ref, b0_ref, w1_ref, g1_ref, b1_ref)


def _full_specs(*arrs):
    specs = []
    for a in arrs:
        nd = a.ndim
        specs.append(pl.BlockSpec(a.shape, lambda i, _n=nd: (0,) * _n))
    return specs


def head_from_stats_pallas(psum, psq, rows_total, rows_per_sample,
                           g2, b2, w0, g0, b0, w1, g1, b1):
    N, C = psum.shape
    hid = w0.shape[1]
    out_c = w1.shape[1]
    args = (psum, psq, g2.reshape(1, C), b2.reshape(1, C),
            w0, g0.reshape(1, hid), b0.reshape(1, hid),
            w1, g1.reshape(1, out_c), b1.reshape(1, out_c))
    flops = N * (2 * C * hid + 2 * hid * out_c) + 10 * N * C
    bytes_accessed = sum(int(a.size) * a.dtype.itemsize for a in args) + N * out_c * 4
    return pl.pallas_call(
        _make_head_from_stats_kernel(rows_total, rows_per_sample),
        grid=(1,),
        in_specs=_full_specs(*args),
        out_specs=pl.BlockSpec((N, out_c), lambda i: (0, 0)),
        out_shape=jax.ShapeDtypeStruct((N, out_c), jnp.float32),
        compiler_params=pltpu.CompilerParams(dimension_semantics=("arbitrary",)),
        cost_estimate=pl.CostEstimate(flops=int(flops), transcendentals=0,
                                      bytes_accessed=int(bytes_accessed)),
    )(*args)


def head_pallas(pooled, w0, g0, b0, w1, g1, b1):
    N, C = pooled.shape
    hid = w0.shape[1]
    out_c = w1.shape[1]
    args = (pooled, w0, g0.reshape(1, hid), b0.reshape(1, hid),
            w1, g1.reshape(1, out_c), b1.reshape(1, out_c))
    flops = N * (2 * C * hid + 2 * hid * out_c)
    bytes_accessed = sum(int(a.size) * a.dtype.itemsize for a in args) + N * out_c * 4
    return pl.pallas_call(
        _head_kernel,
        grid=(1,),
        in_specs=_full_specs(*args),
        out_specs=pl.BlockSpec((N, out_c), lambda i: (0, 0)),
        out_shape=jax.ShapeDtypeStruct((N, out_c), jnp.float32),
        compiler_params=pltpu.CompilerParams(dimension_semantics=("arbitrary",)),
        cost_estimate=pl.CostEstimate(flops=int(flops), transcendentals=0,
                                      bytes_accessed=int(bytes_accessed)),
    )(*args)


# --------------------------------- module wrapper --------------------------------------

class NonLinearNeckSimCLRProjectPallas:
    INC_LIST = (2048, 1024, 512, 256)

    def __init__(self, in_channels, hid_channels, out_channels, key):
        self.in_channels = in_channels
        # input-projection branches (one per inc != in_channels), like __init__
        self.fix = {}
        for idx, inc in enumerate(self.INC_LIST):
            if inc == in_channels:
                continue
            stride = 2 ** idx
            key, k1, k2 = jax.random.split(key, 3)
            w_dw = 0.05 * jax.random.normal(k1, (inc, 1, stride, stride), jnp.float32)
            w_pw = 0.05 * jax.random.normal(k2, (in_channels, inc, 1, 1), jnp.float32)
            gamma = jnp.ones((in_channels,), jnp.float32)   # BN weight init -> 1
            beta = jnp.zeros((in_channels,), jnp.float32)   # BN bias init -> 0
            self.fix[inc] = (stride, w_dw, w_pw, gamma, beta)
        # fc0 / fc1 (bias=False), init_linear='normal' std=0.01; BN gamma=1 beta=0
        key, k0, k1 = jax.random.split(key, 3)
        self.w0 = (0.01 * jax.random.normal(k0, (hid_channels, in_channels), jnp.float32)).T
        self.g0 = jnp.ones((hid_channels,), jnp.float32)
        self.b0 = jnp.zeros((hid_channels,), jnp.float32)
        self.w1 = (0.01 * jax.random.normal(k1, (out_channels, hid_channels), jnp.float32)).T
        self.g1 = jnp.ones((out_channels,), jnp.float32)
        self.b1 = jnp.zeros((out_channels,), jnp.float32)

    def __call__(self, x_list):
        assert len(x_list) == 1
        x = x_list[0]                                        # NCHW
        inc = x.shape[1]
        if inc != self.in_channels:
            _, w_dw, w_pw, g2, b2 = self.fix[inc]
            # depthwise conv fused with the channels-last relayout (XLA glue),
            # then Pallas: 1x1 conv + fused avg-pool / BN2d statistics.
            y_nlc = depthwise_to_nlc(x, w_dw)                # (N, P, Cin) f32
            wpw = w_pw[:, :, 0, 0].T                         # (Cin, Cout)
            psum, psq = project_pool_stats_pallas(y_nlc, wpw)
            P = y_nlc.shape[1]
            y = head_from_stats_pallas(psum, psq, y_nlc.shape[0] * P, P,
                                       g2, b2, self.w0, self.g0, self.b0,
                                       self.w1, self.g1, self.b1)
        else:
            # identity path: pool first (tiny XLA reduction), feed only (N, C)
            pooled = jnp.mean(x, axis=(2, 3))
            y = head_pallas(pooled, self.w0, self.g0, self.b0,
                            self.w1, self.g1, self.b1)
        return [y]


# --------------------------------- pure-JAX reference -----------------------------------

def reference_forward(model, x):
    N, inc, H, W = x.shape
    if inc != model.in_channels:
        stride, w_dw, w_pw, g, b = model.fix[inc]
        OH, OW = H // stride, W // stride
        xr = x.reshape(N, inc, OH, stride, OW, stride)
        y = (xr * w_dw[:, 0].reshape(1, inc, 1, stride, 1, stride)).sum(axis=(3, 5))
        z = jnp.einsum('nchw,oc->nohw', y, w_pw[:, :, 0, 0], precision=_HI)   # 1x1 conv
        m = jnp.mean(z, axis=(0, 2, 3), keepdims=True)
        v = jnp.mean((z - m) ** 2, axis=(0, 2, 3), keepdims=True)
        z = (z - m) / jnp.sqrt(v + EPS) * g[None, :, None, None] + b[None, :, None, None]
        x = z
    x = jnp.mean(x, axis=(2, 3))                                              # avgpool
    h = jnp.dot(x, model.w0, precision=_HI)
    m = jnp.mean(h, axis=0, keepdims=True)
    v = jnp.mean((h - m) ** 2, axis=0, keepdims=True)
    h = (h - m) / jnp.sqrt(v + EPS) * model.g0 + model.b0
    h = jnp.maximum(h, 0.0)
    y = jnp.dot(h, model.w1, precision=_HI)
    m = jnp.mean(y, axis=0, keepdims=True)
    v = jnp.mean((y - m) ** 2, axis=0, keepdims=True)
    return (y - m) / jnp.sqrt(v + EPS) * model.g1 + model.b1


# ---------------------------------------- main ------------------------------------------

if __name__ == "__main__":
    key = jax.random.PRNGKey(0)
    key, kx, kx2, kp = jax.random.split(key, 4)

    in_channels, hid_channels, out_channels = 256, 32, 16
    model = NonLinearNeckSimCLRProjectPallas(in_channels, hid_channels, out_channels, kp)
    fwd = jax.jit(lambda t: model([t])[0])

    # (a) 512-channel input -> exercises fix_channels['512'] (depthwise 4x4/s4 ->
    #     1x1 conv -> BN2d fused with the spatial average pool) + MLP head.
    x = jax.random.normal(kx, (4, 512, 8, 8), jnp.float32)
    out = jax.block_until_ready(fwd(x))
    ref = jax.block_until_ready(reference_forward(model, x))
    np.testing.assert_allclose(np.asarray(out), np.asarray(ref), rtol=1e-2, atol=1e-2)
    assert out.shape == (4, out_channels)
    assert bool(jnp.all(jnp.isfinite(out)))

    # (b) identity path (inc == in_channels): pool in XLA, MLP head in Pallas.
    x2 = jax.random.normal(kx2, (4, in_channels, 8, 8), jnp.float32)
    out2 = jax.block_until_ready(fwd(x2))
    ref2 = jax.block_until_ready(reference_forward(model, x2))
    np.testing.assert_allclose(np.asarray(out2), np.asarray(ref2), rtol=1e-2, atol=1e-2)
    assert out2.shape == (4, out_channels)
    assert bool(jnp.all(jnp.isfinite(out2)))

    print("KERNEL_OK")
</pallas_src>

<mosaic_0001>
module attributes {stable_mosaic.version = 11 : i64} {
  func.func @_project_stats_kernel(%arg0: i32, %arg1: i32, %arg2: memref<1x4x512xf32, #tpu.memory_space<vmem>>, %arg3: memref<512x256xf32, #tpu.memory_space<vmem>>, %arg4: memref<1x1x256xf32, #tpu.memory_space<vmem>>, %arg5: memref<1x1x256xf32, #tpu.memory_space<vmem>>) attributes {dimension_semantics = [#tpu.dimension_semantics<parallel>, #tpu.dimension_semantics<arbitrary>], iteration_bounds = array<i64: 4, 1>, scalar_prefetch = 0 : i64, scratch_operands = 0 : i64, tpu.core_type = #tpu.core_type<tc>, window_params = [{transform_indices = @transform_0, window_bounds = array<i64: 1, 4, 512>}, {pipeline_mode = #tpu.pipeline_mode<synchronous>, transform_indices = @transform_1, window_bounds = array<i64: 512, 256>}, {transform_indices = @transform_2, window_bounds = array<i64: 1, 1, 256>}, {transform_indices = @transform_3, window_bounds = array<i64: 1, 1, 256>}]} {
    %c0 = arith.constant 0 : index
    %c0_0 = arith.constant 0 : index
    %c0_1 = arith.constant 0 : index
    %0 = vector.load %arg2[%c0, %c0_0, %c0_1] : memref<1x4x512xf32, #tpu.memory_space<vmem>>, vector<1x4x512xf32>
    %1 = vector.shape_cast %0 : vector<1x4x512xf32> to vector<4x512xf32>
    %c0_2 = arith.constant 0 : index
    %c0_3 = arith.constant 0 : index
    %2 = vector.load %arg3[%c0_2, %c0_3] : memref<512x256xf32, #tpu.memory_space<vmem>>, vector<512x256xf32>
    %cst = arith.constant dense<0.000000e+00> : vector<4x256xf32>
    %3 = tpu.matmul %1, %2, %cst {dimension_numbers = #tpu.dot_dimension_numbers<[1], [0], [0], [1], [0, 0, 1, 1], [], []>, precision = #tpu.contract_precision<fp32>} : vector<4x512xf32>, vector<512x256xf32>, vector<4x256xf32> -> vector<4x256xf32>
    %c0_i32 = arith.constant 0 : i32
    %4 = arith.cmpi eq, %arg1, %c0_i32 : i32
    %5 = arith.extui %4 : i1 to i32
    %c0_i32_4 = arith.constant 0 : i32
    %6 = arith.cmpi ne, %5, %c0_i32_4 : i32
    scf.if %6 {
      %cst_19 = arith.constant 0.000000e+00 : f32
      %20 = vector.broadcast %cst_19 : f32 to vector<1x1x256xf32>
      %c0_20 = arith.constant 0 : index
      %c0_21 = arith.constant 0 : index
      %c0_22 = arith.constant 0 : index
      %21 = vector.load %arg4[%c0_20, %c0_21, %c0_22] : memref<1x1x256xf32, #tpu.memory_space<vmem>>, vector<1x1x256xf32>
      tpu.vector_store %arg4[%c0_20, %c0_21, %c0_22], %20 {strides = array<i32>} : memref<1x1x256xf32, #tpu.memory_space<vmem>>, vector<1x1x256xf32>,
      %cst_23 = arith.constant 0.000000e+00 : f32
      %22 = vector.broadcast %cst_23 : f32 to vector<1x1x256xf32>
      %c0_24 = arith.constant 0 : index
      %c0_25 = arith.constant 0 : index
      %c0_26 = arith.constant 0 : index
      %23 = vector.load %arg5[%c0_24, %c0_25, %c0_26] : memref<1x1x256xf32, #tpu.memory_space<vmem>>, vector<1x1x256xf32>
      tpu.vector_store %arg5[%c0_24, %c0_25, %c0_26], %22 {strides = array<i32>} : memref<1x1x256xf32, #tpu.memory_space<vmem>>, vector<1x1x256xf32>,
    } else {
    }
    %c0_5 = arith.constant 0 : index
    %c0_6 = arith.constant 0 : index
    %c0_7 = arith.constant 0 : index
    %7 = vector.load %arg4[%c0_5, %c0_6, %c0_7] : memref<1x1x256xf32, #tpu.memory_space<vmem>>, vector<1x1x256xf32>
    %cst_8 = arith.constant dense<0.000000e+00> : vector<256xf32>
    %8 = vector.multi_reduction <add>, %3, %cst_8 [0] : vector<4x256xf32> to vector<256xf32>
    %9 = vector.shape_cast %8 : vector<256xf32> to vector<1x256xf32>
    %10 = vector.shape_cast %9 : vector<1x256xf32> to vector<1x1x256xf32>
    %11 = arith.addf %7, %10 : vector<1x1x256xf32>
    %c0_9 = arith.constant 0 : index
    %c0_10 = arith.constant 0 : index
    %c0_11 = arith.constant 0 : index
    %12 = vector.load %arg4[%c0_9, %c0_10, %c0_11] : memref<1x1x256xf32, #tpu.memory_space<vmem>>, vector<1x1x256xf32>
    tpu.vector_store %arg4[%c0_9, %c0_10, %c0_11], %11 {strides = array<i32>} : memref<1x1x256xf32, #tpu.memory_space<vmem>>, vector<1x1x256xf32>,
    %c0_12 = arith.constant 0 : index
    %c0_13 = arith.constant 0 : index
    %c0_14 = arith.constant 0 : index
    %13 = vector.load %arg5[%c0_12, %c0_13, %c0_14] : memref<1x1x256xf32, #tpu.memory_space<vmem>>, vector<1x1x256xf32>
    %14 = arith.mulf %3, %3 : vector<4x256xf32>
    %cst_15 = arith.constant dense<0.000000e+00> : vector<256xf32>
    %15 = vector.multi_reduction <add>, %14, %cst_15 [0] : vector<4x256xf32> to vector<256xf32>
    %16 = vector.shape_cast %15 : vector<256xf32> to vector<1x256xf32>
    %17 = vector.shape_cast %16 : vector<1x256xf32> to vector<1x1x256xf32>
    %18 = arith.addf %13, %17 : vector<1x1x256xf32>
    %c0_16 = arith.constant 0 : index
    %c0_17 = arith.constant 0 : index
    %c0_18 = arith.constant 0 : index
    %19 = vector.load %arg5[%c0_16, %c0_17, %c0_18] : memref<1x1x256xf32, #tpu.memory_space<vmem>>, vector<1x1x256xf32>
    tpu.vector_store %arg5[%c0_16, %c0_17, %c0_18], %18 {strides = array<i32>} : memref<1x1x256xf32, #tpu.memory_space<vmem>>, vector<1x1x256xf32>,
    return
  }
  func.func @transform_0(%arg0: i32, %arg1: i32) -> (i32, i32, i32) {
    %c0_i32 = arith.constant 0 : i32
    %c0_i32_0 = arith.constant 0 : i32
    return %arg0, %arg1, %c0_i32 : i32, i32, i32
  }
  func.func @transform_1(%arg0: i32, %arg1: i32) -> (i32, i32) {
    %c0_i32 = arith.constant 0 : i32
    %c0_i32_0 = arith.constant 0 : i32
    %c0_i32_1 = arith.constant 0 : i32
    return %c0_i32, %c0_i32_0 : i32, i32
  }
  func.func @transform_2(%arg0: i32, %arg1: i32) -> (i32, i32, i32) {
    %c0_i32 = arith.constant 0 : i32
    %c0_i32_0 = arith.constant 0 : i32
    %c0_i32_1 = arith.constant 0 : i32
    return %arg0, %c0_i32, %c0_i32_0 : i32, i32, i32
  }
  func.func @transform_3(%arg0: i32, %arg1: i32) -> (i32, i32, i32) {
    %c0_i32 = arith.constant 0 : i32
    %c0_i32_0 = arith.constant 0 : i32
    %c0_i32_1 = arith.constant 0 : i32
    return %arg0, %c0_i32, %c0_i32_0 : i32, i32, i32
  }
}

module attributes {stable_mosaic.version = 11 : i64} {
  func.func @kernel(%arg0: i32, %arg1: memref<4x256xf32, #tpu.memory_space<vmem>>, %arg2: memref<4x256xf32, #tpu.memory_space<vmem>>, %arg3: memref<1x256xf32, #tpu.memory_space<vmem>>, %arg4: memref<1x256xf32, #tpu.memory_space<vmem>>, %arg5: memref<256x32xf32, #tpu.memory_space<vmem>>, %arg6: memref<1x32xf32, #tpu.memory_space<vmem>>, %arg7: memref<1x32xf32, #tpu.memory_space<vmem>>, %arg8: memref<32x16xf32, #tpu.memory_space<vmem>>, %arg9: memref<1x16xf32, #tpu.memory_space<vmem>>, %arg10: memref<1x16xf32, #tpu.memory_space<vmem>>, %arg11: memref<4x16xf32, #tpu.memory_space<vmem>>) attributes {dimension_semantics = [#tpu.dimension_semantics<arbitrary>], iteration_bounds = array<i64: 1>, scalar_prefetch = 0 : i64, scratch_operands = 0 : i64, tpu.core_type = #tpu.core_type<tc>, window_params = [{pipeline_mode = #tpu.pipeline_mode<synchronous>, transform_indices = @transform_0, window_bounds = array<i64: 4, 256>}, {pipeline_mode = #tpu.pipeline_mode<synchronous>, transform_indices = @transform_1, window_bounds = array<i64: 4, 256>}, {pipeline_mode = #tpu.pipeline_mode<synchronous>, transform_indices = @transform_2, window_bounds = array<i64: 1, 256>}, {pipeline_mode = #tpu.pipeline_mode<synchronous>, transform_indices = @transform_3, window_bounds = array<i64: 1, 256>}, {pipeline_mode = #tpu.pipeline_mode<synchronous>, transform_indices = @transform_4, window_bounds = array<i64: 256, 32>}, {pipeline_mode = #tpu.pipeline_mode<synchronous>, transform_indices = @transform_5, window_bounds = array<i64: 1, 32>}, {pipeline_mode = #tpu.pipeline_mode<synchronous>, transform_indices = @transform_6, window_bounds = array<i64: 1, 32>}, {pipeline_mode = #tpu.pipeline_mode<synchronous>, transform_indices = @transform_7, window_bounds = array<i64: 32, 16>}, {pipeline_mode = #tpu.pipeline_mode<synchronous>, transform_indices = @transform_8, window_bounds = array<i64: 1, 16>}, {pipeline_mode = #tpu.pipeline_mode<synchronous>, transform_indices = @transform_9, window_bounds = array<i64: 1, 16>}, {pipeline_mode = #tpu.pipeline_mode<synchronous>, transform_indices = @transform_10, window_bounds = array<i64: 4, 16>}]} {
    %c0 = arith.constant 0 : index
    %c0_0 = arith.constant 0 : index
    %0 = vector.load %arg1[%c0, %c0_0] : memref<4x256xf32, #tpu.memory_space<vmem>>, vector<4x256xf32>
    %cst = arith.constant dense<0.000000e+00> : vector<256xf32>
    %1 = vector.multi_reduction <add>, %0, %cst [0] : vector<4x256xf32> to vector<256xf32>
    %2 = vector.shape_cast %1 : vector<256xf32> to vector<1x256xf32>
    %cst_1 = arith.constant 6.250000e-02 : f32
    %3 = vector.broadcast %cst_1 : f32 to vector<1x256xf32>
    %4 = arith.mulf %2, %3 : vector<1x256xf32>
    %c0_2 = arith.constant 0 : index
    %c0_3 = arith.constant 0 : index
    %5 = vector.load %arg2[%c0_2, %c0_3] : memref<4x256xf32, #tpu.memory_space<vmem>>, vector<4x256xf32>
    %cst_4 = arith.constant dense<0.000000e+00> : vector<256xf32>
    %6 = vector.multi_reduction <add>, %5, %cst_4 [0] : vector<4x256xf32> to vector<256xf32>
    %7 = vector.shape_cast %6 : vector<256xf32> to vector<1x256xf32>
    %cst_5 = arith.constant 6.250000e-02 : f32
    %8 = vector.broadcast %cst_5 : f32 to vector<1x256xf32>
    %9 = arith.mulf %7, %8 : vector<1x256xf32>
    %10 = arith.mulf %4, %4 : vector<1x256xf32>
    %11 = arith.subf %9, %10 : vector<1x256xf32>
    %cst_6 = arith.constant 0.000000e+00 : f32
    %12 = vector.broadcast %cst_6 : f32 to vector<1x256xf32>
    %13 = arith.maximumf %11, %12 : vector<1x256xf32>
    %cst_7 = arith.constant 2.500000e-01 : f32
    %14 = vector.broadcast %cst_7 : f32 to vector<4x256xf32>
    %15 = arith.mulf %0, %14 : vector<4x256xf32>
    %16 = vector.broadcast %4 : vector<1x256xf32> to vector<4x256xf32>
    %17 = arith.subf %15, %16 : vector<4x256xf32>
    %cst_8 = arith.constant 9.99999974E-6 : f32
    %18 = vector.broadcast %cst_8 : f32 to vector<1x256xf32>
    %19 = arith.addf %13, %18 : vector<1x256xf32>
    %20 = math.rsqrt %19 : vector<1x256xf32>
    %21 = vector.broadcast %20 : vector<1x256xf32> to vector<4x256xf32>
    %22 = arith.mulf %17, %21 : vector<4x256xf32>
    %c0_9 = arith.constant 0 : index
    %c0_10 = arith.constant 0 : index
    %23 = vector.load %arg3[%c0_9, %c0_10] : memref<1x256xf32, #tpu.memory_space<vmem>>, vector<1x256xf32>
    %24 = vector.broadcast %23 : vector<1x256xf32> to vector<4x256xf32>
    %25 = arith.mulf %22, %24 : vector<4x256xf32>
    %c0_11 = arith.constant 0 : index
    %c0_12 = arith.constant 0 : index
    %26 = vector.load %arg4[%c0_11, %c0_12] : memref<1x256xf32, #tpu.memory_space<vmem>>, vector<1x256xf32>
    %27 = vector.broadcast %26 : vector<1x256xf32> to vector<4x256xf32>
    %28 = arith.addf %25, %27 : vector<4x256xf32>
    %c0_13 = arith.constant 0 : index
    %c0_14 = arith.constant 0 : index
    %29 = vector.load %arg5[%c0_13, %c0_14] : memref<256x32xf32, #tpu.memory_space<vmem>>, vector<256x32xf32>
    %cst_15 = arith.constant dense<0.000000e+00> : vector<4x32xf32>
    %30 = tpu.matmul %28, %29, %cst_15 {dimension_numbers = #tpu.dot_dimension_numbers<[1], [0], [0], [1], [0, 0, 1, 1], [], []>, precision = #tpu.contract_precision<fp32>} : vector<4x256xf32>, vector<256x32xf32>, vector<4x32xf32> -> vector<4x32xf32>
    %cst_16 = arith.constant dense<0.000000e+00> : vector<32xf32>
    %31 = vector.multi_reduction <add>, %30, %cst_16 [0] : vector<4x32xf32> to vector<32xf32>
    %32 = vector.shape_cast %31 : vector<32xf32> to vector<1x32xf32>
    %cst_17 = arith.constant 4.000000e+00 : f32
    %33 = vector.broadcast %cst_17 : f32 to vector<1x32xf32>
    %34 = arith.divf %32, %33 : vector<1x32xf32>
    %35 = arith.mulf %30, %30 : vector<4x32xf32>
    %cst_18 = arith.constant dense<0.000000e+00> : vector<32xf32>
    %36 = vector.multi_reduction <add>, %35, %cst_18 [0] : vector<4x32xf32> to vector<32xf32>
    %37 = vector.shape_cast %36 : vector<32xf32> to vector<1x32xf32>
    %cst_19 = arith.constant 4.000000e+00 : f32
    %38 = vector.broadcast %cst_19 : f32 to vector<1x32xf32>
    %39 = arith.divf %37, %38 : vector<1x32xf32>
    %40 = arith.mulf %34, %34 : vector<1x32xf32>
    %41 = arith.subf %39, %40 : vector<1x32xf32>
    %cst_20 = arith.constant 0.000000e+00 : f32
    %42 = vector.broadcast %cst_20 : f32 to vector<1x32xf32>
    %43 = arith.maximumf %41, %42 : vector<1x32xf32>
    %44 = vector.broadcast %34 : vector<1x32xf32> to vector<4x32xf32>
    %45 = arith.subf %30, %44 : vector<4x32xf32>
    %cst_21 = arith.constant 9.99999974E-6 : f32
    %46 = vector.broadcast %cst_21 : f32 to vector<1x32xf32>
    %47 = arith.addf %43, %46 : vector<1x32xf32>
    %48 = math.rsqrt %47 : vector<1x32xf32>
    %49 = vector.broadcast %48 : vector<1x32xf32> to vector<4x32xf32>
    %50 = arith.mulf %45, %49 : vector<4x32xf32>
    %c0_22 = arith.constant 0 : index
    %c0_23 = arith.constant 0 : index
    %51 = vector.load %arg6[%c0_22, %c0_23] : memref<1x32xf32, #tpu.memory_space<vmem>>, vector<1x32xf32>
    %52 = vector.broadcast %51 : vector<1x32xf32> to vector<4x32xf32>
    %53 = arith.mulf %50, %52 : vector<4x32xf32>
    %c0_24 = arith.constant 0 : index
    %c0_25 = arith.constant 0 : index
    %54 = vector.load %arg7[%c0_24, %c0_25] : memref<1x32xf32, #tpu.memory_space<vmem>>, vector<1x32xf32>
    %55 = vector.broadcast %54 : vector<1x32xf32> to vector<4x32xf32>
    %56 = arith.addf %53, %55 : vector<4x32xf32>
    %cst_26 = arith.constant 0.000000e+00 : f32
    %57 = vector.broadcast %cst_26 : f32 to vector<4x32xf32>
    %58 = arith.maximumf %56, %57 : vector<4x32xf32>
    %c0_27 = arith.constant 0 : index
    %c0_28 = arith.constant 0 : index
    %59 = vector.load %arg8[%c0_27, %c0_28] : memref<32x16xf32, #tpu.memory_space<vmem>>, vector<32x16xf32>
    %cst_29 = arith.constant dense<0.000000e+00> : vector<4x16xf32>
    %60 = tpu.matmul %58, %59, %cst_29 {dimension_numbers = #tpu.dot_dimension_numbers<[1], [0], [0], [1], [0, 0, 1, 1], [], []>, precision = #tpu.contract_precision<fp32>} : vector<4x32xf32>, vector<32x16xf32>, vector<4x16xf32> -> vector<4x16xf32>
    %cst_30 = arith.constant dense<0.000000e+00> : vector<16xf32>
    %61 = vector.multi_reduction <add>, %60, %cst_30 [0] : vector<4x16xf32> to vector<16xf32>
    %62 = vector.shape_cast %61 : vector<16xf32> to vector<1x16xf32>
    %cst_31 = arith.constant 4.000000e+00 : f32
    %63 = vector.broadcast %cst_31 : f32 to vector<1x16xf32>
    %64 = arith.divf %62, %63 : vector<1x16xf32>
    %65 = arith.mulf %60, %60 : vector<4x16xf32>
    %cst_32 = arith.constant dense<0.000000e+00> : vector<16xf32>
    %66 = vector.multi_reduction <add>, %65, %cst_32 [0] : vector<4x16xf32> to vector<16xf32>
    %67 = vector.shape_cast %66 : vector<16xf32> to vector<1x16xf32>
    %cst_33 = arith.constant 4.000000e+00 : f32
    %68 = vector.broadcast %cst_33 : f32 to vector<1x16xf32>
    %69 = arith.divf %67, %68 : vector<1x16xf32>
    %70 = arith.mulf %64, %64 : vector<1x16xf32>
    %71 = arith.subf %69, %70 : vector<1x16xf32>
    %cst_34 = arith.constant 0.000000e+00 : f32
    %72 = vector.broadcast %cst_34 : f32 to vector<1x16xf32>
    %73 = arith.maximumf %71, %72 : vector<1x16xf32>
    %74 = vector.broadcast %64 : vector<1x16xf32> to vector<4x16xf32>
    %75 = arith.subf %60, %74 : vector<4x16xf32>
    %cst_35 = arith.constant 9.99999974E-6 : f32
    %76 = vector.broadcast %cst_35 : f32 to vector<1x16xf32>
    %77 = arith.addf %73, %76 : vector<1x16xf32>
    %78 = math.rsqrt %77 : vector<1x16xf32>
    %79 = vector.broadcast %78 : vector<1x16xf32> to vector<4x16xf32>
    %80 = arith.mulf %75, %79 : vector<4x16xf32>
    %c0_36 = arith.constant 0 : index
    %c0_37 = arith.constant 0 : index
    %81 = vector.load %arg9[%c0_36, %c0_37] : memref<1x16xf32, #tpu.memory_space<vmem>>, vector<1x16xf32>
    %82 = vector.broadcast %81 : vector<1x16xf32> to vector<4x16xf32>
    %83 = arith.mulf %80, %82 : vector<4x16xf32>
    %c0_38 = arith.constant 0 : index
    %c0_39 = arith.constant 0 : index
    %84 = vector.load %arg10[%c0_38, %c0_39] : memref<1x16xf32, #tpu.memory_space<vmem>>, vector<1x16xf32>
    %85 = vector.broadcast %84 : vector<1x16xf32> to vector<4x16xf32>
    %86 = arith.addf %83, %85 : vector<4x16xf32>
    %c0_40 = arith.constant 0 : index
    %c0_41 = arith.constant 0 : index
    %87 = vector.load %arg11[%c0_40, %c0_41] : memref<4x16xf32, #tpu.memory_space<vmem>>, vector<4x16xf32>
    tpu.vector_store %arg11[%c0_40, %c0_41], %86 {strides = array<i32>} : memref<4x16xf32, #tpu.memory_space<vmem>>, vector<4x16xf32>,
    return
  }
  func.func @transform_0(%arg0: i32) -> (i32, i32) {
    %c0_i32 = arith.constant 0 : i32
    %c0_i32_0 = arith.constant 0 : i32
    %c0_i32_1 = arith.constant 0 : i32
    return %c0_i32, %c0_i32_0 : i32, i32
  }
  func.func @transform_1(%arg0: i32) -> (i32, i32) {
    %c0_i32 = arith.constant 0 : i32
    %c0_i32_0 = arith.constant 0 : i32
    %c0_i32_1 = arith.constant 0 : i32
    return %c0_i32, %c0_i32_0 : i32, i32
  }
  func.func @transform_2(%arg0: i32) -> (i32, i32) {
    %c0_i32 = arith.constant 0 : i32
    %c0_i32_0 = arith.constant 0 : i32
    %c0_i32_1 = arith.constant 0 : i32
    return %c0_i32, %c0_i32_0 : i32, i32
  }
  func.func @transform_3(%arg0: i32) -> (i32, i32) {
    %c0_i32 = arith.constant 0 : i32
    %c0_i32_0 = arith.constant 0 : i32
    %c0_i32_1 = arith.constant 0 : i32
    return %c0_i32, %c0_i32_0 : i32, i32
  }
  func.func @transform_4(%arg0: i32) -> (i32, i32) {
    %c0_i32 = arith.constant 0 : i32
    %c0_i32_0 = arith.constant 0 : i32
    %c0_i32_1 = arith.constant 0 : i32
    return %c0_i32, %c0_i32_0 : i32, i32
  }
  func.func @transform_5(%arg0: i32) -> (i32, i32) {
    %c0_i32 = arith.constant 0 : i32
    %c0_i32_0 = arith.constant 0 : i32
    %c0_i32_1 = arith.constant 0 : i32
    return %c0_i32, %c0_i32_0 : i32, i32
  }
  func.func @transform_6(%arg0: i32) -> (i32, i32) {
    %c0_i32 = arith.constant 0 : i32
    %c0_i32_0 = arith.constant 0 : i32
    %c0_i32_1 = arith.constant 0 : i32
    return %c0_i32, %c0_i32_0 : i32, i32
  }
  func.func @transform_7(%arg0: i32) -> (i32, i32) {
    %c0_i32 = arith.constant 0 : i32
    %c0_i32_0 = arith.constant 0 : i32
    %c0_i32_1 = arith.constant 0 : i32
    return %c0_i32, %c0_i32_0 : i32, i32
  }
  func.func @transform_8(%arg0: i32) -> (i32, i32) {
    %c0_i32 = arith.constant 0 : i32
    %c0_i32_0 = arith.constant 0 : i32
    %c0_i32_1 = arith.constant 0 : i32
    return %c0_i32, %c0_i32_0 : i32, i32
  }
  func.func @transform_9(%arg0: i32) -> (i32, i32) {
    %c0_i32 = arith.constant 0 : i32
    %c0_i32_0 = arith.constant 0 : i32
    %c0_i32_1 = arith.constant 0 : i32
    return %c0_i32, %c0_i32_0 : i32, i32
  }
  func.func @transform_10(%arg0: i32) -> (i32, i32) {
    %c0_i32 = arith.constant 0 : i32
    %c0_i32_0 = arith.constant 0 : i32
    %c0_i32_1 = arith.constant 0 : i32
    return %c0_i32, %c0_i32_0 : i32, i32
  }
}

</mosaic_0001>

<llo_original>
// kernel: _lambda_.2
$region0: #{_lambda_.2}
  #allocation0 [shape = 'u32[]', space=smem, size = 0x4, offset = 0x4, fixed_abs, tag = 'smem constant byte address 0x4 - core index']
  #allocation1 [shape = 'u32[72,128]{1,0:T(1,128)}', space=vmem, size = 0x9000, scoped, tag = 'internal scratch']
  %s0 = inlined_call_operand.vmem [shape: f32[4,4,512], index: 0, kind: input, shape index: {}]
  %s1 = inlined_call_operand.vmem [shape: f32[512,256], index: 1, kind: input, shape index: {}]
  %s2 = inlined_call_operand.vmem [shape: f32[4,1,256], index: 2, kind: output, shape index: {0}]
  %s3 = inlined_call_operand.vmem [shape: f32[4,1,256], index: 3, kind: output, shape index: {1}]
  %4 = xla_tuple %s2, %s3
  %s5 = sld [smem:[#allocation0]]
  $region53: #{_lambda_.2} parent=0
    _
  %s7 = ssub.s32 1, %s5
  %s8 = scalar_select 0, %s7, %s5
  loop: start=0, step=1, limit=6
  $region2: #{_lambda_.2} parent=0 // loop_pre_header
    _
  $region3: #{_lambda_.2} parent=0 // loop_header
    %s10 = sphi 0, %s14
    %p11 = scmp.ge.s32.totalorder %s10, 6
    %s17 = sphi 0, %s29
    %s18 = sphi 0, %s25
    %s19 = sphi 0, %s17
    %s20 = sphi 0, %s18
    %s21 = sphi 0, %s19
    %s22 = sphi 0, %s20
    %s34 = sphi 0, %s36
    %s37 = sphi 0, %s34
    %s38 = sphi 0, %s37
    %s54 = sphi 0, %s38
    %s58 = sphi 0, %s58
    %s60 = sphi 0, %s58
    %s61 = sphi 0, %s60
    %s75 = sphi 0, %s61
    %s81 = sphi 0, %s83
    %s84 = sphi 0, %s81
    %s85 = sphi 0, %s84
    %s101 = sphi 0, %s85
    %s107 = sphi 0, %s109
    %s110 = sphi 0, %s107
    %s111 = sphi 0, %s110
    %s127 = sphi 0, %s111
  $region4: #{_lambda_.2} parent=0 // loop_header_branch
    %13 = sbr.rel (%p11) target = $region8
  $region5: #{_lambda_.2} parent=0 // loop_body
    %s15 = ssub.s32 %s10, 1
    %s16 = ssub.s32 %s10, 2
    %s23 = sadd.s32 1, %s18
    %p24 = scmp.ge.s32.totalorder %s23, 1
    %s25 = scalar_select %p24, 0, %s23
    %s26 = sadd.s32 1, %s17
    %s27 = scalar_select %p24, %s26, %s17
    %p28 = scmp.ge.s32.totalorder %s27, 4
    %s29 = scalar_select %p28, 0, %s27
    %s30 = ssub.s32 %s17, %s29
    %s31 = ssub.s32 %s18, %s25
    %s32 = sor.u32 %s30, %s31
    %p33 = scmp.eq.s32.totalorder %s32, 0
    %s35 = sadd.s32 %s34, 1
    %s36 = scalar_select %p33, %s34, %s35
    %p39 = pneg %p33
    %p40 = scmp.eq.s32.totalorder %s10, 3
    %p41 = por %p39, %p40
    %p42 = scmp.ne.s32.totalorder %s34, %s37
    %p43 = scmp.eq.s32.totalorder %s10, 0
    %p44 = por %p42, %p43
    %p45 = scmp.ne.s32.totalorder %s34, %s37
    %p46 = scmp.eq.s32.totalorder %s15, 3
    %p47 = por %p45, %p46
    %p48 = scmp.ne.s32.totalorder %s37, %s38
    %p49 = scmp.eq.s32.totalorder %s15, 0
    %p50 = por %p48, %p49
    %p51 = scmp.ne.s32.totalorder %s37, %s38
    %p52 = scmp.eq.s32.totalorder %s16, 3
    %p53 = por %p51, %p52
    %p55 = scmp.ne.s32.totalorder %s38, %s54
    %p56 = scmp.eq.s32.totalorder %s16, 0
    %p57 = por %p55, %p56
    %s59 = sadd.s32 %s58, 1
    %p62 = scmp.eq.s32.totalorder %s10, 3
    %p63 = scmp.ne.s32.totalorder %s58, %s60
    %p64 = scmp.eq.s32.totalorder %s10, 0
    %p65 = por %p63, %p64
    %p66 = scmp.ne.s32.totalorder %s58, %s60
    %p67 = scmp.eq.s32.totalorder %s15, 3
    %p68 = por %p66, %p67
    %p69 = scmp.ne.s32.totalorder %s60, %s61
    %p70 = scmp.eq.s32.totalorder %s15, 0
    %p71 = por %p69, %p70
    %p72 = scmp.ne.s32.totalorder %s60, %s61
    %p73 = scmp.eq.s32.totalorder %s16, 3
    %p74 = por %p72, %p73
    %p76 = scmp.ne.s32.totalorder %s61, %s75
    %p77 = scmp.eq.s32.totalorder %s16, 0
    %p78 = por %p76, %p77
    %s79 = ssub.s32 %s17, %s29
    %p80 = scmp.eq.s32.totalorder %s79, 0
    %s82 = sadd.s32 %s81, 1
    %s83 = scalar_select %p80, %s81, %s82
    %p86 = pneg %p80
    %p87 = scmp.eq.s32.totalorder %s10, 3
    %p88 = por %p86, %p87
    %p89 = scmp.ne.s32.totalorder %s81, %s84
    %p90 = scmp.eq.s32.totalorder %s10, 0
    %p91 = por %p89, %p90
    %p92 = scmp.ne.s32.totalorder %s81, %s84
    %p93 = scmp.eq.s32.totalorder %s15, 3
    %p94 = por %p92, %p93
    %p95 = scmp.ne.s32.totalorder %s84, %s85
    %p96 = scmp.eq.s32.totalorder %s15, 0
    %p97 = por %p95, %p96
    %p98 = scmp.ne.s32.totalorder %s84, %s85
    %p99 = scmp.eq.s32.totalorder %s16, 3
    %p100 = por %p98, %p99
    %p102 = scmp.ne.s32.totalorder %s85, %s101
    %p103 = scmp.eq.s32.totalorder %s16, 0
    %p104 = por %p102, %p103
    %s105 = ssub.s32 %s17, %s29
    %p106 = scmp.eq.s32.totalorder %s105, 0
    %s108 = sadd.s32 %s107, 1
    %s109 = scalar_select %p106, %s107, %s108
    %p112 = pneg %p106
    %p113 = scmp.eq.s32.totalorder %s10, 3
    %p114 = por %p112, %p113
    %p115 = scmp.ne.s32.totalorder %s107, %s110
    %p116 = scmp.eq.s32.totalorder %s10, 0
    %p117 = por %p115, %p116
    %p118 = scmp.ne.s32.totalorder %s107, %s110
    %p119 = scmp.eq.s32.totalorder %s15, 3
    %p120 = por %p118, %p119
    %p121 = scmp.ne.s32.totalorder %s110, %s111
    %p122 = scmp.eq.s32.totalorder %s15, 0
    %p123 = por %p121, %p122
    %p124 = scmp.ne.s32.totalorder %s110, %s111
    %p125 = scmp.eq.s32.totalorder %s16, 3
    %p126 = por %p124, %p125
    %p128 = scmp.ne.s32.totalorder %s111, %s127
    %p129 = scmp.eq.s32.totalorder %s16, 0
    %p130 = por %p128, %p129
    %p131 = scmp.le.s32.totalorder 1, %s10
    %p132 = scmp.lt.s32.totalorder %s10, 5
    %p133 = pnand %p131, %p132
    %p134 = pneg %p133
    // Predicated region
    $region9: #{_lambda_.2} parent=5 // pred_check
      _
    $region10: #{_lambda_.2} parent=5 // pred_check_branch
      %136 = sbr.rel (%p133) target = $region12
    $region11: #{_lambda_.2} parent=5 // pred_region
      %s137 = ssub.s32 %s10, 1
      // Predicated region
      $region13: #{_lambda_.2} parent=11 // pred_check
        %p138 = pneg %p71
      $region14: #{_lambda_.2} parent=11 // pred_check_branch
        %140 = sbr.rel (%p138) target = $region16
      $region15: #{_lambda_.2} parent=11 // pred_region
        _
      $region16: #{_lambda_.2} parent=11 // pred_fallthru
        _
    $region12: #{_lambda_.2} parent=5 // pred_fallthru
      _
    %p141 = scmp.lt.s32.totalorder %s10, 4
    // Predicated region
    $region17: #{_lambda_.2} parent=5 // pred_check
      %p142 = pneg %p141
    $region18: #{_lambda_.2} parent=5 // pred_check_branch
      %144 = sbr.rel (%p142) target = $region20
    $region19: #{_lambda_.2} parent=5 // pred_region
      // Predicated region
      $region21: #{_lambda_.2} parent=19 // pred_check
        %p145 = pneg %p44
      $region22: #{_lambda_.2} parent=19 // pred_check_branch
        %147 = sbr.rel (%p145) target = $region24
      $region23: #{_lambda_.2} parent=19 // pred_region
        %p148 = scmp.lt.s32.totalorder %s17, 3
        %s149 = scalar_select %p148, %s17, 3
        %p150 = scmp.lt.s32.totalorder %s18, 0
        %s151 = scalar_select %p150, %s18, 0
        %s152 = smul.addr %s151, 4
        %s153 = smul.addr %s149, 4
        %s154 = sadd.s32 %s152, %s153
        %s155 = smul.addr %s154, 4
        %s156 = scalar_lea.vmem %s0, %s155
      $region24: #{_lambda_.2} parent=19 // pred_fallthru
        _
    $region20: #{_lambda_.2} parent=5 // pred_fallthru
      _
    %p157 = scmp.le.s32.totalorder 1, %s10
    %p158 = scmp.lt.s32.totalorder %s10, 5
    %p159 = pnand %p157, %p158
    %p160 = pneg %p159
    // Predicated region
    $region25: #{_lambda_.2} parent=5 // pred_check
      _
    $region26: #{_lambda_.2} parent=5 // pred_check_branch
      %162 = sbr.rel (%p159) target = $region28
    $region27: #{_lambda_.2} parent=5 // pred_region
      %s163 = ssub.s32 %s10, 1
      %p164 = scmp.lt.s32.totalorder %s19, 3
      %s165 = scalar_select %p164, %s19, 3
      %p166 = scmp.lt.s32.totalorder %s20, 0
      %s167 = scalar_select %p166, %s20, 0
      %s168 = smul.addr %s167, 4
      %s169 = smul.addr %s165, 4
      %s170 = sadd.s32 %s168, %s169
      %s171 = smul.addr %s170, 4
      %s172 = scalar_lea.vmem %s0, %s171
      %p173 = pneg %p50
      %p174 = pneg %p47
      %p175 = pneg %p71
      %p176 = pneg %p68
      %p177 = pneg %p97
      %p178 = pneg %p94
      %p179 = scmp.lt.s32.totalorder %s19, 3
      %s180 = scalar_select %p179, %s19, 3
      %s181 = smul.addr %s180, 2
      %s182 = scalar_lea.vmem %s2, %s181
      %p183 = pneg %p123
      %p184 = pneg %p120
      %p185 = scmp.lt.s32.totalorder %s19, 3
      %s186 = scalar_select %p185, %s19, 3
      %s187 = smul.addr %s186, 2
      %s188 = scalar_lea.vmem %s3, %s187
      %p189 = scmp.lt.s32.totalorder %s19, 3
      %s190 = scalar_select %p189, %s19, 3
      %p191 = scmp.lt.s32.totalorder %s20, 0
      %s192 = scalar_select %p191, %s20, 0
      %s193 = smul.addr %s192, 4
      %s194 = smul.addr %s190, 4
      %s195 = sadd.s32 %s193, %s194
      %s196 = smul.addr %s195, 4
      %s197 = scalar_lea.vmem %s0, %s196
      %p198 = scmp.lt.s32.totalorder %s19, 3
      %s199 = scalar_select %p198, %s19, 3
      %s200 = smul.addr %s199, 2
      %s201 = scalar_lea.vmem %s2, %s200
      %p202 = scmp.lt.s32.totalorder %s19, 3
      %s203 = scalar_select %p202, %s19, 3
      %s204 = smul.addr %s203, 2
      %s205 = scalar_lea.vmem %s3, %s204
      %v206 = vld [vmem:[%s197] sm:$0xff]
      %v207 = vld [vmem:[%s197 + $0x8] sm:$0xff]
      %v208 = vld [vmem:[%s1] sm:$0xff]
      %v209 = vld [vmem:[%s1 + $0x8] sm:$0xff]
      %v210 = vld [vmem:[%s1 + $0x10] sm:$0xff]
      %v211 = vld [vmem:[%s1 + $0x18] sm:$0xff]
      %v212 = vld [vmem:[%s1 + $0x20] sm:$0xff]
      %v213 = vld [vmem:[%s1 + $0x28] sm:$0xff]
      %v214 = vld [vmem:[%s1 + $0x30] sm:$0xff]
      %v215 = vld [vmem:[%s1 + $0x38] sm:$0xff]
      %v216 = vld [vmem:[%s1 + $0x40] sm:$0xff]
      %v217 = vld [vmem:[%s1 + $0x48] sm:$0xff]
      %v218 = vld [vmem:[%s1 + $0x50] sm:$0xff]
      %v219 = vld [vmem:[%s1 + $0x58] sm:$0xff]
      %v220 = vld [vmem:[%s1 + $0x60] sm:$0xff]
      %v221 = vld [vmem:[%s1 + $0x68] sm:$0xff]
      %v222 = vld [vmem:[%s1 + $0x70] sm:$0xff]
      %v223 = vld [vmem:[%s1 + $0x78] sm:$0xff]
      %v224 = vld [vmem:[%s1 + $0x80] sm:$0xff]
      %v225 = vld [vmem:[%s1 + $0x88] sm:$0xff]
      %v226 = vld [vmem:[%s1 + $0x90] sm:$0xff]
      %v227 = vld [vmem:[%s1 + $0x98] sm:$0xff]
      %v228 = vld [vmem:[%s1 + $0xa0] sm:$0xff]
      %v229 = vld [vmem:[%s1 + $0xa8] sm:$0xff]
      %v230 = vld [vmem:[%s1 + $0xb0] sm:$0xff]
      %v231 = vld [vmem:[%s1 + $0xb8] sm:$0xff]
      %v232 = vld [vmem:[%s1 + $0xc0] sm:$0xff]
      %v233 = vld [vmem:[%s1 + $0xc8] sm:$0xff]
      %v234 = vld [vmem:[%s1 + $0xd0] sm:$0xff]
      %v235 = vld [vmem:[%s1 + $0xd8] sm:$0xff]
      %v236 = vld [vmem:[%s1 + $0xe0] sm:$0xff]
      %v237 = vld [vmem:[%s1 + $0xe8] sm:$0xff]
      %v238 = vld [vmem:[%s1 + $0xf0] sm:$0xff]
      %v239 = vld [vmem:[%s1 + $0xf8] sm:$0xff]
      %v240 = vld [vmem:[%s1 + $0x100] sm:$0xff]
      %v241 = vld [vmem:[%s1 + $0x108] sm:$0xff]
      %v242 = vld [vmem:[%s1 + $0x110] sm:$0xff]
      %v243 = vld [vmem:[%s1 + $0x118] sm:$0xff]
      %v244 = vld [vmem:[%s1 + $0x120] sm:$0xff]
      %v245 = vld [vmem:[%s1 + $0x128] sm:$0xff]
      %v246 = vld [vmem:[%s1 + $0x130] sm:$0xff]
      %v247 = vld [vmem:[%s1 + $0x138] sm:$0xff]
      %v248 = vld [vmem:[%s1 + $0x140] sm:$0xff]
      %v249 = vld [vmem:[%s1 + $0x148] sm:$0xff]
      %v250 = vld [vmem:[%s1 + $0x150] sm:$0xff]
      %v251 = vld [vmem:[%s1 + $0x158] sm:$0xff]
      %v252 = vld [vmem:[%s1 + $0x160] sm:$0xff]
      %v253 = vld [vmem:[%s1 + $0x168] sm:$0xff]
      %v254 = vld [vmem:[%s1 + $0x170] sm:$0xff]
      %v255 = vld [vmem:[%s1 + $0x178] sm:$0xff]
      %v256 = vld [vmem:[%s1 + $0x180] sm:$0xff]
      %v257 = vld [vmem:[%s1 + $0x188] sm:$0xff]
      %v258 = vld [vmem:[%s1 + $0x190] sm:$0xff]
      %v259 = vld [vmem:[%s1 + $0x198] sm:$0xff]
      %v260 = vld [vmem:[%s1 + $0x1a0] sm:$0xff]
      %v261 = vld [vmem:[%s1 + $0x1a8] sm:$0xff]
      %v262 = vld [vmem:[%s1 + $0x1b0] sm:$0xff]
      %v263 = vld [vmem:[%s1 + $0x1b8] sm:$0xff]
      %v264 = vld [vmem:[%s1 + $0x1c0] sm:$0xff]
      %v265 = vld [vmem:[%s1 + $0x1c8] sm:$0xff]
      %v266 = vld [vmem:[%s1 + $0x1d0] sm:$0xff]
      %v267 = vld [vmem:[%s1 + $0x1d8] sm:$0xff]
      %v268 = vld [vmem:[%s1 + $0x1e0] sm:$0xff]
      %v269 = vld [vmem:[%s1 + $0x1e8] sm:$0xff]
      %v270 = vld [vmem:[%s1 + $0x1f0] sm:$0xff]
      %v271 = vld [vmem:[%s1 + $0x1f8] sm:$0xff]
      %v272 = vld [vmem:[%s1 + $0x200] sm:$0xff]
      %v273 = vld [vmem:[%s1 + $0x208] sm:$0xff]
      %v274 = vld [vmem:[%s1 + $0x210] sm:$0xff]
      %v275 = vld [vmem:[%s1 + $0x218] sm:$0xff]
      %v276 = vld [vmem:[%s1 + $0x220] sm:$0xff]
      %v277 = vld [vmem:[%s1 + $0x228] sm:$0xff]
      %v278 = vld [vmem:[%s1 + $0x230] sm:$0xff]
      %v279 = vld [vmem:[%s1 + $0x238] sm:$0xff]
      %v280 = vld [vmem:[%s1 + $0x240] sm:$0xff]
      %v281 = vld [vmem:[%s1 + $0x248] sm:$0xff]
      %v282 = vld [vmem:[%s1 + $0x250] sm:$0xff]
      %v283 = vld [vmem:[%s1 + $0x258] sm:$0xff]
      %v284 = vld [vmem:[%s1 + $0x260] sm:$0xff]
      %v285 = vld [vmem:[%s1 + $0x268] sm:$0xff]
      %v286 = vld [vmem:[%s1 + $0x270] sm:$0xff]
      %v287 = vld [vmem:[%s1 + $0x278] sm:$0xff]
      %v288 = vld [vmem:[%s1 + $0x280] sm:$0xff]
      %v289 = vld [vmem:[%s1 + $0x288] sm:$0xff]
      %v290 = vld [vmem:[%s1 + $0x290] sm:$0xff]
      %v291 = vld [vmem:[%s1 + $0x298] sm:$0xff]
      %v292 = vld [vmem:[%s1 + $0x2a0] sm:$0xff]
      %v293 = vld [vmem:[%s1 + $0x2a8] sm:$0xff]
      %v294 = vld [vmem:[%s1 + $0x2b0] sm:$0xff]
      %v295 = vld [vmem:[%s1 + $0x2b8] sm:$0xff]
      %v296 = vld [vmem:[%s1 + $0x2c0] sm:$0xff]
      %v297 = vld [vmem:[%s1 + $0x2c8] sm:$0xff]
      %v298 = vld [vmem:[%s1 + $0x2d0] sm:$0xff]
      %v299 = vld [vmem:[%s1 + $0x2d8] sm:$0xff]
      %v300 = vld [vmem:[%s1 + $0x2e0] sm:$0xff]
      %v301 = vld [vmem:[%s1 + $0x2e8] sm:$0xff]
      %v302 = vld [vmem:[%s1 + $0x2f0] sm:$0xff]
      %v303 = vld [vmem:[%s1 + $0x2f8] sm:$0xff]
      %v304 = vld [vmem:[%s1 + $0x300] sm:$0xff]
      %v305 = vld [vmem:[%s1 + $0x308] sm:$0xff]
      %v306 = vld [vmem:[%s1 + $0x310] sm:$0xff]
      %v307 = vld [vmem:[%s1 + $0x318] sm:$0xff]
      %v308 = vld [vmem:[%s1 + $0x320] sm:$0xff]
      %v309 = vld [vmem:[%s1 + $0x328] sm:$0xff]
      %v310 = vld [vmem:[%s1 + $0x330] sm:$0xff]
      %v311 = vld [vmem:[%s1 + $0x338] sm:$0xff]
      %v312 = vld [vmem:[%s1 + $0x340] sm:$0xff]
      %v313 = vld [vmem:[%s1 + $0x348] sm:$0xff]
      %v314 = vld [vmem:[%s1 + $0x350] sm:$0xff]
      %v315 = vld [vmem:[%s1 + $0x358] sm:$0xff]
      %v316 = vld [vmem:[%s1 + $0x360] sm:$0xff]
      %v317 = vld [vmem:[%s1 + $0x368] sm:$0xff]
      %v318 = vld [vmem:[%s1 + $0x370] sm:$0xff]
      %v319 = vld [vmem:[%s1 + $0x378] sm:$0xff]
      %v320 = vld [vmem:[%s1 + $0x380] sm:$0xff]
      %v321 = vld [vmem:[%s1 + $0x388] sm:$0xff]
      %v322 = vld [vmem:[%s1 + $0x390] sm:$0xff]
      %v323 = vld [vmem:[%s1 + $0x398] sm:$0xff]
      %v324 = vld [vmem:[%s1 + $0x3a0] sm:$0xff]
      %v325 = vld [vmem:[%s1 + $0x3a8] sm:$0xff]
      %v326 = vld [vmem:[%s1 + $0x3b0] sm:$0xff]
      %v327 = vld [vmem:[%s1 + $0x3b8] sm:$0xff]
      %v328 = vld [vmem:[%s1 + $0x3c0] sm:$0xff]
      %v329 = vld [vmem:[%s1 + $0x3c8] sm:$0xff]
      %v330 = vld [vmem:[%s1 + $0x3d0] sm:$0xff]
      %v331 = vld [vmem:[%s1 + $0x3d8] sm:$0xff]
      %v332 = vld [vmem:[%s1 + $0x3e0] sm:$0xff]
      %v333 = vld [vmem:[%s1 + $0x3e8] sm:$0xff]
      %v334 = vld [vmem:[%s1 + $0x3f0] sm:$0xff]
      %v335 = vld [vmem:[%s1 + $0x3f8] sm:$0xff]
      %338 = vst [vmem:[#allocation1] ss:$2 sm:$0xff] %v206
      %s339 = scalar_lea.vmem [#allocation1], 16
      %340 = vst [vmem:[%s339] ss:$2 sm:$0xff] %v207
      %v341 = vld.sshfl [vmem:[#allocation1] sm:$0xff pattern:$0x75316420]
      %v342 = vld.sshfl [vmem:[#allocation1 + $0x8] sm:$0xff pattern:$0x75316420]
      %v343 = vld.sshfl [vmem:[#allocation1 + $0x10] sm:$0xff pattern:$0x75316420]
      %v344 = vld.sshfl [vmem:[#allocation1 + $0x18] sm:$0xff pattern:$0x75316420]
      %v349 = vand.u32 %v238, 4294901760
      %350 = vmatpush.msra.mxu0 %v349
      %v351 = vand.u32 %v236, 4294901760
      %352 = vmatpush.msra.mxu0 %v351
      %v353 = vand.u32 %v234, 4294901760
      %354 = vmatpush.msra.mxu0 %v353
      %v355 = vand.u32 %v232, 4294901760
      %356 = vmatpush.msra.mxu0 %v355
      %v357 = vand.u32 %v230, 4294901760
      %358 = vmatpush.msra.mxu0 %v357
      %v359 = vand.u32 %v228, 4294901760
      %360 = vmatpush.msra.mxu0 %v359
      %v361 = vand.u32 %v226, 4294901760
      %362 = vmatpush.msra.mxu0 %v361
      %v363 = vand.u32 %v224, 4294901760
      %364 = vmatpush.msra.mxu0 %v363
      %v365 = vand.u32 %v222, 4294901760
      %366 = vmatpush.msra.mxu0 %v365
      %v367 = vand.u32 %v220, 4294901760
      %368 = vmatpush.msra.mxu0 %v367
      %v369 = vand.u32 %v218, 4294901760
      %370 = vmatpush.msra.mxu0 %v369
      %v371 = vand.u32 %v216, 4294901760
      %372 = vmatpush.msra.mxu0 %v371
      %v373 = vand.u32 %v214, 4294901760
      %374 = vmatpush.msra.mxu0 %v373
      %v375 = vand.u32 %v212, 4294901760
      %376 = vmatpush.msra.mxu0 %v375
      %v377 = vand.u32 %v210, 4294901760
      %378 = vmatpush.msra.mxu0 %v377
      %v379 = vand.u32 %v208, 4294901760
      %380 = vmatpush.msra.mxu0 %v379
      %v381 = vand.u32 %v341, 4294901760
      %v382 = vsub.f32 %v341, %v381
      %v383 = vand.u32 %v382, 4294901760
      %v384 = vsub.f32 %v382, %v383
      %v385 = vand.u32 %v384, 4294901760
      %386 = vmatmul.f32.gmra.mxu0 %v385
      %v387 = vpop.f32.mrf.mxu0
      %v388 = vadd.f32 0.0, %v387
      %389 = vdwg.mxu0
      %v390 = vand.u32 %v238, 4294901760
      %v391 = vsub.f32 %v238, %v390
      %v392 = vand.u32 %v391, 4294901760
      %v393 = vsub.f32 %v391, %v392
      %v394 = vand.u32 %v393, 4294901760
      %395 = vmatpush.msra.mxu0 %v394
      %v396 = vand.u32 %v236, 4294901760
      %v397 = vsub.f32 %v236, %v396
      %v398 = vand.u32 %v397, 4294901760
      %v399 = vsub.f32 %v397, %v398
      %v400 = vand.u32 %v399, 4294901760
      %401 = vmatpush.msra.mxu0 %v400
      %v402 = vand.u32 %v234, 4294901760
      %v403 = vsub.f32 %v234, %v402
      %v404 = vand.u32 %v403, 4294901760
      %v405 = vsub.f32 %v403, %v404
      %v406 = vand.u32 %v405, 4294901760
      %407 = vmatpush.msra.mxu0 %v406
      %v408 = vand.u32 %v232, 4294901760
      %v409 = vsub.f32 %v232, %v408
      %v410 = vand.u32 %v409, 4294901760
      %v411 = vsub.f32 %v409, %v410
      %v412 = vand.u32 %v411, 4294901760
      %413 = vmatpush.msra.mxu0 %v412
      %v414 = vand.u32 %v230, 4294901760
      %v415 = vsub.f32 %v230, %v414
      %v416 = vand.u32 %v415, 4294901760
      %v417 = vsub.f32 %v415, %v416
      %v418 = vand.u32 %v417, 4294901760
      %419 = vmatpush.msra.mxu0 %v418
      %v420 = vand.u32 %v228, 4294901760
      %v421 = vsub.f32 %v228, %v420
      %v422 = vand.u32 %v421, 4294901760
      %v423 = vsub.f32 %v421, %v422
      %v424 = vand.u32 %v423, 4294901760
      %425 = vmatpush.msra.mxu0 %v424
      %v426 = vand.u32 %v226, 4294901760
      %v427 = vsub.f32 %v226, %v426
      %v428 = vand.u32 %v427, 4294901760
      %v429 = vsub.f32 %v427, %v428
      %v430 = vand.u32 %v429, 4294901760
      %431 = vmatpush.msra.mxu0 %v430
      %v432 = vand.u32 %v224, 4294901760
      %v433 = vsub.f32 %v224, %v432
      %v434 = vand.u32 %v433, 4294901760
      %v435 = vsub.f32 %v433, %v434
      %v436 = vand.u32 %v435, 4294901760
      %437 = vmatpush.msra.mxu0 %v436
      %v438 = vand.u32 %v222, 4294901760
      %v439 = vsub.f32 %v222, %v438
      %v440 = vand.u32 %v439, 4294901760
      %v441 = vsub.f32 %v439, %v440
      %v442 = vand.u32 %v441, 4294901760
      %443 = vmatpush.msra.mxu0 %v442
      %v444 = vand.u32 %v220, 4294901760
      %v445 = vsub.f32 %v220, %v444
      %v446 = vand.u32 %v445, 4294901760
      %v447 = vsub.f32 %v445, %v446
      %v448 = vand.u32 %v447, 4294901760
      %449 = vmatpush.msra.mxu0 %v448
      %v450 = vand.u32 %v218, 4294901760
      %v451 = vsub.f32 %v218, %v450
      %v452 = vand.u32 %v451, 4294901760
      %v453 = vsub.f32 %v451, %v452
      %v454 = vand.u32 %v453, 4294901760
      %455 = vmatpush.msra.mxu0 %v454
      %v456 = vand.u32 %v216, 4294901760
      %v457 = vsub.f32 %v216, %v456
      %v458 = vand.u32 %v457, 4294901760
      %v459 = vsub.f32 %v457, %v458
      %v460 = vand.u32 %v459, 4294901760
      %461 = vmatpush.msra.mxu0 %v460
      %v462 = vand.u32 %v214, 4294901760
      %v463 = vsub.f32 %v214, %v462
      %v464 = vand.u32 %v463, 4294901760
      %v465 = vsub.f32 %v463, %v464
      %v466 = vand.u32 %v465, 4294901760
      %467 = vmatpush.msra.mxu0 %v466
      %v468 = vand.u32 %v212, 4294901760
      %v469 = vsub.f32 %v212, %v468
      %v470 = vand.u32 %v469, 4294901760
      %v471 = vsub.f32 %v469, %v470
      %v472 = vand.u32 %v471, 4294901760
      %473 = vmatpush.msra.mxu0 %v472
      %v474 = vand.u32 %v210, 4294901760
      %v475 = vsub.f32 %v210, %v474
      %v476 = vand.u32 %v475, 4294901760
      %v477 = vsub.f32 %v475, %v476
      %v478 = vand.u32 %v477, 4294901760
      %479 = vmatpush.msra.mxu0 %v478
      %v480 = vand.u32 %v208, 4294901760
      %v481 = vsub.f32 %v208, %v480
      %v482 = vand.u32 %v481, 4294901760
      %v483 = vsub.f32 %v481, %v482
      %v484 = vand.u32 %v483, 4294901760
      %485 = vmatpush.msra.mxu0 %v484
      %v486 = vand.u32 %v341, 4294901760
      %487 = vmatmul.f32.gmra.mxu0 %v486
      %v488 = vpop.f32.mrf.mxu0
      %v489 = vadd.f32 %v388, %v488
      %490 = vdwg.mxu0
      %v491 = vand.u32 %v238, 4294901760
      %v492 = vsub.f32 %v238, %v491
      %493 = vmatpush.msra.mxu0 %v492
      %v494 = vand.u32 %v236, 4294901760
      %v495 = vsub.f32 %v236, %v494
      %496 = vmatpush.msra.mxu0 %v495
      %v497 = vand.u32 %v234, 4294901760
      %v498 = vsub.f32 %v234, %v497
      %499 = vmatpush.msra.mxu0 %v498
      %v500 = vand.u32 %v232, 4294901760
      %v501 = vsub.f32 %v232, %v500
      %502 = vmatpush.msra.mxu0 %v501
      %v503 = vand.u32 %v230, 4294901760
      %v504 = vsub.f32 %v230, %v503
      %505 = vmatpush.msra.mxu0 %v504
      %v506 = vand.u32 %v228, 4294901760
      %v507 = vsub.f32 %v228, %v506
      %508 = vmatpush.msra.mxu0 %v507
      %v509 = vand.u32 %v226, 4294901760
      %v510 = vsub.f32 %v226, %v509
      %511 = vmatpush.msra.mxu0 %v510
      %v512 = vand.u32 %v224, 4294901760
      %v513 = vsub.f32 %v224, %v512
      %514 = vmatpush.msra.mxu0 %v513
      %v515 = vand.u32 %v222, 4294901760
      %v516 = vsub.f32 %v222, %v515
      %517 = vmatpush.msra.mxu0 %v516
      %v518 = vand.u32 %v220, 4294901760
      %v519 = vsub.f32 %v220, %v518
      %520 = vmatpush.msra.mxu0 %v519
      %v521 = vand.u32 %v218, 4294901760
      %v522 = vsub.f32 %v218, %v521
      %523 = vmatpush.msra.mxu0 %v522
      %v524 = vand.u32 %v216, 4294901760
      %v525 = vsub.f32 %v216, %v524
      %526 = vmatpush.msra.mxu0 %v525
      %v527 = vand.u32 %v214, 4294901760
      %v528 = vsub.f32 %v214, %v527
      %529 = vmatpush.msra.mxu0 %v528
      %v530 = vand.u32 %v212, 4294901760
      %v531 = vsub.f32 %v212, %v530
      %532 = vmatpush.msra.mxu0 %v531
      %v533 = vand.u32 %v210, 4294901760
      %v534 = vsub.f32 %v210, %v533
      %535 = vmatpush.msra.mxu0 %v534
      %v536 = vand.u32 %v208, 4294901760
      %v537 = vsub.f32 %v208, %v536
      %538 = vmatpush.msra.mxu0 %v537
      %v539 = vand.u32 %v341, 4294901760
      %v540 = vsub.f32 %v341, %v539
      %541 = vmatmul.f32.gmra.mxu0 %v540
      %v542 = vpop.f32.mrf.mxu0
      %v543 = vadd.f32 %v489, %v542
      %544 = vdwg.mxu0
      %v545 = vand.u32 %v238, 4294901760
      %546 = vmatpush.msra.mxu0 %v545
      %v547 = vand.u32 %v236, 4294901760
      %548 = vmatpush.msra.mxu0 %v547
      %v549 = vand.u32 %v234, 4294901760
      %550 = vmatpush.msra.mxu0 %v549
      %v551 = vand.u32 %v232, 4294901760
      %552 = vmatpush.msra.mxu0 %v551
      %v553 = vand.u32 %v230, 4294901760
      %554 = vmatpush.msra.mxu0 %v553
      %v555 = vand.u32 %v228, 4294901760
      %556 = vmatpush.msra.mxu0 %v555
      %v557 = vand.u32 %v226, 4294901760
      %558 = vmatpush.msra.mxu0 %v557
      %v559 = vand.u32 %v224, 4294901760
      %560 = vmatpush.msra.mxu0 %v559
      %v561 = vand.u32 %v222, 4294901760
      %562 = vmatpush.msra.mxu0 %v561
      %v563 = vand.u32 %v220, 4294901760
      %564 = vmatpush.msra.mxu0 %v563
      %v565 = vand.u32 %v218, 4294901760
      %566 = vmatpush.msra.mxu0 %v565
      %v567 = vand.u32 %v216, 4294901760
      %568 = vmatpush.msra.mxu0 %v567
      %v569 = vand.u32 %v214, 4294901760
      %570 = vmatpush.msra.mxu0 %v569
      %v571 = vand.u32 %v212, 4294901760
      %572 = vmatpush.msra.mxu0 %v571
      %v573 = vand.u32 %v210, 4294901760
      %574 = vmatpush.msra.mxu0 %v573
      %v575 = vand.u32 %v208, 4294901760
      %576 = vmatpush.msra.mxu0 %v575
      %v577 = vand.u32 %v341, 4294901760
      %v578 = vsub.f32 %v341, %v577
      %v579 = vand.u32 %v578, 4294901760
      %580 = vmatmul.f32.gmra.mxu0 %v579
      %v581 = vpop.f32.mrf.mxu0
      %v582 = vadd.f32 %v543, %v581
      %583 = vdwg.mxu0
      %v584 = vand.u32 %v238, 4294901760
      %v585 = vsub.f32 %v238, %v584
      %v586 = vand.u32 %v585, 4294901760
      %587 = vmatpush.msra.mxu0 %v586
      %v588 = vand.u32 %v236, 4294901760
      %v589 = vsub.f32 %v236, %v588
      %v590 = vand.u32 %v589, 4294901760
      %591 = vmatpush.msra.mxu0 %v590
      %v592 = vand.u32 %v234, 4294901760
      %v593 = vsub.f32 %v234, %v592
      %v594 = vand.u32 %v593, 4294901760
      %595 = vmatpush.msra.mxu0 %v594
      %v596 = vand.u32 %v232, 4294901760
      %v597 = vsub.f32 %v232, %v596
      %v598 = vand.u32 %v597, 4294901760
      %599 = vmatpush.msra.mxu0 %v598
      %v600 = vand.u32 %v230, 4294901760
      %v601 = vsub.f32 %v230, %v600
      %v602 = vand.u32 %v601, 4294901760
      %603 = vmatpush.msra.mxu0 %v602
      %v604 = vand.u32 %v228, 4294901760
      %v605 = vsub.f32 %v228, %v604
      %v606 = vand.u32 %v605, 4294901760
      %607 = vmatpush.msra.mxu0 %v606
      %v608 = vand.u32 %v226, 4294901760
      %v609 = vsub.f32 %v226, %v608
      %v610 = vand.u32 %v609, 4294901760
      %611 = vmatpush.msra.mxu0 %v610
      %v612 = vand.u32 %v224, 4294901760
      %v613 = vsub.f32 %v224, %v612
      %v614 = vand.u32 %v613, 4294901760
      %615 = vmatpush.msra.mxu0 %v614
      %v616 = vand.u32 %v222, 4294901760
      %v617 = vsub.f32 %v222, %v616
      %v618 = vand.u32 %v617, 4294901760
      %619 = vmatpush.msra.mxu0 %v618
      %v620 = vand.u32 %v220, 4294901760
      %v621 = vsub.f32 %v220, %v620
      %v622 = vand.u32 %v621, 4294901760
      %623 = vmatpush.msra.mxu0 %v622
      %v624 = vand.u32 %v218, 4294901760
      %v625 = vsub.f32 %v218, %v624
      %v626 = vand.u32 %v625, 4294901760
      %627 = vmatpush.msra.mxu0 %v626
      %v628 = vand.u32 %v216, 4294901760
      %v629 = vsub.f32 %v216, %v628
      %v630 = vand.u32 %v629, 4294901760
      %631 = vmatpush.msra.mxu0 %v630
      %v632 = vand.u32 %v214, 4294901760
      %v633 = vsub.f32 %v214, %v632
      %v634 = vand.u32 %v633, 4294901760
      %635 = vmatpush.msra.mxu0 %v634
      %v636 = vand.u32 %v212, 4294901760
      %v637 = vsub.f32 %v212, %v636
      %v638 = vand.u32 %v637, 4294901760
      %639 = vmatpush.msra.mxu0 %v638
      %v640 = vand.u32 %v210, 4294901760
      %v641 = vsub.f32 %v210, %v640
      %v642 = vand.u32 %v641, 4294901760
      %643 = vmatpush.msra.mxu0 %v642
      %v644 = vand.u32 %v208, 4294901760
      %v645 = vsub.f32 %v208, %v644
      %v646 = vand.u32 %v645, 4294901760
      %647 = vmatpush.msra.mxu0 %v646
      %v648 = vand.u32 %v341, 4294901760
      %649 = vmatmul.f32.gmra.mxu0 %v648
      %v650 = vpop.f32.mrf.mxu0
      %v651 = vadd.f32 %v582, %v650
      %652 = vdwg.mxu0
      %v653 = vand.u32 %v238, 4294901760
      %654 = vmatpush.msra.mxu0 %v653
      %v655 = vand.u32 %v236, 4294901760
      %656 = vmatpush.msra.mxu0 %v655
      %v657 = vand.u32 %v234, 4294901760
      %658 = vmatpush.msra.mxu0 %v657
      %v659 = vand.u32 %v232, 4294901760
      %660 = vmatpush.msra.mxu0 %v659
      %v661 = vand.u32 %v230, 4294901760
      %662 = vmatpush.msra.mxu0 %v661
      %v663 = vand.u32 %v228, 4294901760
      %664 = vmatpush.msra.mxu0 %v663
      %v665 = vand.u32 %v226, 4294901760
      %666 = vmatpush.msra.mxu0 %v665
      %v667 = vand.u32 %v224, 4294901760
      %668 = vmatpush.msra.mxu0 %v667
      %v669 = vand.u32 %v222, 4294901760
      %670 = vmatpush.msra.mxu0 %v669
      %v671 = vand.u32 %v220, 4294901760
      %672 = vmatpush.msra.mxu0 %v671
      %v673 = vand.u32 %v218, 4294901760
      %674 = vmatpush.msra.mxu0 %v673
      %v675 = vand.u32 %v216, 4294901760
      %676 = vmatpush.msra.mxu0 %v675
      %v677 = vand.u32 %v214, 4294901760
      %678 = vmatpush.msra.mxu0 %v677
      %v679 = vand.u32 %v212, 4294901760
      %680 = vmatpush.msra.mxu0 %v679
      %v681 = vand.u32 %v210, 4294901760
      %682 = vmatpush.msra.mxu0 %v681
      %v683 = vand.u32 %v208, 4294901760
      %684 = vmatpush.msra.mxu0 %v683
      %v685 = vand.u32 %v341, 4294901760
      %686 = vmatmul.f32.gmra.mxu0 %v685
      %v687 = vpop.f32.mrf.mxu0
      %v688 = vadd.f32 %v651, %v687
      %689 = vdwg.mxu0
      %v690 = vand.u32 %v270, 4294901760
      %691 = vmatpush.msra.mxu0 %v690
      %v692 = vand.u32 %v268, 4294901760
      %693 = vmatpush.msra.mxu0 %v692
      %v694 = vand.u32 %v266, 4294901760
      %695 = vmatpush.msra.mxu0 %v694
      %v696 = vand.u32 %v264, 4294901760
      %697 = vmatpush.msra.mxu0 %v696
      %v698 = vand.u32 %v262, 4294901760
      %699 = vmatpush.msra.mxu0 %v698
      %v700 = vand.u32 %v260, 4294901760
      %701 = vmatpush.msra.mxu0 %v700
      %v702 = vand.u32 %v258, 4294901760
      %703 = vmatpush.msra.mxu0 %v702
      %v704 = vand.u32 %v256, 4294901760
      %705 = vmatpush.msra.mxu0 %v704
      %v706 = vand.u32 %v254, 4294901760
      %707 = vmatpush.msra.mxu0 %v706
      %v708 = vand.u32 %v252, 4294901760
      %709 = vmatpush.msra.mxu0 %v708
      %v710 = vand.u32 %v250, 4294901760
      %711 = vmatpush.msra.mxu0 %v710
      %v712 = vand.u32 %v248, 4294901760
      %713 = vmatpush.msra.mxu0 %v712
      %v714 = vand.u32 %v246, 4294901760
      %715 = vmatpush.msra.mxu0 %v714
      %v716 = vand.u32 %v244, 4294901760
      %717 = vmatpush.msra.mxu0 %v716
      %v718 = vand.u32 %v242, 4294901760
      %719 = vmatpush.msra.mxu0 %v718
      %v720 = vand.u32 %v240, 4294901760
      %721 = vmatpush.msra.mxu0 %v720
      %v722 = vand.u32 %v342, 4294901760
      %v723 = vsub.f32 %v342, %v722
      %v724 = vand.u32 %v723, 4294901760
      %v725 = vsub.f32 %v723, %v724
      %v726 = vand.u32 %v725, 4294901760
      %727 = vmatmul.f32.gmra.mxu0 %v726
      %v728 = vpop.f32.mrf.mxu0
      %v729 = vadd.f32 %v688, %v728
      %730 = vdwg.mxu0
      %v731 = vand.u32 %v270, 4294901760
      %v732 = vsub.f32 %v270, %v731
      %v733 = vand.u32 %v732, 4294901760
      %v734 = vsub.f32 %v732, %v733
      %v735 = vand.u32 %v734, 4294901760
      %736 = vmatpush.msra.mxu0 %v735
      %v737 = vand.u32 %v268, 4294901760
      %v738 = vsub.f32 %v268, %v737
      %v739 = vand.u32 %v738, 4294901760
      %v740 = vsub.f32 %v738, %v739
      %v741 = vand.u32 %v740, 4294901760
      %742 = vmatpush.msra.mxu0 %v741
      %v743 = vand.u32 %v266, 4294901760
      %v744 = vsub.f32 %v266, %v743
      %v745 = vand.u32 %v744, 4294901760
      %v746 = vsub.f32 %v744, %v745
      %v747 = vand.u32 %v746, 4294901760
      %748 = vmatpush.msra.mxu0 %v747
      %v749 = vand.u32 %v264, 4294901760
      %v750 = vsub.f32 %v264, %v749
      %v751 = vand.u32 %v750, 4294901760
      %v752 = vsub.f32 %v750, %v751
      %v753 = vand.u32 %v752, 4294901760
      %754 = vmatpush.msra.mxu0 %v753
      %v755 = vand.u32 %v262, 4294901760
      %v756 = vsub.f32 %v262, %v755
      %v757 = vand.u32 %v756, 4294901760
      %v758 = vsub.f32 %v756, %v757
      %v759 = vand.u32 %v758, 4294901760
      %760 = vmatpush.msra.mxu0 %v759
      %v761 = vand.u32 %v260, 4294901760
      %v762 = vsub.f32 %v260, %v761
      %v763 = vand.u32 %v762, 4294901760
      %v764 = vsub.f32 %v762, %v763
      %v765 = vand.u32 %v764, 4294901760
      %766 = vmatpush.msra.mxu0 %v765
      %v767 = vand.u32 %v258, 4294901760
      %v768 = vsub.f32 %v258, %v767
      %v769 = vand.u32 %v768, 4294901760
      %v770 = vsub.f32 %v768, %v769
      %v771 = vand.u32 %v770, 4294901760
      %772 = vmatpush.msra.mxu0 %v771
      %v773 = vand.u32 %v256, 4294901760
      %v774 = vsub.f32 %v256, %v773
      %v775 = vand.u32 %v774, 4294901760
      %v776 = vsub.f32 %v774, %v775
      %v777 = vand.u32 %v776, 4294901760
      %778 = vmatpush.msra.mxu0 %v777
      %v779 = vand.u32 %v254, 4294901760
      %v780 = vsub.f32 %v254, %v779
      %v781 = vand.u32 %v780, 4294901760
      %v782 = vsub.f32 %v780, %v781
      %v783 = vand.u32 %v782, 4294901760
      %784 = vmatpush.msra.mxu0 %v783
      %v785 = vand.u32 %v252, 4294901760
      %v786 = vsub.f32 %v252, %v785
      %v787 = vand.u32 %v786, 4294901760
      %v788 = vsub.f32 %v786, %v787
      %v789 = vand.u32 %v788, 4294901760
      %790 = vmatpush.msra.mxu0 %v789
      %v791 = vand.u32 %v250, 4294901760
      %v792 = vsub.f32 %v250, %v791
      %v793 = vand.u32 %v792, 4294901760
      %v794 = vsub.f32 %v792, %v793
      %v795 = vand.u32 %v794, 4294901760
      %796 = vmatpush.msra.mxu0 %v795
      %v797 = vand.u32 %v248, 4294901760
      %v798 = vsub.f32 %v248, %v797
      %v799 = vand.u32 %v798, 4294901760
      %v800 = vsub.f32 %v798, %v799
      %v801 = vand.u32 %v800, 4294901760
      %802 = vmatpush.msra.mxu0 %v801
      %v803 = vand.u32 %v246, 4294901760
      %v804 = vsub.f32 %v246, %v803
      %v805 = vand.u32 %v804, 4294901760
      %v806 = vsub.f32 %v804, %v805
      %v807 = vand.u32 %v806, 4294901760
      %808 = vmatpush.msra.mxu0 %v807
      %v809 = vand.u32 %v244, 4294901760
      %v810 = vsub.f32 %v244, %v809
      %v811 = vand.u32 %v810, 4294901760
      %v812 = vsub.f32 %v810, %v811
      %v813 = vand.u32 %v812, 4294901760
      %814 = vmatpush.msra.mxu0 %v813
      %v815 = vand.u32 %v242, 4294901760
      %v816 = vsub.f32 %v242, %v815
      %v817 = vand.u32 %v816, 4294901760
      %v818 = vsub.f32 %v816, %v817
      %v819 = vand.u32 %v818, 4294901760
      %820 = vmatpush.msra.mxu0 %v819
      %v821 = vand.u32 %v240, 4294901760
      %v822 = vsub.f32 %v240, %v821
      %v823 = vand.u32 %v822, 4294901760
      %v824 = vsub.f32 %v822, %v823
      %v825 = vand.u32 %v824, 4294901760
      %826 = vmatpush.msra.mxu0 %v825
      %v827 = vand.u32 %v342, 4294901760
      %828 = vmatmul.f32.gmra.mxu0 %v827
      %v829 = vpop.f32.mrf.mxu0
      %v830 = vadd.f32 %v729, %v829
      %831 = vdwg.mxu0
      %v832 = vand.u32 %v270, 4294901760
      %v833 = vsub.f32 %v270, %v832
      %834 = vmatpush.msra.mxu0 %v833
      %v835 = vand.u32 %v268, 4294901760
      %v836 = vsub.f32 %v268, %v835
      %837 = vmatpush.msra.mxu0 %v836
      %v838 = vand.u32 %v266, 4294901760
      %v839 = vsub.f32 %v266, %v838
      %840 = vmatpush.msra.mxu0 %v839
      %v841 = vand.u32 %v264, 4294901760
      %v842 = vsub.f32 %v264, %v841
      %843 = vmatpush.msra.mxu0 %v842
      %v844 = vand.u32 %v262, 4294901760
      %v845 = vsub.f32 %v262, %v844
      %846 = vmatpush.msra.mxu0 %v845
      %v847 = vand.u32 %v260, 4294901760
      %v848 = vsub.f32 %v260, %v847
      %849 = vmatpush.msra.mxu0 %v848
      %v850 = vand.u32 %v258, 4294901760
      %v851 = vsub.f32 %v258, %v850
      %852 = vmatpush.msra.mxu0 %v851
      %v853 = vand.u32 %v256, 4294901760
      %v854 = vsub.f32 %v256, %v853
      %855 = vmatpush.msra.mxu0 %v854
      %v856 = vand.u32 %v254, 4294901760
      %v857 = vsub.f32 %v254, %v856
      %858 = vmatpush.msra.mxu0 %v857
      %v859 = vand.u32 %v252, 4294901760
      %v860 = vsub.f32 %v252, %v859
      %861 = vmatpush.msra.mxu0 %v860
      %v862 = vand.u32 %v250, 4294901760
      %v863 = vsub.f32 %v250, %v862
      %864 = vmatpush.msra.mxu0 %v863
      %v865 = vand.u32 %v248, 4294901760
      %v866 = vsub.f32 %v248, %v865
      %867 = vmatpush.msra.mxu0 %v866
      %v868 = vand.u32 %v246, 4294901760
      %v869 = vsub.f32 %v246, %v868
      %870 = vmatpush.msra.mxu0 %v869
      %v871 = vand.u32 %v244, 4294901760
      %v872 = vsub.f32 %v244, %v871
      %873 = vmatpush.msra.mxu0 %v872
      %v874 = vand.u32 %v242, 4294901760
      %v875 = vsub.f32 %v242, %v874
      %876 = vmatpush.msra.mxu0 %v875
      %v877 = vand.u32 %v240, 4294901760
      %v878 = vsub.f32 %v240, %v877
      %879 = vmatpush.msra.mxu0 %v878
      %v880 = vand.u32 %v342, 4294901760
      %v881 = vsub.f32 %v342, %v880
      %882 = vmatmul.f32.gmra.mxu0 %v881
      %v883 = vpop.f32.mrf.mxu0
      %v884 = vadd.f32 %v830, %v883
      %885 = vdwg.mxu0
      %v886 = vand.u32 %v270, 4294901760
      %887 = vmatpush.msra.mxu0 %v886
      %v888 = vand.u32 %v268, 4294901760
      %889 = vmatpush.msra.mxu0 %v888
      %v890 = vand.u32 %v266, 4294901760
      %891 = vmatpush.msra.mxu0 %v890
      %v892 = vand.u32 %v264, 4294901760
      %893 = vmatpush.msra.mxu0 %v892
      %v894 = vand.u32 %v262, 4294901760
      %895 = vmatpush.msra.mxu0 %v894
      %v896 = vand.u32 %v260, 4294901760
      %897 = vmatpush.msra.mxu0 %v896
      %v898 = vand.u32 %v258, 4294901760
      %899 = vmatpush.msra.mxu0 %v898
      %v900 = vand.u32 %v256, 4294901760
      %901 = vmatpush.msra.mxu0 %v900
      %v902 = vand.u32 %v254, 4294901760
      %903 = vmatpush.msra.mxu0 %v902
      %v904 = vand.u32 %v252, 4294901760
      %905 = vmatpush.msra.mxu0 %v904
      %v906 = vand.u32 %v250, 4294901760
      %907 = vmatpush.msra.mxu0 %v906
      %v908 = vand.u32 %v248, 4294901760
      %909 = vmatpush.msra.mxu0 %v908
      %v910 = vand.u32 %v246, 4294901760
      %911 = vmatpush.msra.mxu0 %v910
      %v912 = vand.u32 %v244, 4294901760
      %913 = vmatpush.msra.mxu0 %v912
      %v914 = vand.u32 %v242, 4294901760
      %915 = vmatpush.msra.mxu0 %v914
      %v916 = vand.u32 %v240, 4294901760
      %917 = vmatpush.msra.mxu0 %v916
      %v918 = vand.u32 %v342, 4294901760
      %v919 = vsub.f32 %v342, %v918
      %v920 = vand.u32 %v919, 4294901760
      %921 = vmatmul.f32.gmra.mxu0 %v920
      %v922 = vpop.f32.mrf.mxu0
      %v923 = vadd.f32 %v884, %v922
      %924 = vdwg.mxu0
      %v925 = vand.u32 %v270, 4294901760
      %v926 = vsub.f32 %v270, %v925
      %v927 = vand.u32 %v926, 4294901760
      %928 = vmatpush.msra.mxu0 %v927
      %v929 = vand.u32 %v268, 4294901760
      %v930 = vsub.f32 %v268, %v929
      %v931 = vand.u32 %v930, 4294901760
      %932 = vmatpush.msra.mxu0 %v931
      %v933 = vand.u32 %v266, 4294901760
      %v934 = vsub.f32 %v266, %v933
      %v935 = vand.u32 %v934, 4294901760
      %936 = vmatpush.msra.mxu0 %v935
      %v937 = vand.u32 %v264, 4294901760
      %v938 = vsub.f32 %v264, %v937
      %v939 = vand.u32 %v938, 4294901760
      %940 = vmatpush.msra.mxu0 %v939
      %v941 = vand.u32 %v262, 4294901760
      %v942 = vsub.f32 %v262, %v941
      %v943 = vand.u32 %v942, 4294901760
      %944 = vmatpush.msra.mxu0 %v943
      %v945 = vand.u32 %v260, 4294901760
      %v946 = vsub.f32 %v260, %v945
      %v947 = vand.u32 %v946, 4294901760
      %948 = vmatpush.msra.mxu0 %v947
      %v949 = vand.u32 %v258, 4294901760
      %v950 = vsub.f32 %v258, %v949
      %v951 = vand.u32 %v950, 4294901760
      %952 = vmatpush.msra.mxu0 %v951
      %v953 = vand.u32 %v256, 4294901760
      %v954 = vsub.f32 %v256, %v953
      %v955 = vand.u32 %v954, 4294901760
      %956 = vmatpush.msra.mxu0 %v955
      %v957 = vand.u32 %v254, 4294901760
      %v958 = vsub.f32 %v254, %v957
      %v959 = vand.u32 %v958, 4294901760
      %960 = vmatpush.msra.mxu0 %v959
      %v961 = vand.u32 %v252, 4294901760
      %v962 = vsub.f32 %v252, %v961
      %v963 = vand.u32 %v962, 4294901760
      %964 = vmatpush.msra.mxu0 %v963
      %v965 = vand.u32 %v250, 4294901760
      %v966 = vsub.f32 %v250, %v965
      %v967 = vand.u32 %v966, 4294901760
      %968 = vmatpush.msra.mxu0 %v967
      %v969 = vand.u32 %v248, 4294901760
      %v970 = vsub.f32 %v248, %v969
      %v971 = vand.u32 %v970, 4294901760
      %972 = vmatpush.msra.mxu0 %v971
      %v973 = vand.u32 %v246, 4294901760
      %v974 = vsub.f32 %v246, %v973
      %v975 = vand.u32 %v974, 4294901760
      %976 = vmatpush.msra.mxu0 %v975
      %v977 = vand.u32 %v244, 4294901760
      %v978 = vsub.f32 %v244, %v977
      %v979 = vand.u32 %v978, 4294901760
      %980 = vmatpush.msra.mxu0 %v979
      %v981 = vand.u32 %v242, 4294901760
      %v982 = vsub.f32 %v242, %v981
      %v983 = vand.u32 %v982, 4294901760
      %984 = vmatpush.msra.mxu0 %v983
      %v985 = vand.u32 %v240, 4294901760
      %v986 = vsub.f32 %v240, %v985
      %v987 = vand.u32 %v986, 4294901760
      %988 = vmatpush.msra.mxu0 %v987
      %v989 = vand.u32 %v342, 4294901760
      %990 = vmatmul.f32.gmra.mxu0 %v989
      %v991 = vpop.f32.mrf.mxu0
      %v992 = vadd.f32 %v923, %v991
      %993 = vdwg.mxu0
      %v994 = vand.u32 %v270, 4294901760
      %995 = vmatpush.msra.mxu0 %v994
      %v996 = vand.u32 %v268, 4294901760
      %997 = vmatpush.msra.mxu0 %v996
      %v998 = vand.u32 %v266, 4294901760
      %999 = vmatpush.msra.mxu0 %v998
      %v1000 = vand.u32 %v264, 4294901760
      %1001 = vmatpush.msra.mxu0 %v1000
      %v1002 = vand.u32 %v262, 4294901760
      %1003 = vmatpush.msra.mxu0 %v1002
      %v1004 = vand.u32 %v260, 4294901760
      %1005 = vmatpush.msra.mxu0 %v1004
      %v1006 = vand.u32 %v258, 4294901760
      %1007 = vmatpush.msra.mxu0 %v1006
      %v1008 = vand.u32 %v256, 4294901760
      %1009 = vmatpush.msra.mxu0 %v1008
      %v1010 = vand.u32 %v254, 4294901760
      %1011 = vmatpush.msra.mxu0 %v1010
      %v1012 = vand.u32 %v252, 4294901760
      %1013 = vmatpush.msra.mxu0 %v1012
      %v1014 = vand.u32 %v250, 4294901760
      %1015 = vmatpush.msra.mxu0 %v1014
      %v1016 = vand.u32 %v248, 4294901760
      %1017 = vmatpush.msra.mxu0 %v1016
      %v1018 = vand.u32 %v246, 4294901760
      %1019 = vmatpush.msra.mxu0 %v1018
      %v1020 = vand.u32 %v244, 4294901760
      %1021 = vmatpush.msra.mxu0 %v1020
      %v1022 = vand.u32 %v242, 4294901760
      %1023 = vmatpush.msra.mxu0 %v1022
      %v1024 = vand.u32 %v240, 4294901760
      %1025 = vmatpush.msra.mxu0 %v1024
      %v1026 = vand.u32 %v342, 4294901760
      %1027 = vmatmul.f32.gmra.mxu0 %v1026
      %v1028 = vpop.f32.mrf.mxu0
      %v1029 = vadd.f32 %v992, %v1028
      %1030 = vdwg.mxu0
      %v1031 = vand.u32 %v302, 4294901760
      %1032 = vmatpush.msra.mxu0 %v1031
      %v1033 = vand.u32 %v300, 4294901760
      %1034 = vmatpush.msra.mxu0 %v1033
      %v1035 = vand.u32 %v298, 4294901760
      %1036 = vmatpush.msra.mxu0 %v1035
      %v1037 = vand.u32 %v296, 4294901760
      %1038 = vmatpush.msra.mxu0 %v1037
      %v1039 = vand.u32 %v294, 4294901760
      %1040 = vmatpush.msra.mxu0 %v1039
      %v1041 = vand.u32 %v292, 4294901760
      %1042 = vmatpush.msra.mxu0 %v1041
      %v1043 = vand.u32 %v290, 4294901760
      %1044 = vmatpush.msra.mxu0 %v1043
      %v1045 = vand.u32 %v288, 4294901760
      %1046 = vmatpush.msra.mxu0 %v1045
      %v1047 = vand.u32 %v286, 4294901760
      %1048 = vmatpush.msra.mxu0 %v1047
      %v1049 = vand.u32 %v284, 4294901760
      %1050 = vmatpush.msra.mxu0 %v1049
      %v1051 = vand.u32 %v282, 4294901760
      %1052 = vmatpush.msra.mxu0 %v1051
      %v1053 = vand.u32 %v280, 4294901760
      %1054 = vmatpush.msra.mxu0 %v1053
      %v1055 = vand.u32 %v278, 4294901760
      %1056 = vmatpush.msra.mxu0 %v1055
      %v1057 = vand.u32 %v276, 4294901760
      %1058 = vmatpush.msra.mxu0 %v1057
      %v1059 = vand.u32 %v274, 4294901760
      %1060 = vmatpush.msra.mxu0 %v1059
      %v1061 = vand.u32 %v272, 4294901760
      %1062 = vmatpush.msra.mxu0 %v1061
      %v1063 = vand.u32 %v343, 4294901760
      %v1064 = vsub.f32 %v343, %v1063
      %v1065 = vand.u32 %v1064, 4294901760
      %v1066 = vsub.f32 %v1064, %v1065
      %v1067 = vand.u32 %v1066, 4294901760
      %1068 = vmatmul.f32.gmra.mxu0 %v1067
      %v1069 = vpop.f32.mrf.mxu0
      %v1070 = vadd.f32 %v1029, %v1069
      %1071 = vdwg.mxu0
      %v1072 = vand.u32 %v302, 4294901760
      %v1073 = vsub.f32 %v302, %v1072
      %v1074 = vand.u32 %v1073, 4294901760
      %v1075 = vsub.f32 %v1073, %v1074
      %v1076 = vand.u32 %v1075, 4294901760
      %1077 = vmatpush.msra.mxu0 %v1076
      %v1078 = vand.u32 %v300, 4294901760
      %v1079 = vsub.f32 %v300, %v1078
      %v1080 = vand.u32 %v1079, 4294901760
      %v1081 = vsub.f32 %v1079, %v1080
      %v1082 = vand.u32 %v1081, 4294901760
      %1083 = vmatpush.msra.mxu0 %v1082
      %v1084 = vand.u32 %v298, 4294901760
      %v1085 = vsub.f32 %v298, %v1084
      %v1086 = vand.u32 %v1085, 4294901760
      %v1087 = vsub.f32 %v1085, %v1086
      %v1088 = vand.u32 %v1087, 4294901760
      %1089 = vmatpush.msra.mxu0 %v1088
      %v1090 = vand.u32 %v296, 4294901760
      %v1091 = vsub.f32 %v296, %v1090
      %v1092 = vand.u32 %v1091, 4294901760
      %v1093 = vsub.f32 %v1091, %v1092
      %v1094 = vand.u32 %v1093, 4294901760
      %1095 = vmatpush.msra.mxu0 %v1094
      %v1096 = vand.u32 %v294, 4294901760
      %v1097 = vsub.f32 %v294, %v1096
      %v1098 = vand.u32 %v1097, 4294901760
      %v1099 = vsub.f32 %v1097, %v1098
      %v1100 = vand.u32 %v1099, 4294901760
      %1101 = vmatpush.msra.mxu0 %v1100
      %v1102 = vand.u32 %v292, 4294901760
      %v1103 = vsub.f32 %v292, %v1102
      %v1104 = vand.u32 %v1103, 4294901760
      %v1105 = vsub.f32 %v1103, %v1104
      %v1106 = vand.u32 %v1105, 4294901760
      %1107 = vmatpush.msra.mxu0 %v1106
      %v1108 = vand.u32 %v290, 4294901760
      %v1109 = vsub.f32 %v290, %v1108
      %v1110 = vand.u32 %v1109, 4294901760
      %v1111 = vsub.f32 %v1109, %v1110
      %v1112 = vand.u32 %v1111, 4294901760
      %1113 = vmatpush.msra.mxu0 %v1112
      %v1114 = vand.u32 %v288, 4294901760
      %v1115 = vsub.f32 %v288, %v1114
      %v1116 = vand.u32 %v1115, 4294901760
      %v1117 = vsub.f32 %v1115, %v1116
      %v1118 = vand.u32 %v1117, 4294901760
      %1119 = vmatpush.msra.mxu0 %v1118
      %v1120 = vand.u32 %v286, 4294901760
      %v1121 = vsub.f32 %v286, %v1120
      %v1122 = vand.u32 %v1121, 4294901760
      %v1123 = vsub.f32 %v1121, %v1122
      %v1124 = vand.u32 %v1123, 4294901760
      %1125 = vmatpush.msra.mxu0 %v1124
      %v1126 = vand.u32 %v284, 4294901760
      %v1127 = vsub.f32 %v284, %v1126
      %v1128 = vand.u32 %v1127, 4294901760
      %v1129 = vsub.f32 %v1127, %v1128
      %v1130 = vand.u32 %v1129, 4294901760
      %1131 = vmatpush.msra.mxu0 %v1130
      %v1132 = vand.u32 %v282, 4294901760
      %v1133 = vsub.f32 %v282, %v1132
      %v1134 = vand.u32 %v1133, 4294901760
      %v1135 = vsub.f32 %v1133, %v1134
      %v1136 = vand.u32 %v1135, 4294901760
      %1137 = vmatpush.msra.mxu0 %v1136
      %v1138 = vand.u32 %v280, 4294901760
      %v1139 = vsub.f32 %v280, %v1138
      %v1140 = vand.u32 %v1139, 4294901760
      %v1141 = vsub.f32 %v1139, %v1140
      %v1142 = vand.u32 %v1141, 4294901760
      %1143 = vmatpush.msra.mxu0 %v1142
      %v1144 = vand.u32 %v278, 4294901760
      %v1145 = vsub.f32 %v278, %v1144
      %v1146 = vand.u32 %v1145, 4294901760
      %v1147 = vsub.f32 %v1145, %v1146
      %v1148 = vand.u32 %v1147, 4294901760
      %1149 = vmatpush.msra.mxu0 %v1148
      %v1150 = vand.u32 %v276, 4294901760
      %v1151 = vsub.f32 %v276, %v1150
      %v1152 = vand.u32 %v1151, 4294901760
      %v1153 = vsub.f32 %v1151, %v1152
      %v1154 = vand.u32 %v1153, 4294901760
      %1155 = vmatpush.msra.mxu0 %v1154
      %v1156 = vand.u32 %v274, 4294901760
      %v1157 = vsub.f32 %v274, %v1156
      %v1158 = vand.u32 %v1157, 4294901760
      %v1159 = vsub.f32 %v1157, %v1158
      %v1160 = vand.u32 %v1159, 4294901760
      %1161 = vmatpush.msra.mxu0 %v1160
      %v1162 = vand.u32 %v272, 4294901760
      %v1163 = vsub.f32 %v272, %v1162
      %v1164 = vand.u32 %v1163, 4294901760
      %v1165 = vsub.f32 %v1163, %v1164
      %v1166 = vand.u32 %v1165, 4294901760
      %1167 = vmatpush.msra.mxu0 %v1166
      %v1168 = vand.u32 %v343, 4294901760
      %1169 = vmatmul.f32.gmra.mxu0 %v1168
      %v1170 = vpop.f32.mrf.mxu0
      %v1171 = vadd.f32 %v1070, %v1170
      %1172 = vdwg.mxu0
      %v1173 = vand.u32 %v302, 4294901760
      %v1174 = vsub.f32 %v302, %v1173
      %1175 = vmatpush.msra.mxu0 %v1174
      %v1176 = vand.u32 %v300, 4294901760
      %v1177 = vsub.f32 %v300, %v1176
      %1178 = vmatpush.msra.mxu0 %v1177
      %v1179 = vand.u32 %v298, 4294901760
      %v1180 = vsub.f32 %v298, %v1179
      %1181 = vmatpush.msra.mxu0 %v1180
      %v1182 = vand.u32 %v296, 4294901760
      %v1183 = vsub.f32 %v296, %v1182
      %1184 = vmatpush.msra.mxu0 %v1183
      %v1185 = vand.u32 %v294, 4294901760
      %v1186 = vsub.f32 %v294, %v1185
      %1187 = vmatpush.msra.mxu0 %v1186
      %v1188 = vand.u32 %v292, 4294901760
      %v1189 = vsub.f32 %v292, %v1188
      %1190 = vmatpush.msra.mxu0 %v1189
      %v1191 = vand.u32 %v290, 4294901760
      %v1192 = vsub.f32 %v290, %v1191
      %1193 = vmatpush.msra.mxu0 %v1192
      %v1194 = vand.u32 %v288, 4294901760
      %v1195 = vsub.f32 %v288, %v1194
      %1196 = vmatpush.msra.mxu0 %v1195
      %v1197 = vand.u32 %v286, 4294901760
      %v1198 = vsub.f32 %v286, %v1197
      %1199 = vmatpush.msra.mxu0 %v1198
      %v1200 = vand.u32 %v284, 4294901760
      %v1201 = vsub.f32 %v284, %v1200
      %1202 = vmatpush.msra.mxu0 %v1201
      %v1203 = vand.u32 %v282, 4294901760
      %v1204 = vsub.f32 %v282, %v1203
      %1205 = vmatpush.msra.mxu0 %v1204
      %v1206 = vand.u32 %v280, 4294901760
      %v1207 = vsub.f32 %v280, %v1206
      %1208 = vmatpush.msra.mxu0 %v1207
      %v1209 = vand.u32 %v278, 4294901760
      %v1210 = vsub.f32 %v278, %v1209
      %1211 = vmatpush.msra.mxu0 %v1210
      %v1212 = vand.u32 %v276, 4294901760
      %v1213 = vsub.f32 %v276, %v1212
      %1214 = vmatpush.msra.mxu0 %v1213
      %v1215 = vand.u32 %v274, 4294901760
      %v1216 = vsub.f32 %v274, %v1215
      %1217 = vmatpush.msra.mxu0 %v1216
      %v1218 = vand.u32 %v272, 4294901760
      %v1219 = vsub.f32 %v272, %v1218
      %1220 = vmatpush.msra.mxu0 %v1219
      %v1221 = vand.u32 %v343, 4294901760
      %v1222 = vsub.f32 %v343, %v1221
      %1223 = vmatmul.f32.gmra.mxu0 %v1222
      %v1224 = vpop.f32.mrf.mxu0
      %v1225 = vadd.f32 %v1171, %v1224
      %1226 = vdwg.mxu0
      %v1227 = vand.u32 %v302, 4294901760
      %1228 = vmatpush.msra.mxu0 %v1227
      %v1229 = vand.u32 %v300, 4294901760
      %1230 = vmatpush.msra.mxu0 %v1229
      %v1231 = vand.u32 %v298, 4294901760
      %1232 = vmatpush.msra.mxu0 %v1231
      %v1233 = vand.u32 %v296, 4294901760
      %1234 = vmatpush.msra.mxu0 %v1233
      %v1235 = vand.u32 %v294, 4294901760
      %1236 = vmatpush.msra.mxu0 %v1235
      %v1237 = vand.u32 %v292, 4294901760
      %1238 = vmatpush.msra.mxu0 %v1237
      %v1239 = vand.u32 %v290, 4294901760
      %1240 = vmatpush.msra.mxu0 %v1239
      %v1241 = vand.u32 %v288, 4294901760
      %1242 = vmatpush.msra.mxu0 %v1241
      %v1243 = vand.u32 %v286, 4294901760
      %1244 = vmatpush.msra.mxu0 %v1243
      %v1245 = vand.u32 %v284, 4294901760
      %1246 = vmatpush.msra.mxu0 %v1245
      %v1247 = vand.u32 %v282, 4294901760
      %1248 = vmatpush.msra.mxu0 %v1247
      %v1249 = vand.u32 %v280, 4294901760
      %1250 = vmatpush.msra.mxu0 %v1249
      %v1251 = vand.u32 %v278, 4294901760
      %1252 = vmatpush.msra.mxu0 %v1251
      %v1253 = vand.u32 %v276, 4294901760
      %1254 = vmatpush.msra.mxu0 %v1253
      %v1255 = vand.u32 %v274, 4294901760
      %1256 = vmatpush.msra.mxu0 %v1255
      %v1257 = vand.u32 %v272, 4294901760
      %1258 = vmatpush.msra.mxu0 %v1257
      %v1259 = vand.u32 %v343, 4294901760
      %v1260 = vsub.f32 %v343, %v1259
      %v1261 = vand.u32 %v1260, 4294901760
      %1262 = vmatmul.f32.gmra.mxu0 %v1261
      %v1263 = vpop.f32.mrf.mxu0
      %v1264 = vadd.f32 %v1225, %v1263
      %1265 = vdwg.mxu0
      %v1266 = vand.u32 %v302, 4294901760
      %v1267 = vsub.f32 %v302, %v1266
      %v1268 = vand.u32 %v1267, 4294901760
      %1269 = vmatpush.msra.mxu0 %v1268
      %v1270 = vand.u32 %v300, 4294901760
      %v1271 = vsub.f32 %v300, %v1270
      %v1272 = vand.u32 %v1271, 4294901760
      %1273 = vmatpush.msra.mxu0 %v1272
      %v1274 = vand.u32 %v298, 4294901760
      %v1275 = vsub.f32 %v298, %v1274
      %v1276 = vand.u32 %v1275, 4294901760
      %1277 = vmatpush.msra.mxu0 %v1276
      %v1278 = vand.u32 %v296, 4294901760
      %v1279 = vsub.f32 %v296, %v1278
      %v1280 = vand.u32 %v1279, 4294901760
      %1281 = vmatpush.msra.mxu0 %v1280
      %v1282 = vand.u32 %v294, 4294901760
      %v1283 = vsub.f32 %v294, %v1282
      %v1284 = vand.u32 %v1283, 4294901760
      %1285 = vmatpush.msra.mxu0 %v1284
      %v1286 = vand.u32 %v292, 4294901760
      %v1287 = vsub.f32 %v292, %v1286
      %v1288 = vand.u32 %v1287, 4294901760
      %1289 = vmatpush.msra.mxu0 %v1288
      %v1290 = vand.u32 %v290, 4294901760
      %v1291 = vsub.f32 %v290, %v1290
      %v1292 = vand.u32 %v1291, 4294901760
      %1293 = vmatpush.msra.mxu0 %v1292
      %v1294 = vand.u32 %v288, 4294901760
      %v1295 = vsub.f32 %v288, %v1294
      %v1296 = vand.u32 %v1295, 4294901760
      %1297 = vmatpush.msra.mxu0 %v1296
      %v1298 = vand.u32 %v286, 4294901760
      %v1299 = vsub.f32 %v286, %v1298
      %v1300 = vand.u32 %v1299, 4294901760
      %1301 = vmatpush.msra.mxu0 %v1300
      %v1302 = vand.u32 %v284, 4294901760
      %v1303 = vsub.f32 %v284, %v1302
      %v1304 = vand.u32 %v1303, 4294901760
      %1305 = vmatpush.msra.mxu0 %v1304
      %v1306 = vand.u32 %v282, 4294901760
      %v1307 = vsub.f32 %v282, %v1306
      %v1308 = vand.u32 %v1307, 4294901760
      %1309 = vmatpush.msra.mxu0 %v1308
      %v1310 = vand.u32 %v280, 4294901760
      %v1311 = vsub.f32 %v280, %v1310
      %v1312 = vand.u32 %v1311, 4294901760
      %1313 = vmatpush.msra.mxu0 %v1312
      %v1314 = vand.u32 %v278, 4294901760
      %v1315 = vsub.f32 %v278, %v1314
      %v1316 = vand.u32 %v1315, 4294901760
      %1317 = vmatpush.msra.mxu0 %v1316
      %v1318 = vand.u32 %v276, 4294901760
      %v1319 = vsub.f32 %v276, %v1318
      %v1320 = vand.u32 %v1319, 4294901760
      %1321 = vmatpush.msra.mxu0 %v1320
      %v1322 = vand.u32 %v274, 4294901760
      %v1323 = vsub.f32 %v274, %v1322
      %v1324 = vand.u32 %v1323, 4294901760
      %1325 = vmatpush.msra.mxu0 %v1324
      %v1326 = vand.u32 %v272, 4294901760
      %v1327 = vsub.f32 %v272, %v1326
      %v1328 = vand.u32 %v1327, 4294901760
      %1329 = vmatpush.msra.mxu0 %v1328
      %v1330 = vand.u32 %v343, 4294901760
      %1331 = vmatmul.f32.gmra.mxu0 %v1330
      %v1332 = vpop.f32.mrf.mxu0
      %v1333 = vadd.f32 %v1264, %v1332
      %1334 = vdwg.mxu0
      %v1335 = vand.u32 %v302, 4294901760
      %1336 = vmatpush.msra.mxu0 %v1335
      %v1337 = vand.u32 %v300, 4294901760
      %1338 = vmatpush.msra.mxu0 %v1337
      %v1339 = vand.u32 %v298, 4294901760
      %1340 = vmatpush.msra.mxu0 %v1339
      %v1341 = vand.u32 %v296, 4294901760
      %1342 = vmatpush.msra.mxu0 %v1341
      %v1343 = vand.u32 %v294, 4294901760
      %1344 = vmatpush.msra.mxu0 %v1343
      %v1345 = vand.u32 %v292, 4294901760
      %1346 = vmatpush.msra.mxu0 %v1345
      %v1347 = vand.u32 %v290, 4294901760
      %1348 = vmatpush.msra.mxu0 %v1347
      %v1349 = vand.u32 %v288, 4294901760
      %1350 = vmatpush.msra.mxu0 %v1349
      %v1351 = vand.u32 %v286, 4294901760
      %1352 = vmatpush.msra.mxu0 %v1351
      %v1353 = vand.u32 %v284, 4294901760
      %1354 = vmatpush.msra.mxu0 %v1353
      %v1355 = vand.u32 %v282, 4294901760
      %1356 = vmatpush.msra.mxu0 %v1355
      %v1357 = vand.u32 %v280, 4294901760
      %1358 = vmatpush.msra.mxu0 %v1357
      %v1359 = vand.u32 %v278, 4294901760
      %1360 = vmatpush.msra.mxu0 %v1359
      %v1361 = vand.u32 %v276, 4294901760
      %1362 = vmatpush.msra.mxu0 %v1361
      %v1363 = vand.u32 %v274, 4294901760
      %1364 = vmatpush.msra.mxu0 %v1363
      %v1365 = vand.u32 %v272, 4294901760
      %1366 = vmatpush.msra.mxu0 %v1365
      %v1367 = vand.u32 %v343, 4294901760
      %1368 = vmatmul.f32.gmra.mxu0 %v1367
      %v1369 = vpop.f32.mrf.mxu0
      %v1370 = vadd.f32 %v1333, %v1369
      %1371 = vdwg.mxu0
      %v1372 = vand.u32 %v334, 4294901760
      %1373 = vmatpush.msra.mxu0 %v1372
      %v1374 = vand.u32 %v332, 4294901760
      %1375 = vmatpush.msra.mxu0 %v1374
      %v1376 = vand.u32 %v330, 4294901760
      %1377 = vmatpush.msra.mxu0 %v1376
      %v1378 = vand.u32 %v328, 4294901760
      %1379 = vmatpush.msra.mxu0 %v1378
      %v1380 = vand.u32 %v326, 4294901760
      %1381 = vmatpush.msra.mxu0 %v1380
      %v1382 = vand.u32 %v324, 4294901760
      %1383 = vmatpush.msra.mxu0 %v1382
      %v1384 = vand.u32 %v322, 4294901760
      %1385 = vmatpush.msra.mxu0 %v1384
      %v1386 = vand.u32 %v320, 4294901760
      %1387 = vmatpush.msra.mxu0 %v1386
      %v1388 = vand.u32 %v318, 4294901760
      %1389 = vmatpush.msra.mxu0 %v1388
      %v1390 = vand.u32 %v316, 4294901760
      %1391 = vmatpush.msra.mxu0 %v1390
      %v1392 = vand.u32 %v314, 4294901760
      %1393 = vmatpush.msra.mxu0 %v1392
      %v1394 = vand.u32 %v312, 4294901760
      %1395 = vmatpush.msra.mxu0 %v1394
      %v1396 = vand.u32 %v310, 4294901760
      %1397 = vmatpush.msra.mxu0 %v1396
      %v1398 = vand.u32 %v308, 4294901760
      %1399 = vmatpush.msra.mxu0 %v1398
      %v1400 = vand.u32 %v306, 4294901760
      %1401 = vmatpush.msra.mxu0 %v1400
      %v1402 = vand.u32 %v304, 4294901760
      %1403 = vmatpush.msra.mxu0 %v1402
      %v1404 = vand.u32 %v344, 4294901760
      %v1405 = vsub.f32 %v344, %v1404
      %v1406 = vand.u32 %v1405, 4294901760
      %v1407 = vsub.f32 %v1405, %v1406
      %v1408 = vand.u32 %v1407, 4294901760
      %1409 = vmatmul.f32.gmra.mxu0 %v1408
      %v1410 = vpop.f32.mrf.mxu0
      %v1411 = vadd.f32 %v1370, %v1410
      %1412 = vdwg.mxu0
      %v1413 = vand.u32 %v334, 4294901760
      %v1414 = vsub.f32 %v334, %v1413
      %v1415 = vand.u32 %v1414, 4294901760
      %v1416 = vsub.f32 %v1414, %v1415
      %v1417 = vand.u32 %v1416, 4294901760
      %1418 = vmatpush.msra.mxu0 %v1417
      %v1419 = vand.u32 %v332, 4294901760
      %v1420 = vsub.f32 %v332, %v1419
      %v1421 = vand.u32 %v1420, 4294901760
      %v1422 = vsub.f32 %v1420, %v1421
      %v1423 = vand.u32 %v1422, 4294901760
      %1424 = vmatpush.msra.mxu0 %v1423
      %v1425 = vand.u32 %v330, 4294901760
      %v1426 = vsub.f32 %v330, %v1425
      %v1427 = vand.u32 %v1426, 4294901760
      %v1428 = vsub.f32 %v1426, %v1427
      %v1429 = vand.u32 %v1428, 4294901760
      %1430 = vmatpush.msra.mxu0 %v1429
      %v1431 = vand.u32 %v328, 4294901760
      %v1432 = vsub.f32 %v328, %v1431
      %v1433 = vand.u32 %v1432, 4294901760
      %v1434 = vsub.f32 %v1432, %v1433
      %v1435 = vand.u32 %v1434, 4294901760
      %1436 = vmatpush.msra.mxu0 %v1435
      %v1437 = vand.u32 %v326, 4294901760
      %v1438 = vsub.f32 %v326, %v1437
      %v1439 = vand.u32 %v1438, 4294901760
      %v1440 = vsub.f32 %v1438, %v1439
      %v1441 = vand.u32 %v1440, 4294901760
      %1442 = vmatpush.msra.mxu0 %v1441
      %v1443 = vand.u32 %v324, 4294901760
      %v1444 = vsub.f32 %v324, %v1443
      %v1445 = vand.u32 %v1444, 4294901760
      %v1446 = vsub.f32 %v1444, %v1445
      %v1447 = vand.u32 %v1446, 4294901760
      %1448 = vmatpush.msra.mxu0 %v1447
      %v1449 = vand.u32 %v322, 4294901760
      %v1450 = vsub.f32 %v322, %v1449
      %v1451 = vand.u32 %v1450, 4294901760
      %v1452 = vsub.f32 %v1450, %v1451
      %v1453 = vand.u32 %v1452, 4294901760
      %1454 = vmatpush.msra.mxu0 %v1453
      %v1455 = vand.u32 %v320, 4294901760
      %v1456 = vsub.f32 %v320, %v1455
      %v1457 = vand.u32 %v1456, 4294901760
      %v1458 = vsub.f32 %v1456, %v1457
      %v1459 = vand.u32 %v1458, 4294901760
      %1460 = vmatpush.msra.mxu0 %v1459
      %v1461 = vand.u32 %v318, 4294901760
      %v1462 = vsub.f32 %v318, %v1461
      %v1463 = vand.u32 %v1462, 4294901760
      %v1464 = vsub.f32 %v1462, %v1463
      %v1465 = vand.u32 %v1464, 4294901760
      %1466 = vmatpush.msra.mxu0 %v1465
      %v1467 = vand.u32 %v316, 4294901760
      %v1468 = vsub.f32 %v316, %v1467
      %v1469 = vand.u32 %v1468, 4294901760
      %v1470 = vsub.f32 %v1468, %v1469
      %v1471 = vand.u32 %v1470, 4294901760
      %1472 = vmatpush.msra.mxu0 %v1471
      %v1473 = vand.u32 %v314, 4294901760
      %v1474 = vsub.f32 %v314, %v1473
      %v1475 = vand.u32 %v1474, 4294901760
      %v1476 = vsub.f32 %v1474, %v1475
      %v1477 = vand.u32 %v1476, 4294901760
      %1478 = vmatpush.msra.mxu0 %v1477
      %v1479 = vand.u32 %v312, 4294901760
      %v1480 = vsub.f32 %v312, %v1479
      %v1481 = vand.u32 %v1480, 4294901760
      %v1482 = vsub.f32 %v1480, %v1481
      %v1483 = vand.u32 %v1482, 4294901760
      %1484 = vmatpush.msra.mxu0 %v1483
      %v1485 = vand.u32 %v310, 4294901760
      %v1486 = vsub.f32 %v310, %v1485
      %v1487 = vand.u32 %v1486, 4294901760
      %v1488 = vsub.f32 %v1486, %v1487
      %v1489 = vand.u32 %v1488, 4294901760
      %1490 = vmatpush.msra.mxu0 %v1489
      %v1491 = vand.u32 %v308, 4294901760
      %v1492 = vsub.f32 %v308, %v1491
      %v1493 = vand.u32 %v1492, 4294901760
      %v1494 = vsub.f32 %v1492, %v1493
      %v1495 = vand.u32 %v1494, 4294901760
      %1496 = vmatpush.msra.mxu0 %v1495
      %v1497 = vand.u32 %v306, 4294901760
      %v1498 = vsub.f32 %v306, %v1497
      %v1499 = vand.u32 %v1498, 4294901760
      %v1500 = vsub.f32 %v1498, %v1499
      %v1501 = vand.u32 %v1500, 4294901760
      %1502 = vmatpush.msra.mxu0 %v1501
      %v1503 = vand.u32 %v304, 4294901760
      %v1504 = vsub.f32 %v304, %v1503
      %v1505 = vand.u32 %v1504, 4294901760
      %v1506 = vsub.f32 %v1504, %v1505
      %v1507 = vand.u32 %v1506, 4294901760
      %1508 = vmatpush.msra.mxu0 %v1507
      %v1509 = vand.u32 %v344, 4294901760
      %1510 = vmatmul.f32.gmra.mxu0 %v1509
      %v1511 = vpop.f32.mrf.mxu0
      %v1512 = vadd.f32 %v1411, %v1511
      %1513 = vdwg.mxu0
      %v1514 = vand.u32 %v334, 4294901760
      %v1515 = vsub.f32 %v334, %v1514
      %1516 = vmatpush.msra.mxu0 %v1515
      %v1517 = vand.u32 %v332, 4294901760
      %v1518 = vsub.f32 %v332, %v1517
      %1519 = vmatpush.msra.mxu0 %v1518
      %v1520 = vand.u32 %v330, 4294901760
      %v1521 = vsub.f32 %v330, %v1520
      %1522 = vmatpush.msra.mxu0 %v1521
      %v1523 = vand.u32 %v328, 4294901760
      %v1524 = vsub.f32 %v328, %v1523
      %1525 = vmatpush.msra.mxu0 %v1524
      %v1526 = vand.u32 %v326, 4294901760
      %v1527 = vsub.f32 %v326, %v1526
      %1528 = vmatpush.msra.mxu0 %v1527
      %v1529 = vand.u32 %v324, 4294901760
      %v1530 = vsub.f32 %v324, %v1529
      %1531 = vmatpush.msra.mxu0 %v1530
      %v1532 = vand.u32 %v322, 4294901760
      %v1533 = vsub.f32 %v322, %v1532
      %1534 = vmatpush.msra.mxu0 %v1533
      %v1535 = vand.u32 %v320, 4294901760
      %v1536 = vsub.f32 %v320, %v1535
      %1537 = vmatpush.msra.mxu0 %v1536
      %v1538 = vand.u32 %v318, 4294901760
      %v1539 = vsub.f32 %v318, %v1538
      %1540 = vmatpush.msra.mxu0 %v1539
      %v1541 = vand.u32 %v316, 4294901760
      %v1542 = vsub.f32 %v316, %v1541
      %1543 = vmatpush.msra.mxu0 %v1542
      %v1544 = vand.u32 %v314, 4294901760
      %v1545 = vsub.f32 %v314, %v1544
      %1546 = vmatpush.msra.mxu0 %v1545
      %v1547 = vand.u32 %v312, 4294901760
      %v1548 = vsub.f32 %v312, %v1547
      %1549 = vmatpush.msra.mxu0 %v1548
      %v1550 = vand.u32 %v310, 4294901760
      %v1551 = vsub.f32 %v310, %v1550
      %1552 = vmatpush.msra.mxu0 %v1551
      %v1553 = vand.u32 %v308, 4294901760
      %v1554 = vsub.f32 %v308, %v1553
      %1555 = vmatpush.msra.mxu0 %v1554
      %v1556 = vand.u32 %v306, 4294901760
      %v1557 = vsub.f32 %v306, %v1556
      %1558 = vmatpush.msra.mxu0 %v1557
      %v1559 = vand.u32 %v304, 4294901760
      %v1560 = vsub.f32 %v304, %v1559
      %1561 = vmatpush.msra.mxu0 %v1560
      %v1562 = vand.u32 %v344, 4294901760
      %v1563 = vsub.f32 %v344, %v1562
      %1564 = vmatmul.f32.gmra.mxu0 %v1563
      %v1565 = vpop.f32.mrf.mxu0
      %v1566 = vadd.f32 %v1512, %v1565
      %1567 = vdwg.mxu0
      %v1568 = vand.u32 %v334, 4294901760
      %1569 = vmatpush.msra.mxu0 %v1568
      %v1570 = vand.u32 %v332, 4294901760
      %1571 = vmatpush.msra.mxu0 %v1570
      %v1572 = vand.u32 %v330, 4294901760
      %1573 = vmatpush.msra.mxu0 %v1572
      %v1574 = vand.u32 %v328, 4294901760
      %1575 = vmatpush.msra.mxu0 %v1574
      %v1576 = vand.u32 %v326, 4294901760
      %1577 = vmatpush.msra.mxu0 %v1576
      %v1578 = vand.u32 %v324, 4294901760
      %1579 = vmatpush.msra.mxu0 %v1578
      %v1580 = vand.u32 %v322, 4294901760
      %1581 = vmatpush.msra.mxu0 %v1580
      %v1582 = vand.u32 %v320, 4294901760
      %1583 = vmatpush.msra.mxu0 %v1582
      %v1584 = vand.u32 %v318, 4294901760
      %1585 = vmatpush.msra.mxu0 %v1584
      %v1586 = vand.u32 %v316, 4294901760
      %1587 = vmatpush.msra.mxu0 %v1586
      %v1588 = vand.u32 %v314, 4294901760
      %1589 = vmatpush.msra.mxu0 %v1588
      %v1590 = vand.u32 %v312, 4294901760
      %1591 = vmatpush.msra.mxu0 %v1590
      %v1592 = vand.u32 %v310, 4294901760
      %1593 = vmatpush.msra.mxu0 %v1592
      %v1594 = vand.u32 %v308, 4294901760
      %1595 = vmatpush.msra.mxu0 %v1594
      %v1596 = vand.u32 %v306, 4294901760
      %1597 = vmatpush.msra.mxu0 %v1596
      %v1598 = vand.u32 %v304, 4294901760
      %1599 = vmatpush.msra.mxu0 %v1598
      %v1600 = vand.u32 %v344, 4294901760
      %v1601 = vsub.f32 %v344, %v1600
      %v1602 = vand.u32 %v1601, 4294901760
      %1603 = vmatmul.f32.gmra.mxu0 %v1602
      %v1604 = vpop.f32.mrf.mxu0
      %v1605 = vadd.f32 %v1566, %v1604
      %1606 = vdwg.mxu0
      %v1607 = vand.u32 %v334, 4294901760
      %v1608 = vsub.f32 %v334, %v1607
      %v1609 = vand.u32 %v1608, 4294901760
      %1610 = vmatpush.msra.mxu0 %v1609
      %v1611 = vand.u32 %v332, 4294901760
      %v1612 = vsub.f32 %v332, %v1611
      %v1613 = vand.u32 %v1612, 4294901760
      %1614 = vmatpush.msra.mxu0 %v1613
      %v1615 = vand.u32 %v330, 4294901760
      %v1616 = vsub.f32 %v330, %v1615
      %v1617 = vand.u32 %v1616, 4294901760
      %1618 = vmatpush.msra.mxu0 %v1617
      %v1619 = vand.u32 %v328, 4294901760
      %v1620 = vsub.f32 %v328, %v1619
      %v1621 = vand.u32 %v1620, 4294901760
      %1622 = vmatpush.msra.mxu0 %v1621
      %v1623 = vand.u32 %v326, 4294901760
      %v1624 = vsub.f32 %v326, %v1623
      %v1625 = vand.u32 %v1624, 4294901760
      %1626 = vmatpush.msra.mxu0 %v1625
      %v1627 = vand.u32 %v324, 4294901760
      %v1628 = vsub.f32 %v324, %v1627
      %v1629 = vand.u32 %v1628, 4294901760
      %1630 = vmatpush.msra.mxu0 %v1629
      %v1631 = vand.u32 %v322, 4294901760
      %v1632 = vsub.f32 %v322, %v1631
      %v1633 = vand.u32 %v1632, 4294901760
      %1634 = vmatpush.msra.mxu0 %v1633
      %v1635 = vand.u32 %v320, 4294901760
      %v1636 = vsub.f32 %v320, %v1635
      %v1637 = vand.u32 %v1636, 4294901760
      %1638 = vmatpush.msra.mxu0 %v1637
      %v1639 = vand.u32 %v318, 4294901760
      %v1640 = vsub.f32 %v318, %v1639
      %v1641 = vand.u32 %v1640, 4294901760
      %1642 = vmatpush.msra.mxu0 %v1641
      %v1643 = vand.u32 %v316, 4294901760
      %v1644 = vsub.f32 %v316, %v1643
      %v1645 = vand.u32 %v1644, 4294901760
      %1646 = vmatpush.msra.mxu0 %v1645
      %v1647 = vand.u32 %v314, 4294901760
      %v1648 = vsub.f32 %v314, %v1647
      %v1649 = vand.u32 %v1648, 4294901760
      %1650 = vmatpush.msra.mxu0 %v1649
      %v1651 = vand.u32 %v312, 4294901760
      %v1652 = vsub.f32 %v312, %v1651
      %v1653 = vand.u32 %v1652, 4294901760
      %1654 = vmatpush.msra.mxu0 %v1653
      %v1655 = vand.u32 %v310, 4294901760
      %v1656 = vsub.f32 %v310, %v1655
      %v1657 = vand.u32 %v1656, 4294901760
      %1658 = vmatpush.msra.mxu0 %v1657
      %v1659 = vand.u32 %v308, 4294901760
      %v1660 = vsub.f32 %v308, %v1659
      %v1661 = vand.u32 %v1660, 4294901760
      %1662 = vmatpush.msra.mxu0 %v1661
      %v1663 = vand.u32 %v306, 4294901760
      %v1664 = vsub.f32 %v306, %v1663
      %v1665 = vand.u32 %v1664, 4294901760
      %1666 = vmatpush.msra.mxu0 %v1665
      %v1667 = vand.u32 %v304, 4294901760
      %v1668 = vsub.f32 %v304, %v1667
      %v1669 = vand.u32 %v1668, 4294901760
      %1670 = vmatpush.msra.mxu0 %v1669
      %v1671 = vand.u32 %v344, 4294901760
      %1672 = vmatmul.f32.gmra.mxu0 %v1671
      %v1673 = vpop.f32.mrf.mxu0
      %v1674 = vadd.f32 %v1605, %v1673
      %1675 = vdwg.mxu0
      %v1676 = vand.u32 %v334, 4294901760
      %1677 = vmatpush.msra.mxu0 %v1676
      %v1678 = vand.u32 %v332, 4294901760
      %1679 = vmatpush.msra.mxu0 %v1678
      %v1680 = vand.u32 %v330, 4294901760
      %1681 = vmatpush.msra.mxu0 %v1680
      %v1682 = vand.u32 %v328, 4294901760
      %1683 = vmatpush.msra.mxu0 %v1682
      %v1684 = vand.u32 %v326, 4294901760
      %1685 = vmatpush.msra.mxu0 %v1684
      %v1686 = vand.u32 %v324, 4294901760
      %1687 = vmatpush.msra.mxu0 %v1686
      %v1688 = vand.u32 %v322, 4294901760
      %1689 = vmatpush.msra.mxu0 %v1688
      %v1690 = vand.u32 %v320, 4294901760
      %1691 = vmatpush.msra.mxu0 %v1690
      %v1692 = vand.u32 %v318, 4294901760
      %1693 = vmatpush.msra.mxu0 %v1692
      %v1694 = vand.u32 %v316, 4294901760
      %1695 = vmatpush.msra.mxu0 %v1694
      %v1696 = vand.u32 %v314, 4294901760
      %1697 = vmatpush.msra.mxu0 %v1696
      %v1698 = vand.u32 %v312, 4294901760
      %1699 = vmatpush.msra.mxu0 %v1698
      %v1700 = vand.u32 %v310, 4294901760
      %1701 = vmatpush.msra.mxu0 %v1700
      %v1702 = vand.u32 %v308, 4294901760
      %1703 = vmatpush.msra.mxu0 %v1702
      %v1704 = vand.u32 %v306, 4294901760
      %1705 = vmatpush.msra.mxu0 %v1704
      %v1706 = vand.u32 %v304, 4294901760
      %1707 = vmatpush.msra.mxu0 %v1706
      %v1708 = vand.u32 %v344, 4294901760
      %1709 = vmatmul.f32.gmra.mxu0 %v1708
      %v1710 = vpop.f32.mrf.mxu0
      %v1711 = vadd.f32 %v1674, %v1710
      %1712 = vdwg.mxu0
      %v1713 = vand.u32 %v239, 4294901760
      %1714 = vmatpush.msra.mxu0 %v1713
      %v1715 = vand.u32 %v237, 4294901760
      %1716 = vmatpush.msra.mxu0 %v1715
      %v1717 = vand.u32 %v235, 4294901760
      %1718 = vmatpush.msra.mxu0 %v1717
      %v1719 = vand.u32 %v233, 4294901760
      %1720 = vmatpush.msra.mxu0 %v1719
      %v1721 = vand.u32 %v231, 4294901760
      %1722 = vmatpush.msra.mxu0 %v1721
      %v1723 = vand.u32 %v229, 4294901760
      %1724 = vmatpush.msra.mxu0 %v1723
      %v1725 = vand.u32 %v227, 4294901760
      %1726 = vmatpush.msra.mxu0 %v1725
      %v1727 = vand.u32 %v225, 4294901760
      %1728 = vmatpush.msra.mxu0 %v1727
      %v1729 = vand.u32 %v223, 4294901760
      %1730 = vmatpush.msra.mxu0 %v1729
      %v1731 = vand.u32 %v221, 4294901760
      %1732 = vmatpush.msra.mxu0 %v1731
      %v1733 = vand.u32 %v219, 4294901760
      %1734 = vmatpush.msra.mxu0 %v1733
      %v1735 = vand.u32 %v217, 4294901760
      %1736 = vmatpush.msra.mxu0 %v1735
      %v1737 = vand.u32 %v215, 4294901760
      %1738 = vmatpush.msra.mxu0 %v1737
      %v1739 = vand.u32 %v213, 4294901760
      %1740 = vmatpush.msra.mxu0 %v1739
      %v1741 = vand.u32 %v211, 4294901760
      %1742 = vmatpush.msra.mxu0 %v1741
      %v1743 = vand.u32 %v209, 4294901760
      %1744 = vmatpush.msra.mxu0 %v1743
      %v1745 = vand.u32 %v341, 4294901760
      %v1746 = vsub.f32 %v341, %v1745
      %v1747 = vand.u32 %v1746, 4294901760
      %v1748 = vsub.f32 %v1746, %v1747
      %v1749 = vand.u32 %v1748, 4294901760
      %1750 = vmatmul.f32.gmra.mxu0 %v1749
      %v1751 = vpop.f32.mrf.mxu0
      %v1752 = vadd.f32 0.0, %v1751
      %1753 = vdwg.mxu0
      %v1754 = vand.u32 %v239, 4294901760
      %v1755 = vsub.f32 %v239, %v1754
      %v1756 = vand.u32 %v1755, 4294901760
      %v1757 = vsub.f32 %v1755, %v1756
      %v1758 = vand.u32 %v1757, 4294901760
      %1759 = vmatpush.msra.mxu0 %v1758
      %v1760 = vand.u32 %v237, 4294901760
      %v1761 = vsub.f32 %v237, %v1760
      %v1762 = vand.u32 %v1761, 4294901760
      %v1763 = vsub.f32 %v1761, %v1762
      %v1764 = vand.u32 %v1763, 4294901760
      %1765 = vmatpush.msra.mxu0 %v1764
      %v1766 = vand.u32 %v235, 4294901760
      %v1767 = vsub.f32 %v235, %v1766
      %v1768 = vand.u32 %v1767, 4294901760
      %v1769 = vsub.f32 %v1767, %v1768
      %v1770 = vand.u32 %v1769, 4294901760
      %1771 = vmatpush.msra.mxu0 %v1770
      %v1772 = vand.u32 %v233, 4294901760
      %v1773 = vsub.f32 %v233, %v1772
      %v1774 = vand.u32 %v1773, 4294901760
      %v1775 = vsub.f32 %v1773, %v1774
      %v1776 = vand.u32 %v1775, 4294901760
      %1777 = vmatpush.msra.mxu0 %v1776
      %v1778 = vand.u32 %v231, 4294901760
      %v1779 = vsub.f32 %v231, %v1778
      %v1780 = vand.u32 %v1779, 4294901760
      %v1781 = vsub.f32 %v1779, %v1780
      %v1782 = vand.u32 %v1781, 4294901760
      %1783 = vmatpush.msra.mxu0 %v1782
      %v1784 = vand.u32 %v229, 4294901760
      %v1785 = vsub.f32 %v229, %v1784
      %v1786 = vand.u32 %v1785, 4294901760
      %v1787 = vsub.f32 %v1785, %v1786
      %v1788 = vand.u32 %v1787, 4294901760
      %1789 = vmatpush.msra.mxu0 %v1788
      %v1790 = vand.u32 %v227, 4294901760
      %v1791 = vsub.f32 %v227, %v1790
      %v1792 = vand.u32 %v1791, 4294901760
      %v1793 = vsub.f32 %v1791, %v1792
      %v1794 = vand.u32 %v1793, 4294901760
      %1795 = vmatpush.msra.mxu0 %v1794
      %v1796 = vand.u32 %v225, 4294901760
      %v1797 = vsub.f32 %v225, %v1796
      %v1798 = vand.u32 %v1797, 4294901760
      %v1799 = vsub.f32 %v1797, %v1798
      %v1800 = vand.u32 %v1799, 4294901760
      %1801 = vmatpush.msra.mxu0 %v1800
      %v1802 = vand.u32 %v223, 4294901760
      %v1803 = vsub.f32 %v223, %v1802
      %v1804 = vand.u32 %v1803, 4294901760
      %v1805 = vsub.f32 %v1803, %v1804
      %v1806 = vand.u32 %v1805, 4294901760
      %1807 = vmatpush.msra.mxu0 %v1806
      %v1808 = vand.u32 %v221, 4294901760
      %v1809 = vsub.f32 %v221, %v1808
      %v1810 = vand.u32 %v1809, 4294901760
      %v1811 = vsub.f32 %v1809, %v1810
      %v1812 = vand.u32 %v1811, 4294901760
      %1813 = vmatpush.msra.mxu0 %v1812
      %v1814 = vand.u32 %v219, 4294901760
      %v1815 = vsub.f32 %v219, %v1814
      %v1816 = vand.u32 %v1815, 4294901760
      %v1817 = vsub.f32 %v1815, %v1816
      %v1818 = vand.u32 %v1817, 4294901760
      %1819 = vmatpush.msra.mxu0 %v1818
      %v1820 = vand.u32 %v217, 4294901760
      %v1821 = vsub.f32 %v217, %v1820
      %v1822 = vand.u32 %v1821, 4294901760
      %v1823 = vsub.f32 %v1821, %v1822
      %v1824 = vand.u32 %v1823, 4294901760
      %1825 = vmatpush.msra.mxu0 %v1824
      %v1826 = vand.u32 %v215, 4294901760
      %v1827 = vsub.f32 %v215, %v1826
      %v1828 = vand.u32 %v1827, 4294901760
      %v1829 = vsub.f32 %v1827, %v1828
      %v1830 = vand.u32 %v1829, 4294901760
      %1831 = vmatpush.msra.mxu0 %v1830
      %v1832 = vand.u32 %v213, 4294901760
      %v1833 = vsub.f32 %v213, %v1832
      %v1834 = vand.u32 %v1833, 4294901760
      %v1835 = vsub.f32 %v1833, %v1834
      %v1836 = vand.u32 %v1835, 4294901760
      %1837 = vmatpush.msra.mxu0 %v1836
      %v1838 = vand.u32 %v211, 4294901760
      %v1839 = vsub.f32 %v211, %v1838
      %v1840 = vand.u32 %v1839, 4294901760
      %v1841 = vsub.f32 %v1839, %v1840
      %v1842 = vand.u32 %v1841, 4294901760
      %1843 = vmatpush.msra.mxu0 %v1842
      %v1844 = vand.u32 %v209, 4294901760
      %v1845 = vsub.f32 %v209, %v1844
      %v1846 = vand.u32 %v1845, 4294901760
      %v1847 = vsub.f32 %v1845, %v1846
      %v1848 = vand.u32 %v1847, 4294901760
      %1849 = vmatpush.msra.mxu0 %v1848
      %v1850 = vand.u32 %v341, 4294901760
      %1851 = vmatmul.f32.gmra.mxu0 %v1850
      %v1852 = vpop.f32.mrf.mxu0
      %v1853 = vadd.f32 %v1752, %v1852
      %1854 = vdwg.mxu0
      %v1855 = vand.u32 %v239, 4294901760
      %v1856 = vsub.f32 %v239, %v1855
      %1857 = vmatpush.msra.mxu0 %v1856
      %v1858 = vand.u32 %v237, 4294901760
      %v1859 = vsub.f32 %v237, %v1858
      %1860 = vmatpush.msra.mxu0 %v1859
      %v1861 = vand.u32 %v235, 4294901760
      %v1862 = vsub.f32 %v235, %v1861
      %1863 = vmatpush.msra.mxu0 %v1862
      %v1864 = vand.u32 %v233, 4294901760
      %v1865 = vsub.f32 %v233, %v1864
      %1866 = vmatpush.msra.mxu0 %v1865
      %v1867 = vand.u32 %v231, 4294901760
      %v1868 = vsub.f32 %v231, %v1867
      %1869 = vmatpush.msra.mxu0 %v1868
      %v1870 = vand.u32 %v229, 4294901760
      %v1871 = vsub.f32 %v229, %v1870
      %1872 = vmatpush.msra.mxu0 %v1871
      %v1873 = vand.u32 %v227, 4294901760
      %v1874 = vsub.f32 %v227, %v1873
      %1875 = vmatpush.msra.mxu0 %v1874
      %v1876 = vand.u32 %v225, 4294901760
      %v1877 = vsub.f32 %v225, %v1876
      %1878 = vmatpush.msra.mxu0 %v1877
      %v1879 = vand.u32 %v223, 4294901760
      %v1880 = vsub.f32 %v223, %v1879
      %1881 = vmatpush.msra.mxu0 %v1880
      %v1882 = vand.u32 %v221, 4294901760
      %v1883 = vsub.f32 %v221, %v1882
      %1884 = vmatpush.msra.mxu0 %v1883
      %v1885 = vand.u32 %v219, 4294901760
      %v1886 = vsub.f32 %v219, %v1885
      %1887 = vmatpush.msra.mxu0 %v1886
      %v1888 = vand.u32 %v217, 4294901760
      %v1889 = vsub.f32 %v217, %v1888
      %1890 = vmatpush.msra.mxu0 %v1889
      %v1891 = vand.u32 %v215, 4294901760
      %v1892 = vsub.f32 %v215, %v1891
      %1893 = vmatpush.msra.mxu0 %v1892
      %v1894 = vand.u32 %v213, 4294901760
      %v1895 = vsub.f32 %v213, %v1894
      %1896 = vmatpush.msra.mxu0 %v1895
      %v1897 = vand.u32 %v211, 4294901760
      %v1898 = vsub.f32 %v211, %v1897
      %1899 = vmatpush.msra.mxu0 %v1898
      %v1900 = vand.u32 %v209, 4294901760
      %v1901 = vsub.f32 %v209, %v1900
      %1902 = vmatpush.msra.mxu0 %v1901
      %v1903 = vand.u32 %v341, 4294901760
      %v1904 = vsub.f32 %v341, %v1903
      %1905 = vmatmul.f32.gmra.mxu0 %v1904
      %v1906 = vpop.f32.mrf.mxu0
      %v1907 = vadd.f32 %v1853, %v1906
      %1908 = vdwg.mxu0
      %v1909 = vand.u32 %v239, 4294901760
      %1910 = vmatpush.msra.mxu0 %v1909
      %v1911 = vand.u32 %v237, 4294901760
      %1912 = vmatpush.msra.mxu0 %v1911
      %v1913 = vand.u32 %v235, 4294901760
      %1914 = vmatpush.msra.mxu0 %v1913
      %v1915 = vand.u32 %v233, 4294901760
      %1916 = vmatpush.msra.mxu0 %v1915
      %v1917 = vand.u32 %v231, 4294901760
      %1918 = vmatpush.msra.mxu0 %v1917
      %v1919 = vand.u32 %v229, 4294901760
      %1920 = vmatpush.msra.mxu0 %v1919
      %v1921 = vand.u32 %v227, 4294901760
      %1922 = vmatpush.msra.mxu0 %v1921
      %v1923 = vand.u32 %v225, 4294901760
      %1924 = vmatpush.msra.mxu0 %v1923
      %v1925 = vand.u32 %v223, 4294901760
      %1926 = vmatpush.msra.mxu0 %v1925
      %v1927 = vand.u32 %v221, 4294901760
      %1928 = vmatpush.msra.mxu0 %v1927
      %v1929 = vand.u32 %v219, 4294901760
      %1930 = vmatpush.msra.mxu0 %v1929
      %v1931 = vand.u32 %v217, 4294901760
      %1932 = vmatpush.msra.mxu0 %v1931
      %v1933 = vand.u32 %v215, 4294901760
      %1934 = vmatpush.msra.mxu0 %v1933
      %v1935 = vand.u32 %v213, 4294901760
      %1936 = vmatpush.msra.mxu0 %v1935
      %v1937 = vand.u32 %v211, 4294901760
      %1938 = vmatpush.msra.mxu0 %v1937
      %v1939 = vand.u32 %v209, 4294901760
      %1940 = vmatpush.msra.mxu0 %v1939
      %v1941 = vand.u32 %v341, 4294901760
      %v1942 = vsub.f32 %v341, %v1941
      %v1943 = vand.u32 %v1942, 4294901760
      %1944 = vmatmul.f32.gmra.mxu0 %v1943
      %v1945 = vpop.f32.mrf.mxu0
      %v1946 = vadd.f32 %v1907, %v1945
      %1947 = vdwg.mxu0
      %v1948 = vand.u32 %v239, 4294901760
      %v1949 = vsub.f32 %v239, %v1948
      %v1950 = vand.u32 %v1949, 4294901760
      %1951 = vmatpush.msra.mxu0 %v1950
      %v1952 = vand.u32 %v237, 4294901760
      %v1953 = vsub.f32 %v237, %v1952
      %v1954 = vand.u32 %v1953, 4294901760
      %1955 = vmatpush.msra.mxu0 %v1954
      %v1956 = vand.u32 %v235, 4294901760
      %v1957 = vsub.f32 %v235, %v1956
      %v1958 = vand.u32 %v1957, 4294901760
      %1959 = vmatpush.msra.mxu0 %v1958
      %v1960 = vand.u32 %v233, 4294901760
      %v1961 = vsub.f32 %v233, %v1960
      %v1962 = vand.u32 %v1961, 4294901760
      %1963 = vmatpush.msra.mxu0 %v1962
      %v1964 = vand.u32 %v231, 4294901760
      %v1965 = vsub.f32 %v231, %v1964
      %v1966 = vand.u32 %v1965, 4294901760
      %1967 = vmatpush.msra.mxu0 %v1966
      %v1968 = vand.u32 %v229, 4294901760
      %v1969 = vsub.f32 %v229, %v1968
      %v1970 = vand.u32 %v1969, 4294901760
      %1971 = vmatpush.msra.mxu0 %v1970
      %v1972 = vand.u32 %v227, 4294901760
      %v1973 = vsub.f32 %v227, %v1972
      %v1974 = vand.u32 %v1973, 4294901760
      %1975 = vmatpush.msra.mxu0 %v1974
      %v1976 = vand.u32 %v225, 4294901760
      %v1977 = vsub.f32 %v225, %v1976
      %v1978 = vand.u32 %v1977, 4294901760
      %1979 = vmatpush.msra.mxu0 %v1978
      %v1980 = vand.u32 %v223, 4294901760
      %v1981 = vsub.f32 %v223, %v1980
      %v1982 = vand.u32 %v1981, 4294901760
      %1983 = vmatpush.msra.mxu0 %v1982
      %v1984 = vand.u32 %v221, 4294901760
      %v1985 = vsub.f32 %v221, %v1984
      %v1986 = vand.u32 %v1985, 4294901760
      %1987 = vmatpush.msra.mxu0 %v1986
      %v1988 = vand.u32 %v219, 4294901760
      %v1989 = vsub.f32 %v219, %v1988
      %v1990 = vand.u32 %v1989, 4294901760
      %1991 = vmatpush.msra.mxu0 %v1990
      %v1992 = vand.u32 %v217, 4294901760
      %v1993 = vsub.f32 %v217, %v1992
      %v1994 = vand.u32 %v1993, 4294901760
      %1995 = vmatpush.msra.mxu0 %v1994
      %v1996 = vand.u32 %v215, 4294901760
      %v1997 = vsub.f32 %v215, %v1996
      %v1998 = vand.u32 %v1997, 4294901760
      %1999 = vmatpush.msra.mxu0 %v1998
      %v2000 = vand.u32 %v213, 4294901760
      %v2001 = vsub.f32 %v213, %v2000
      %v2002 = vand.u32 %v2001, 4294901760
      %2003 = vmatpush.msra.mxu0 %v2002
      %v2004 = vand.u32 %v211, 4294901760
      %v2005 = vsub.f32 %v211, %v2004
      %v2006 = vand.u32 %v2005, 4294901760
      %2007 = vmatpush.msra.mxu0 %v2006
      %v2008 = vand.u32 %v209, 4294901760
      %v2009 = vsub.f32 %v209, %v2008
      %v2010 = vand.u32 %v2009, 4294901760
      %2011 = vmatpush.msra.mxu0 %v2010
      %v2012 = vand.u32 %v341, 4294901760
      %2013 = vmatmul.f32.gmra.mxu0 %v2012
      %v2014 = vpop.f32.mrf.mxu0
      %v2015 = vadd.f32 %v1946, %v2014
      %2016 = vdwg.mxu0
      %v2017 = vand.u32 %v239, 4294901760
      %2018 = vmatpush.msra.mxu0 %v2017
      %v2019 = vand.u32 %v237, 4294901760
      %2020 = vmatpush.msra.mxu0 %v2019
      %v2021 = vand.u32 %v235, 4294901760
      %2022 = vmatpush.msra.mxu0 %v2021
      %v2023 = vand.u32 %v233, 4294901760
      %2024 = vmatpush.msra.mxu0 %v2023
      %v2025 = vand.u32 %v231, 4294901760
      %2026 = vmatpush.msra.mxu0 %v2025
      %v2027 = vand.u32 %v229, 4294901760
      %2028 = vmatpush.msra.mxu0 %v2027
      %v2029 = vand.u32 %v227, 4294901760
      %2030 = vmatpush.msra.mxu0 %v2029
      %v2031 = vand.u32 %v225, 4294901760
      %2032 = vmatpush.msra.mxu0 %v2031
      %v2033 = vand.u32 %v223, 4294901760
      %2034 = vmatpush.msra.mxu0 %v2033
      %v2035 = vand.u32 %v221, 4294901760
      %2036 = vmatpush.msra.mxu0 %v2035
      %v2037 = vand.u32 %v219, 4294901760
      %2038 = vmatpush.msra.mxu0 %v2037
      %v2039 = vand.u32 %v217, 4294901760
      %2040 = vmatpush.msra.mxu0 %v2039
      %v2041 = vand.u32 %v215, 4294901760
      %2042 = vmatpush.msra.mxu0 %v2041
      %v2043 = vand.u32 %v213, 4294901760
      %2044 = vmatpush.msra.mxu0 %v2043
      %v2045 = vand.u32 %v211, 4294901760
      %2046 = vmatpush.msra.mxu0 %v2045
      %v2047 = vand.u32 %v209, 4294901760
      %2048 = vmatpush.msra.mxu0 %v2047
      %v2049 = vand.u32 %v341, 4294901760
      %2050 = vmatmul.f32.gmra.mxu0 %v2049
      %v2051 = vpop.f32.mrf.mxu0
      %v2052 = vadd.f32 %v2015, %v2051
      %2053 = vdwg.mxu0
      %v2054 = vand.u32 %v271, 4294901760
      %2055 = vmatpush.msra.mxu0 %v2054
      %v2056 = vand.u32 %v269, 4294901760
      %2057 = vmatpush.msra.mxu0 %v2056
      %v2058 = vand.u32 %v267, 4294901760
      %2059 = vmatpush.msra.mxu0 %v2058
      %v2060 = vand.u32 %v265, 4294901760
      %2061 = vmatpush.msra.mxu0 %v2060
      %v2062 = vand.u32 %v263, 4294901760
      %2063 = vmatpush.msra.mxu0 %v2062
      %v2064 = vand.u32 %v261, 4294901760
      %2065 = vmatpush.msra.mxu0 %v2064
      %v2066 = vand.u32 %v259, 4294901760
      %2067 = vmatpush.msra.mxu0 %v2066
      %v2068 = vand.u32 %v257, 4294901760
      %2069 = vmatpush.msra.mxu0 %v2068
      %v2070 = vand.u32 %v255, 4294901760
      %2071 = vmatpush.msra.mxu0 %v2070
      %v2072 = vand.u32 %v253, 4294901760
      %2073 = vmatpush.msra.mxu0 %v2072
      %v2074 = vand.u32 %v251, 4294901760
      %2075 = vmatpush.msra.mxu0 %v2074
      %v2076 = vand.u32 %v249, 4294901760
      %2077 = vmatpush.msra.mxu0 %v2076
      %v2078 = vand.u32 %v247, 4294901760
      %2079 = vmatpush.msra.mxu0 %v2078
      %v2080 = vand.u32 %v245, 4294901760
      %2081 = vmatpush.msra.mxu0 %v2080
      %v2082 = vand.u32 %v243, 4294901760
      %2083 = vmatpush.msra.mxu0 %v2082
      %v2084 = vand.u32 %v241, 4294901760
      %2085 = vmatpush.msra.mxu0 %v2084
      %v2086 = vand.u32 %v342, 4294901760
      %v2087 = vsub.f32 %v342, %v2086
      %v2088 = vand.u32 %v2087, 4294901760
      %v2089 = vsub.f32 %v2087, %v2088
      %v2090 = vand.u32 %v2089, 4294901760
      %2091 = vmatmul.f32.gmra.mxu0 %v2090
      %v2092 = vpop.f32.mrf.mxu0
      %v2093 = vadd.f32 %v2052, %v2092
      %2094 = vdwg.mxu0
      %v2095 = vand.u32 %v271, 4294901760
      %v2096 = vsub.f32 %v271, %v2095
      %v2097 = vand.u32 %v2096, 4294901760
      %v2098 = vsub.f32 %v2096, %v2097
      %v2099 = vand.u32 %v2098, 4294901760
      %2100 = vmatpush.msra.mxu0 %v2099
      %v2101 = vand.u32 %v269, 4294901760
      %v2102 = vsub.f32 %v269, %v2101
      %v2103 = vand.u32 %v2102, 4294901760
      %v2104 = vsub.f32 %v2102, %v2103
      %v2105 = vand.u32 %v2104, 4294901760
      %2106 = vmatpush.msra.mxu0 %v2105
      %v2107 = vand.u32 %v267, 4294901760
      %v2108 = vsub.f32 %v267, %v2107
      %v2109 = vand.u32 %v2108, 4294901760
      %v2110 = vsub.f32 %v2108, %v2109
      %v2111 = vand.u32 %v2110, 4294901760
      %2112 = vmatpush.msra.mxu0 %v2111
      %v2113 = vand.u32 %v265, 4294901760
      %v2114 = vsub.f32 %v265, %v2113
      %v2115 = vand.u32 %v2114, 4294901760
      %v2116 = vsub.f32 %v2114, %v2115
      %v2117 = vand.u32 %v2116, 4294901760
      %2118 = vmatpush.msra.mxu0 %v2117
      %v2119 = vand.u32 %v263, 4294901760
      %v2120 = vsub.f32 %v263, %v2119
      %v2121 = vand.u32 %v2120, 4294901760
      %v2122 = vsub.f32 %v2120, %v2121
      %v2123 = vand.u32 %v2122, 4294901760
      %2124 = vmatpush.msra.mxu0 %v2123
      %v2125 = vand.u32 %v261, 4294901760
      %v2126 = vsub.f32 %v261, %v2125
      %v2127 = vand.u32 %v2126, 4294901760
      %v2128 = vsub.f32 %v2126, %v2127
      %v2129 = vand.u32 %v2128, 4294901760
      %2130 = vmatpush.msra.mxu0 %v2129
      %v2131 = vand.u32 %v259, 4294901760
      %v2132 = vsub.f32 %v259, %v2131
      %v2133 = vand.u32 %v2132, 4294901760
      %v2134 = vsub.f32 %v2132, %v2133
      %v2135 = vand.u32 %v2134, 4294901760
      %2136 = vmatpush.msra.mxu0 %v2135
      %v2137 = vand.u32 %v257, 4294901760
      %v2138 = vsub.f32 %v257, %v2137
      %v2139 = vand.u32 %v2138, 4294901760
      %v2140 = vsub.f32 %v2138, %v2139
      %v2141 = vand.u32 %v2140, 4294901760
      %2142 = vmatpush.msra.mxu0 %v2141
      %v2143 = vand.u32 %v255, 4294901760
      %v2144 = vsub.f32 %v255, %v2143
      %v2145 = vand.u32 %v2144, 4294901760
      %v2146 = vsub.f32 %v2144, %v2145
      %v2147 = vand.u32 %v2146, 4294901760
      %2148 = vmatpush.msra.mxu0 %v2147
      %v2149 = vand.u32 %v253, 4294901760
      %v2150 = vsub.f32 %v253, %v2149
      %v2151 = vand.u32 %v2150, 4294901760
      %v2152 = vsub.f32 %v2150, %v2151
      %v2153 = vand.u32 %v2152, 4294901760
      %2154 = vmatpush.msra.mxu0 %v2153
      %v2155 = vand.u32 %v251, 4294901760
      %v2156 = vsub.f32 %v251, %v2155
      %v2157 = vand.u32 %v2156, 4294901760
      %v2158 = vsub.f32 %v2156, %v2157
      %v2159 = vand.u32 %v2158, 4294901760
      %2160 = vmatpush.msra.mxu0 %v2159
      %v2161 = vand.u32 %v249, 4294901760
      %v2162 = vsub.f32 %v249, %v2161
      %v2163 = vand.u32 %v2162, 4294901760
      %v2164 = vsub.f32 %v2162, %v2163
      %v2165 = vand.u32 %v2164, 4294901760
      %2166 = vmatpush.msra.mxu0 %v2165
      %v2167 = vand.u32 %v247, 4294901760
      %v2168 = vsub.f32 %v247, %v2167
      %v2169 = vand.u32 %v2168, 4294901760
      %v2170 = vsub.f32 %v2168, %v2169
      %v2171 = vand.u32 %v2170, 4294901760
      %2172 = vmatpush.msra.mxu0 %v2171
      %v2173 = vand.u32 %v245, 4294901760
      %v2174 = vsub.f32 %v245, %v2173
      %v2175 = vand.u32 %v2174, 4294901760
      %v2176 = vsub.f32 %v2174, %v2175
      %v2177 = vand.u32 %v2176, 4294901760
      %2178 = vmatpush.msra.mxu0 %v2177
      %v2179 = vand.u32 %v243, 4294901760
      %v2180 = vsub.f32 %v243, %v2179
      %v2181 = vand.u32 %v2180, 4294901760
      %v2182 = vsub.f32 %v2180, %v2181
      %v2183 = vand.u32 %v2182, 4294901760
      %2184 = vmatpush.msra.mxu0 %v2183
      %v2185 = vand.u32 %v241, 4294901760
      %v2186 = vsub.f32 %v241, %v2185
      %v2187 = vand.u32 %v2186, 4294901760
      %v2188 = vsub.f32 %v2186, %v2187
      %v2189 = vand.u32 %v2188, 4294901760
      %2190 = vmatpush.msra.mxu0 %v2189
      %v2191 = vand.u32 %v342, 4294901760
      %2192 = vmatmul.f32.gmra.mxu0 %v2191
      %v2193 = vpop.f32.mrf.mxu0
      %v2194 = vadd.f32 %v2093, %v2193
      %2195 = vdwg.mxu0
      %v2196 = vand.u32 %v271, 4294901760
      %v2197 = vsub.f32 %v271, %v2196
      %2198 = vmatpush.msra.mxu0 %v2197
      %v2199 = vand.u32 %v269, 4294901760
      %v2200 = vsub.f32 %v269, %v2199
      %2201 = vmatpush.msra.mxu0 %v2200
      %v2202 = vand.u32 %v267, 4294901760
      %v2203 = vsub.f32 %v267, %v2202
      %2204 = vmatpush.msra.mxu0 %v2203
      %v2205 = vand.u32 %v265, 4294901760
      %v2206 = vsub.f32 %v265, %v2205
      %2207 = vmatpush.msra.mxu0 %v2206
      %v2208 = vand.u32 %v263, 4294901760
      %v2209 = vsub.f32 %v263, %v2208
      %2210 = vmatpush.msra.mxu0 %v2209
      %v2211 = vand.u32 %v261, 4294901760
      %v2212 = vsub.f32 %v261, %v2211
      %2213 = vmatpush.msra.mxu0 %v2212
      %v2214 = vand.u32 %v259, 4294901760
      %v2215 = vsub.f32 %v259, %v2214
      %2216 = vmatpush.msra.mxu0 %v2215
      %v2217 = vand.u32 %v257, 4294901760
      %v2218 = vsub.f32 %v257, %v2217
      %2219 = vmatpush.msra.mxu0 %v2218
      %v2220 = vand.u32 %v255, 4294901760
      %v2221 = vsub.f32 %v255, %v2220
      %2222 = vmatpush.msra.mxu0 %v2221
      %v2223 = vand.u32 %v253, 4294901760
      %v2224 = vsub.f32 %v253, %v2223
      %2225 = vmatpush.msra.mxu0 %v2224
      %v2226 = vand.u32 %v251, 4294901760
      %v2227 = vsub.f32 %v251, %v2226
      %2228 = vmatpush.msra.mxu0 %v2227
      %v2229 = vand.u32 %v249, 4294901760
      %v2230 = vsub.f32 %v249, %v2229
      %2231 = vmatpush.msra.mxu0 %v2230
      %v2232 = vand.u32 %v247, 4294901760
      %v2233 = vsub.f32 %v247, %v2232
      %2234 = vmatpush.msra.mxu0 %v2233
      %v2235 = vand.u32 %v245, 4294901760
      %v2236 = vsub.f32 %v245, %v2235
      %2237 = vmatpush.msra.mxu0 %v2236
      %v2238 = vand.u32 %v243, 4294901760
      %v2239 = vsub.f32 %v243, %v2238
      %2240 = vmatpush.msra.mxu0 %v2239
      %v2241 = vand.u32 %v241, 4294901760
      %v2242 = vsub.f32 %v241, %v2241
      %2243 = vmatpush.msra.mxu0 %v2242
      %v2244 = vand.u32 %v342, 4294901760
      %v2245 = vsub.f32 %v342, %v2244
      %2246 = vmatmul.f32.gmra.mxu0 %v2245
      %v2247 = vpop.f32.mrf.mxu0
      %v2248 = vadd.f32 %v2194, %v2247
      %2249 = vdwg.mxu0
      %v2250 = vand.u32 %v271, 4294901760
      %2251 = vmatpush.msra.mxu0 %v2250
      %v2252 = vand.u32 %v269, 4294901760
      %2253 = vmatpush.msra.mxu0 %v2252
      %v2254 = vand.u32 %v267, 4294901760
      %2255 = vmatpush.msra.mxu0 %v2254
      %v2256 = vand.u32 %v265, 4294901760
      %2257 = vmatpush.msra.mxu0 %v2256
      %v2258 = vand.u32 %v263, 4294901760
      %2259 = vmatpush.msra.mxu0 %v2258
      %v2260 = vand.u32 %v261, 4294901760
      %2261 = vmatpush.msra.mxu0 %v2260
      %v2262 = vand.u32 %v259, 4294901760
      %2263 = vmatpush.msra.mxu0 %v2262
      %v2264 = vand.u32 %v257, 4294901760
      %2265 = vmatpush.msra.mxu0 %v2264
      %v2266 = vand.u32 %v255, 4294901760
      %2267 = vmatpush.msra.mxu0 %v2266
      %v2268 = vand.u32 %v253, 4294901760
      %2269 = vmatpush.msra.mxu0 %v2268
      %v2270 = vand.u32 %v251, 4294901760
      %2271 = vmatpush.msra.mxu0 %v2270
      %v2272 = vand.u32 %v249, 4294901760
      %2273 = vmatpush.msra.mxu0 %v2272
      %v2274 = vand.u32 %v247, 4294901760
      %2275 = vmatpush.msra.mxu0 %v2274
      %v2276 = vand.u32 %v245, 4294901760
      %2277 = vmatpush.msra.mxu0 %v2276
      %v2278 = vand.u32 %v243, 4294901760
      %2279 = vmatpush.msra.mxu0 %v2278
      %v2280 = vand.u32 %v241, 4294901760
      %2281 = vmatpush.msra.mxu0 %v2280
      %v2282 = vand.u32 %v342, 4294901760
      %v2283 = vsub.f32 %v342, %v2282
      %v2284 = vand.u32 %v2283, 4294901760
      %2285 = vmatmul.f32.gmra.mxu0 %v2284
      %v2286 = vpop.f32.mrf.mxu0
      %v2287 = vadd.f32 %v2248, %v2286
      %2288 = vdwg.mxu0
      %v2289 = vand.u32 %v271, 4294901760
      %v2290 = vsub.f32 %v271, %v2289
      %v2291 = vand.u32 %v2290, 4294901760
      %2292 = vmatpush.msra.mxu0 %v2291
      %v2293 = vand.u32 %v269, 4294901760
      %v2294 = vsub.f32 %v269, %v2293
      %v2295 = vand.u32 %v2294, 4294901760
      %2296 = vmatpush.msra.mxu0 %v2295
      %v2297 = vand.u32 %v267, 4294901760
      %v2298 = vsub.f32 %v267, %v2297
      %v2299 = vand.u32 %v2298, 4294901760
      %2300 = vmatpush.msra.mxu0 %v2299
      %v2301 = vand.u32 %v265, 4294901760
      %v2302 = vsub.f32 %v265, %v2301
      %v2303 = vand.u32 %v2302, 4294901760
      %2304 = vmatpush.msra.mxu0 %v2303
      %v2305 = vand.u32 %v263, 4294901760
      %v2306 = vsub.f32 %v263, %v2305
      %v2307 = vand.u32 %v2306, 4294901760
      %2308 = vmatpush.msra.mxu0 %v2307
      %v2309 = vand.u32 %v261, 4294901760
      %v2310 = vsub.f32 %v261, %v2309
      %v2311 = vand.u32 %v2310, 4294901760
      %2312 = vmatpush.msra.mxu0 %v2311
      %v2313 = vand.u32 %v259, 4294901760
      %v2314 = vsub.f32 %v259, %v2313
      %v2315 = vand.u32 %v2314, 4294901760
      %2316 = vmatpush.msra.mxu0 %v2315
      %v2317 = vand.u32 %v257, 4294901760
      %v2318 = vsub.f32 %v257, %v2317
      %v2319 = vand.u32 %v2318, 4294901760
      %2320 = vmatpush.msra.mxu0 %v2319
      %v2321 = vand.u32 %v255, 4294901760
      %v2322 = vsub.f32 %v255, %v2321
      %v2323 = vand.u32 %v2322, 4294901760
      %2324 = vmatpush.msra.mxu0 %v2323
      %v2325 = vand.u32 %v253, 4294901760
      %v2326 = vsub.f32 %v253, %v2325
      %v2327 = vand.u32 %v2326, 4294901760
      %2328 = vmatpush.msra.mxu0 %v2327
      %v2329 = vand.u32 %v251, 4294901760
      %v2330 = vsub.f32 %v251, %v2329
      %v2331 = vand.u32 %v2330, 4294901760
      %2332 = vmatpush.msra.mxu0 %v2331
      %v2333 = vand.u32 %v249, 4294901760
      %v2334 = vsub.f32 %v249, %v2333
      %v2335 = vand.u32 %v2334, 4294901760
      %2336 = vmatpush.msra.mxu0 %v2335
      %v2337 = vand.u32 %v247, 4294901760
      %v2338 = vsub.f32 %v247, %v2337
      %v2339 = vand.u32 %v2338, 4294901760
      %2340 = vmatpush.msra.mxu0 %v2339
      %v2341 = vand.u32 %v245, 4294901760
      %v2342 = vsub.f32 %v245, %v2341
      %v2343 = vand.u32 %v2342, 4294901760
      %2344 = vmatpush.msra.mxu0 %v2343
      %v2345 = vand.u32 %v243, 4294901760
      %v2346 = vsub.f32 %v243, %v2345
      %v2347 = vand.u32 %v2346, 4294901760
      %2348 = vmatpush.msra.mxu0 %v2347
      %v2349 = vand.u32 %v241, 4294901760
      %v2350 = vsub.f32 %v241, %v2349
      %v2351 = vand.u32 %v2350, 4294901760
      %2352 = vmatpush.msra.mxu0 %v2351
      %v2353 = vand.u32 %v342, 4294901760
      %2354 = vmatmul.f32.gmra.mxu0 %v2353
      %v2355 = vpop.f32.mrf.mxu0
      %v2356 = vadd.f32 %v2287, %v2355
      %2357 = vdwg.mxu0
      %v2358 = vand.u32 %v271, 4294901760
      %2359 = vmatpush.msra.mxu0 %v2358
      %v2360 = vand.u32 %v269, 4294901760
      %2361 = vmatpush.msra.mxu0 %v2360
      %v2362 = vand.u32 %v267, 4294901760
      %2363 = vmatpush.msra.mxu0 %v2362
      %v2364 = vand.u32 %v265, 4294901760
      %2365 = vmatpush.msra.mxu0 %v2364
      %v2366 = vand.u32 %v263, 4294901760
      %2367 = vmatpush.msra.mxu0 %v2366
      %v2368 = vand.u32 %v261, 4294901760
      %2369 = vmatpush.msra.mxu0 %v2368
      %v2370 = vand.u32 %v259, 4294901760
      %2371 = vmatpush.msra.mxu0 %v2370
      %v2372 = vand.u32 %v257, 4294901760
      %2373 = vmatpush.msra.mxu0 %v2372
      %v2374 = vand.u32 %v255, 4294901760
      %2375 = vmatpush.msra.mxu0 %v2374
      %v2376 = vand.u32 %v253, 4294901760
      %2377 = vmatpush.msra.mxu0 %v2376
      %v2378 = vand.u32 %v251, 4294901760
      %2379 = vmatpush.msra.mxu0 %v2378
      %v2380 = vand.u32 %v249, 4294901760
      %2381 = vmatpush.msra.mxu0 %v2380
      %v2382 = vand.u32 %v247, 4294901760
      %2383 = vmatpush.msra.mxu0 %v2382
      %v2384 = vand.u32 %v245, 4294901760
      %2385 = vmatpush.msra.mxu0 %v2384
      %v2386 = vand.u32 %v243, 4294901760
      %2387 = vmatpush.msra.mxu0 %v2386
      %v2388 = vand.u32 %v241, 4294901760
      %2389 = vmatpush.msra.mxu0 %v2388
      %v2390 = vand.u32 %v342, 4294901760
      %2391 = vmatmul.f32.gmra.mxu0 %v2390
      %v2392 = vpop.f32.mrf.mxu0
      %v2393 = vadd.f32 %v2356, %v2392
      %2394 = vdwg.mxu0
      %v2395 = vand.u32 %v303, 4294901760
      %2396 = vmatpush.msra.mxu0 %v2395
      %v2397 = vand.u32 %v301, 4294901760
      %2398 = vmatpush.msra.mxu0 %v2397
      %v2399 = vand.u32 %v299, 4294901760
      %2400 = vmatpush.msra.mxu0 %v2399
      %v2401 = vand.u32 %v297, 4294901760
      %2402 = vmatpush.msra.mxu0 %v2401
      %v2403 = vand.u32 %v295, 4294901760
      %2404 = vmatpush.msra.mxu0 %v2403
      %v2405 = vand.u32 %v293, 4294901760
      %2406 = vmatpush.msra.mxu0 %v2405
      %v2407 = vand.u32 %v291, 4294901760
      %2408 = vmatpush.msra.mxu0 %v2407
      %v2409 = vand.u32 %v289, 4294901760
      %2410 = vmatpush.msra.mxu0 %v2409
      %v2411 = vand.u32 %v287, 4294901760
      %2412 = vmatpush.msra.mxu0 %v2411
      %v2413 = vand.u32 %v285, 4294901760
      %2414 = vmatpush.msra.mxu0 %v2413
      %v2415 = vand.u32 %v283, 4294901760
      %2416 = vmatpush.msra.mxu0 %v2415
      %v2417 = vand.u32 %v281, 4294901760
      %2418 = vmatpush.msra.mxu0 %v2417
      %v2419 = vand.u32 %v279, 4294901760
      %2420 = vmatpush.msra.mxu0 %v2419
      %v2421 = vand.u32 %v277, 4294901760
      %2422 = vmatpush.msra.mxu0 %v2421
      %v2423 = vand.u32 %v275, 4294901760
      %2424 = vmatpush.msra.mxu0 %v2423
      %v2425 = vand.u32 %v273, 4294901760
      %2426 = vmatpush.msra.mxu0 %v2425
      %v2427 = vand.u32 %v343, 4294901760
      %v2428 = vsub.f32 %v343, %v2427
      %v2429 = vand.u32 %v2428, 4294901760
      %v2430 = vsub.f32 %v2428, %v2429
      %v2431 = vand.u32 %v2430, 4294901760
      %2432 = vmatmul.f32.gmra.mxu0 %v2431
      %v2433 = vpop.f32.mrf.mxu0
      %v2434 = vadd.f32 %v2393, %v2433
      %2435 = vdwg.mxu0
      %v2436 = vand.u32 %v303, 4294901760
      %v2437 = vsub.f32 %v303, %v2436
      %v2438 = vand.u32 %v2437, 4294901760
      %v2439 = vsub.f32 %v2437, %v2438
      %v2440 = vand.u32 %v2439, 4294901760
      %2441 = vmatpush.msra.mxu0 %v2440
      %v2442 = vand.u32 %v301, 4294901760
      %v2443 = vsub.f32 %v301, %v2442
      %v2444 = vand.u32 %v2443, 4294901760
      %v2445 = vsub.f32 %v2443, %v2444
      %v2446 = vand.u32 %v2445, 4294901760
      %2447 = vmatpush.msra.mxu0 %v2446
      %v2448 = vand.u32 %v299, 4294901760
      %v2449 = vsub.f32 %v299, %v2448
      %v2450 = vand.u32 %v2449, 4294901760
      %v2451 = vsub.f32 %v2449, %v2450
      %v2452 = vand.u32 %v2451, 4294901760
      %2453 = vmatpush.msra.mxu0 %v2452
      %v2454 = vand.u32 %v297, 4294901760
      %v2455 = vsub.f32 %v297, %v2454
      %v2456 = vand.u32 %v2455, 4294901760
      %v2457 = vsub.f32 %v2455, %v2456
      %v2458 = vand.u32 %v2457, 4294901760
      %2459 = vmatpush.msra.mxu0 %v2458
      %v2460 = vand.u32 %v295, 4294901760
      %v2461 = vsub.f32 %v295, %v2460
      %v2462 = vand.u32 %v2461, 4294901760
      %v2463 = vsub.f32 %v2461, %v2462
      %v2464 = vand.u32 %v2463, 4294901760
      %2465 = vmatpush.msra.mxu0 %v2464
      %v2466 = vand.u32 %v293, 4294901760
      %v2467 = vsub.f32 %v293, %v2466
      %v2468 = vand.u32 %v2467, 4294901760
      %v2469 = vsub.f32 %v2467, %v2468
      %v2470 = vand.u32 %v2469, 4294901760
      %2471 = vmatpush.msra.mxu0 %v2470
      %v2472 = vand.u32 %v291, 4294901760
      %v2473 = vsub.f32 %v291, %v2472
      %v2474 = vand.u32 %v2473, 4294901760
      %v2475 = vsub.f32 %v2473, %v2474
      %v2476 = vand.u32 %v2475, 4294901760
      %2477 = vmatpush.msra.mxu0 %v2476
      %v2478 = vand.u32 %v289, 4294901760
      %v2479 = vsub.f32 %v289, %v2478
      %v2480 = vand.u32 %v2479, 4294901760
      %v2481 = vsub.f32 %v2479, %v2480
      %v2482 = vand.u32 %v2481, 4294901760
      %2483 = vmatpush.msra.mxu0 %v2482
      %v2484 = vand.u32 %v287, 4294901760
      %v2485 = vsub.f32 %v287, %v2484
      %v2486 = vand.u32 %v2485, 4294901760
      %v2487 = vsub.f32 %v2485, %v2486
      %v2488 = vand.u32 %v2487, 4294901760
      %2489 = vmatpush.msra.mxu0 %v2488
      %v2490 = vand.u32 %v285, 4294901760
      %v2491 = vsub.f32 %v285, %v2490
      %v2492 = vand.u32 %v2491, 4294901760
      %v2493 = vsub.f32 %v2491, %v2492
      %v2494 = vand.u32 %v2493, 4294901760
      %2495 = vmatpush.msra.mxu0 %v2494
      %v2496 = vand.u32 %v283, 4294901760
      %v2497 = vsub.f32 %v283, %v2496
      %v2498 = vand.u32 %v2497, 4294901760
      %v2499 = vsub.f32 %v2497, %v2498
      %v2500 = vand.u32 %v2499, 4294901760
      %2501 = vmatpush.msra.mxu0 %v2500
      %v2502 = vand.u32 %v281, 4294901760
      %v2503 = vsub.f32 %v281, %v2502
      %v2504 = vand.u32 %v2503, 4294901760
      %v2505 = vsub.f32 %v2503, %v2504
      %v2506 = vand.u32 %v2505, 4294901760
      %2507 = vmatpush.msra.mxu0 %v2506
      %v2508 = vand.u32 %v279, 4294901760
      %v2509 = vsub.f32 %v279, %v2508
      %v2510 = vand.u32 %v2509, 4294901760
      %v2511 = vsub.f32 %v2509, %v2510
      %v2512 = vand.u32 %v2511, 4294901760
      %2513 = vmatpush.msra.mxu0 %v2512
      %v2514 = vand.u32 %v277, 4294901760
      %v2515 = vsub.f32 %v277, %v2514
      %v2516 = vand.u32 %v2515, 4294901760
      %v2517 = vsub.f32 %v2515, %v2516
      %v2518 = vand.u32 %v2517, 4294901760
      %2519 = vmatpush.msra.mxu0 %v2518
      %v2520 = vand.u32 %v275, 4294901760
      %v2521 = vsub.f32 %v275, %v2520
      %v2522 = vand.u32 %v2521, 4294901760
      %v2523 = vsub.f32 %v2521, %v2522
      %v2524 = vand.u32 %v2523, 4294901760
      %2525 = vmatpush.msra.mxu0 %v2524
      %v2526 = vand.u32 %v273, 4294901760
      %v2527 = vsub.f32 %v273, %v2526
      %v2528 = vand.u32 %v2527, 4294901760
      %v2529 = vsub.f32 %v2527, %v2528
      %v2530 = vand.u32 %v2529, 4294901760
      %2531 = vmatpush.msra.mxu0 %v2530
      %v2532 = vand.u32 %v343, 4294901760
      %2533 = vmatmul.f32.gmra.mxu0 %v2532
      %v2534 = vpop.f32.mrf.mxu0
      %v2535 = vadd.f32 %v2434, %v2534
      %2536 = vdwg.mxu0
      %v2537 = vand.u32 %v303, 4294901760
      %v2538 = vsub.f32 %v303, %v2537
      %2539 = vmatpush.msra.mxu0 %v2538
      %v2540 = vand.u32 %v301, 4294901760
      %v2541 = vsub.f32 %v301, %v2540
      %2542 = vmatpush.msra.mxu0 %v2541
      %v2543 = vand.u32 %v299, 4294901760
      %v2544 = vsub.f32 %v299, %v2543
      %2545 = vmatpush.msra.mxu0 %v2544
      %v2546 = vand.u32 %v297, 4294901760
      %v2547 = vsub.f32 %v297, %v2546
      %2548 = vmatpush.msra.mxu0 %v2547
      %v2549 = vand.u32 %v295, 4294901760
      %v2550 = vsub.f32 %v295, %v2549
      %2551 = vmatpush.msra.mxu0 %v2550
      %v2552 = vand.u32 %v293, 4294901760
      %v2553 = vsub.f32 %v293, %v2552
      %2554 = vmatpush.msra.mxu0 %v2553
      %v2555 = vand.u32 %v291, 4294901760
      %v2556 = vsub.f32 %v291, %v2555
      %2557 = vmatpush.msra.mxu0 %v2556
      %v2558 = vand.u32 %v289, 4294901760
      %v2559 = vsub.f32 %v289, %v2558
      %2560 = vmatpush.msra.mxu0 %v2559
      %v2561 = vand.u32 %v287, 4294901760
      %v2562 = vsub.f32 %v287, %v2561
      %2563 = vmatpush.msra.mxu0 %v2562
      %v2564 = vand.u32 %v285, 4294901760
      %v2565 = vsub.f32 %v285, %v2564
      %2566 = vmatpush.msra.mxu0 %v2565
      %v2567 = vand.u32 %v283, 4294901760
      %v2568 = vsub.f32 %v283, %v2567
      %2569 = vmatpush.msra.mxu0 %v2568
      %v2570 = vand.u32 %v281, 4294901760
      %v2571 = vsub.f32 %v281, %v2570
      %2572 = vmatpush.msra.mxu0 %v2571
      %v2573 = vand.u32 %v279, 4294901760
      %v2574 = vsub.f32 %v279, %v2573
      %2575 = vmatpush.msra.mxu0 %v2574
      %v2576 = vand.u32 %v277, 4294901760
      %v2577 = vsub.f32 %v277, %v2576
      %2578 = vmatpush.msra.mxu0 %v2577
      %v2579 = vand.u32 %v275, 4294901760
      %v2580 = vsub.f32 %v275, %v2579
      %2581 = vmatpush.msra.mxu0 %v2580
      %v2582 = vand.u32 %v273, 4294901760
      %v2583 = vsub.f32 %v273, %v2582
      %2584 = vmatpush.msra.mxu0 %v2583
      %v2585 = vand.u32 %v343, 4294901760
      %v2586 = vsub.f32 %v343, %v2585
      %2587 = vmatmul.f32.gmra.mxu0 %v2586
      %v2588 = vpop.f32.mrf.mxu0
      %v2589 = vadd.f32 %v2535, %v2588
      %2590 = vdwg.mxu0
      %v2591 = vand.u32 %v303, 4294901760
      %2592 = vmatpush.msra.mxu0 %v2591
      %v2593 = vand.u32 %v301, 4294901760
      %2594 = vmatpush.msra.mxu0 %v2593
      %v2595 = vand.u32 %v299, 4294901760
      %2596 = vmatpush.msra.mxu0 %v2595
      %v2597 = vand.u32 %v297, 4294901760
      %2598 = vmatpush.msra.mxu0 %v2597
      %v2599 = vand.u32 %v295, 4294901760
      %2600 = vmatpush.msra.mxu0 %v2599
      %v2601 = vand.u32 %v293, 4294901760
      %2602 = vmatpush.msra.mxu0 %v2601
      %v2603 = vand.u32 %v291, 4294901760
      %2604 = vmatpush.msra.mxu0 %v2603
      %v2605 = vand.u32 %v289, 4294901760
      %2606 = vmatpush.msra.mxu0 %v2605
      %v2607 = vand.u32 %v287, 4294901760
      %2608 = vmatpush.msra.mxu0 %v2607
      %v2609 = vand.u32 %v285, 4294901760
      %2610 = vmatpush.msra.mxu0 %v2609
      %v2611 = vand.u32 %v283, 4294901760
      %2612 = vmatpush.msra.mxu0 %v2611
      %v2613 = vand.u32 %v281, 4294901760
      %2614 = vmatpush.msra.mxu0 %v2613
      %v2615 = vand.u32 %v279, 4294901760
      %2616 = vmatpush.msra.mxu0 %v2615
      %v2617 = vand.u32 %v277, 4294901760
      %2618 = vmatpush.msra.mxu0 %v2617
      %v2619 = vand.u32 %v275, 4294901760
      %2620 = vmatpush.msra.mxu0 %v2619
      %v2621 = vand.u32 %v273, 4294901760
      %2622 = vmatpush.msra.mxu0 %v2621
      %v2623 = vand.u32 %v343, 4294901760
      %v2624 = vsub.f32 %v343, %v2623
      %v2625 = vand.u32 %v2624, 4294901760
      %2626 = vmatmul.f32.gmra.mxu0 %v2625
      %v2627 = vpop.f32.mrf.mxu0
      %v2628 = vadd.f32 %v2589, %v2627
      %2629 = vdwg.mxu0
      %v2630 = vand.u32 %v303, 4294901760
      %v2631 = vsub.f32 %v303, %v2630
      %v2632 = vand.u32 %v2631, 4294901760
      %2633 = vmatpush.msra.mxu0 %v2632
      %v2634 = vand.u32 %v301, 4294901760
      %v2635 = vsub.f32 %v301, %v2634
      %v2636 = vand.u32 %v2635, 4294901760
      %2637 = vmatpush.msra.mxu0 %v2636
      %v2638 = vand.u32 %v299, 4294901760
      %v2639 = vsub.f32 %v299, %v2638
      %v2640 = vand.u32 %v2639, 4294901760
      %2641 = vmatpush.msra.mxu0 %v2640
      %v2642 = vand.u32 %v297, 4294901760
      %v2643 = vsub.f32 %v297, %v2642
      %v2644 = vand.u32 %v2643, 4294901760
      %2645 = vmatpush.msra.mxu0 %v2644
      %v2646 = vand.u32 %v295, 4294901760
      %v2647 = vsub.f32 %v295, %v2646
      %v2648 = vand.u32 %v2647, 4294901760
      %2649 = vmatpush.msra.mxu0 %v2648
      %v2650 = vand.u32 %v293, 4294901760
      %v2651 = vsub.f32 %v293, %v2650
      %v2652 = vand.u32 %v2651, 4294901760
      %2653 = vmatpush.msra.mxu0 %v2652
      %v2654 = vand.u32 %v291, 4294901760
      %v2655 = vsub.f32 %v291, %v2654
      %v2656 = vand.u32 %v2655, 4294901760
      %2657 = vmatpush.msra.mxu0 %v2656
      %v2658 = vand.u32 %v289, 4294901760
      %v2659 = vsub.f32 %v289, %v2658
      %v2660 = vand.u32 %v2659, 4294901760
      %2661 = vmatpush.msra.mxu0 %v2660
      %v2662 = vand.u32 %v287, 4294901760
      %v2663 = vsub.f32 %v287, %v2662
      %v2664 = vand.u32 %v2663, 4294901760
      %2665 = vmatpush.msra.mxu0 %v2664
      %v2666 = vand.u32 %v285, 4294901760
      %v2667 = vsub.f32 %v285, %v2666
      %v2668 = vand.u32 %v2667, 4294901760
      %2669 = vmatpush.msra.mxu0 %v2668
      %v2670 = vand.u32 %v283, 4294901760
      %v2671 = vsub.f32 %v283, %v2670
      %v2672 = vand.u32 %v2671, 4294901760
      %2673 = vmatpush.msra.mxu0 %v2672
      %v2674 = vand.u32 %v281, 4294901760
      %v2675 = vsub.f32 %v281, %v2674
      %v2676 = vand.u32 %v2675, 4294901760
      %2677 = vmatpush.msra.mxu0 %v2676
      %v2678 = vand.u32 %v279, 4294901760
      %v2679 = vsub.f32 %v279, %v2678
      %v2680 = vand.u32 %v2679, 4294901760
      %2681 = vmatpush.msra.mxu0 %v2680
      %v2682 = vand.u32 %v277, 4294901760
      %v2683 = vsub.f32 %v277, %v2682
      %v2684 = vand.u32 %v2683, 4294901760
      %2685 = vmatpush.msra.mxu0 %v2684
      %v2686 = vand.u32 %v275, 4294901760
      %v2687 = vsub.f32 %v275, %v2686
      %v2688 = vand.u32 %v2687, 4294901760
      %2689 = vmatpush.msra.mxu0 %v2688
      %v2690 = vand.u32 %v273, 4294901760
      %v2691 = vsub.f32 %v273, %v2690
      %v2692 = vand.u32 %v2691, 4294901760
      %2693 = vmatpush.msra.mxu0 %v2692
      %v2694 = vand.u32 %v343, 4294901760
      %2695 = vmatmul.f32.gmra.mxu0 %v2694
      %v2696 = vpop.f32.mrf.mxu0
      %v2697 = vadd.f32 %v2628, %v2696
      %2698 = vdwg.mxu0
      %v2699 = vand.u32 %v303, 4294901760
      %2700 = vmatpush.msra.mxu0 %v2699
      %v2701 = vand.u32 %v301, 4294901760
      %2702 = vmatpush.msra.mxu0 %v2701
      %v2703 = vand.u32 %v299, 4294901760
      %2704 = vmatpush.msra.mxu0 %v2703
      %v2705 = vand.u32 %v297, 4294901760
      %2706 = vmatpush.msra.mxu0 %v2705
      %v2707 = vand.u32 %v295, 4294901760
      %2708 = vmatpush.msra.mxu0 %v2707
      %v2709 = vand.u32 %v293, 4294901760
      %2710 = vmatpush.msra.mxu0 %v2709
      %v2711 = vand.u32 %v291, 4294901760
      %2712 = vmatpush.msra.mxu0 %v2711
      %v2713 = vand.u32 %v289, 4294901760
      %2714 = vmatpush.msra.mxu0 %v2713
      %v2715 = vand.u32 %v287, 4294901760
      %2716 = vmatpush.msra.mxu0 %v2715
      %v2717 = vand.u32 %v285, 4294901760
      %2718 = vmatpush.msra.mxu0 %v2717
      %v2719 = vand.u32 %v283, 4294901760
      %2720 = vmatpush.msra.mxu0 %v2719
      %v2721 = vand.u32 %v281, 4294901760
      %2722 = vmatpush.msra.mxu0 %v2721
      %v2723 = vand.u32 %v279, 4294901760
      %2724 = vmatpush.msra.mxu0 %v2723
      %v2725 = vand.u32 %v277, 4294901760
      %2726 = vmatpush.msra.mxu0 %v2725
      %v2727 = vand.u32 %v275, 4294901760
      %2728 = vmatpush.msra.mxu0 %v2727
      %v2729 = vand.u32 %v273, 4294901760
      %2730 = vmatpush.msra.mxu0 %v2729
      %v2731 = vand.u32 %v343, 4294901760
      %2732 = vmatmul.f32.gmra.mxu0 %v2731
      %v2733 = vpop.f32.mrf.mxu0
      %v2734 = vadd.f32 %v2697, %v2733
      %2735 = vdwg.mxu0
      %v2736 = vand.u32 %v335, 4294901760
      %2737 = vmatpush.msra.mxu0 %v2736
      %v2738 = vand.u32 %v333, 4294901760
      %2739 = vmatpush.msra.mxu0 %v2738
      %v2740 = vand.u32 %v331, 4294901760
      %2741 = vmatpush.msra.mxu0 %v2740
      %v2742 = vand.u32 %v329, 4294901760
      %2743 = vmatpush.msra.mxu0 %v2742
      %v2744 = vand.u32 %v327, 4294901760
      %2745 = vmatpush.msra.mxu0 %v2744
      %v2746 = vand.u32 %v325, 4294901760
      %2747 = vmatpush.msra.mxu0 %v2746
      %v2748 = vand.u32 %v323, 4294901760
      %2749 = vmatpush.msra.mxu0 %v2748
      %v2750 = vand.u32 %v321, 4294901760
      %2751 = vmatpush.msra.mxu0 %v2750
      %v2752 = vand.u32 %v319, 4294901760
      %2753 = vmatpush.msra.mxu0 %v2752
      %v2754 = vand.u32 %v317, 4294901760
      %2755 = vmatpush.msra.mxu0 %v2754
      %v2756 = vand.u32 %v315, 4294901760
      %2757 = vmatpush.msra.mxu0 %v2756
      %v2758 = vand.u32 %v313, 4294901760
      %2759 = vmatpush.msra.mxu0 %v2758
      %v2760 = vand.u32 %v311, 4294901760
      %2761 = vmatpush.msra.mxu0 %v2760
      %v2762 = vand.u32 %v309, 4294901760
      %2763 = vmatpush.msra.mxu0 %v2762
      %v2764 = vand.u32 %v307, 4294901760
      %2765 = vmatpush.msra.mxu0 %v2764
      %v2766 = vand.u32 %v305, 4294901760
      %2767 = vmatpush.msra.mxu0 %v2766
      %v2768 = vand.u32 %v344, 4294901760
      %v2769 = vsub.f32 %v344, %v2768
      %v2770 = vand.u32 %v2769, 4294901760
      %v2771 = vsub.f32 %v2769, %v2770
      %v2772 = vand.u32 %v2771, 4294901760
      %2773 = vmatmul.f32.gmra.mxu0 %v2772
      %v2774 = vpop.f32.mrf.mxu0
      %v2775 = vadd.f32 %v2734, %v2774
      %2776 = vdwg.mxu0
      %v2777 = vand.u32 %v335, 4294901760
      %v2778 = vsub.f32 %v335, %v2777
      %v2779 = vand.u32 %v2778, 4294901760
      %v2780 = vsub.f32 %v2778, %v2779
      %v2781 = vand.u32 %v2780, 4294901760
      %2782 = vmatpush.msra.mxu0 %v2781
      %v2783 = vand.u32 %v333, 4294901760
      %v2784 = vsub.f32 %v333, %v2783
      %v2785 = vand.u32 %v2784, 4294901760
      %v2786 = vsub.f32 %v2784, %v2785
      %v2787 = vand.u32 %v2786, 4294901760
      %2788 = vmatpush.msra.mxu0 %v2787
      %v2789 = vand.u32 %v331, 4294901760
      %v2790 = vsub.f32 %v331, %v2789
      %v2791 = vand.u32 %v2790, 4294901760
      %v2792 = vsub.f32 %v2790, %v2791
      %v2793 = vand.u32 %v2792, 4294901760
      %2794 = vmatpush.msra.mxu0 %v2793
      %v2795 = vand.u32 %v329, 4294901760
      %v2796 = vsub.f32 %v329, %v2795
      %v2797 = vand.u32 %v2796, 4294901760
      %v2798 = vsub.f32 %v2796, %v2797
      %v2799 = vand.u32 %v2798, 4294901760
      %2800 = vmatpush.msra.mxu0 %v2799
      %v2801 = vand.u32 %v327, 4294901760
      %v2802 = vsub.f32 %v327, %v2801
      %v2803 = vand.u32 %v2802, 4294901760
      %v2804 = vsub.f32 %v2802, %v2803
      %v2805 = vand.u32 %v2804, 4294901760
      %2806 = vmatpush.msra.mxu0 %v2805
      %v2807 = vand.u32 %v325, 4294901760
      %v2808 = vsub.f32 %v325, %v2807
      %v2809 = vand.u32 %v2808, 4294901760
      %v2810 = vsub.f32 %v2808, %v2809
      %v2811 = vand.u32 %v2810, 4294901760
      %2812 = vmatpush.msra.mxu0 %v2811
      %v2813 = vand.u32 %v323, 4294901760
      %v2814 = vsub.f32 %v323, %v2813
      %v2815 = vand.u32 %v2814, 4294901760
      %v2816 = vsub.f32 %v2814, %v2815
      %v2817 = vand.u32 %v2816, 4294901760
      %2818 = vmatpush.msra.mxu0 %v2817
      %v2819 = vand.u32 %v321, 4294901760
      %v2820 = vsub.f32 %v321, %v2819
      %v2821 = vand.u32 %v2820, 4294901760
      %v2822 = vsub.f32 %v2820, %v2821
      %v2823 = vand.u32 %v2822, 4294901760
      %2824 = vmatpush.msra.mxu0 %v2823
      %v2825 = vand.u32 %v319, 4294901760
      %v2826 = vsub.f32 %v319, %v2825
      %v2827 = vand.u32 %v2826, 4294901760
      %v2828 = vsub.f32 %v2826, %v2827
      %v2829 = vand.u32 %v2828, 4294901760
      %2830 = vmatpush.msra.mxu0 %v2829
      %v2831 = vand.u32 %v317, 4294901760
      %v2832 = vsub.f32 %v317, %v2831
      %v2833 = vand.u32 %v2832, 4294901760
      %v2834 = vsub.f32 %v2832, %v2833
      %v2835 = vand.u32 %v2834, 4294901760
      %2836 = vmatpush.msra.mxu0 %v2835
      %v2837 = vand.u32 %v315, 4294901760
      %v2838 = vsub.f32 %v315, %v2837
      %v2839 = vand.u32 %v2838, 4294901760
      %v2840 = vsub.f32 %v2838, %v2839
      %v2841 = vand.u32 %v2840, 4294901760
      %2842 = vmatpush.msra.mxu0 %v2841
      %v2843 = vand.u32 %v313, 4294901760
      %v2844 = vsub.f32 %v313, %v2843
      %v2845 = vand.u32 %v2844, 4294901760
      %v2846 = vsub.f32 %v2844, %v2845
      %v2847 = vand.u32 %v2846, 4294901760
      %2848 = vmatpush.msra.mxu0 %v2847
      %v2849 = vand.u32 %v311, 4294901760
      %v2850 = vsub.f32 %v311, %v2849
      %v2851 = vand.u32 %v2850, 4294901760
      %v2852 = vsub.f32 %v2850, %v2851
      %v2853 = vand.u32 %v2852, 4294901760
      %2854 = vmatpush.msra.mxu0 %v2853
      %v2855 = vand.u32 %v309, 4294901760
      %v2856 = vsub.f32 %v309, %v2855
      %v2857 = vand.u32 %v2856, 4294901760
      %v2858 = vsub.f32 %v2856, %v2857
      %v2859 = vand.u32 %v2858, 4294901760
      %2860 = vmatpush.msra.mxu0 %v2859
      %v2861 = vand.u32 %v307, 4294901760
      %v2862 = vsub.f32 %v307, %v2861
      %v2863 = vand.u32 %v2862, 4294901760
      %v2864 = vsub.f32 %v2862, %v2863
      %v2865 = vand.u32 %v2864, 4294901760
      %2866 = vmatpush.msra.mxu0 %v2865
      %v2867 = vand.u32 %v305, 4294901760
      %v2868 = vsub.f32 %v305, %v2867
      %v2869 = vand.u32 %v2868, 4294901760
      %v2870 = vsub.f32 %v2868, %v2869
      %v2871 = vand.u32 %v2870, 4294901760
      %2872 = vmatpush.msra.mxu0 %v2871
      %v2873 = vand.u32 %v344, 4294901760
      %2874 = vmatmul.f32.gmra.mxu0 %v2873
      %v2875 = vpop.f32.mrf.mxu0
      %v2876 = vadd.f32 %v2775, %v2875
      %2877 = vdwg.mxu0
      %v2878 = vand.u32 %v335, 4294901760
      %v2879 = vsub.f32 %v335, %v2878
      %2880 = vmatpush.msra.mxu0 %v2879
      %v2881 = vand.u32 %v333, 4294901760
      %v2882 = vsub.f32 %v333, %v2881
      %2883 = vmatpush.msra.mxu0 %v2882
      %v2884 = vand.u32 %v331, 4294901760
      %v2885 = vsub.f32 %v331, %v2884
      %2886 = vmatpush.msra.mxu0 %v2885
      %v2887 = vand.u32 %v329, 4294901760
      %v2888 = vsub.f32 %v329, %v2887
      %2889 = vmatpush.msra.mxu0 %v2888
      %v2890 = vand.u32 %v327, 4294901760
      %v2891 = vsub.f32 %v327, %v2890
      %2892 = vmatpush.msra.mxu0 %v2891
      %v2893 = vand.u32 %v325, 4294901760
      %v2894 = vsub.f32 %v325, %v2893
      %2895 = vmatpush.msra.mxu0 %v2894
      %v2896 = vand.u32 %v323, 4294901760
      %v2897 = vsub.f32 %v323, %v2896
      %2898 = vmatpush.msra.mxu0 %v2897
      %v2899 = vand.u32 %v321, 4294901760
      %v2900 = vsub.f32 %v321, %v2899
      %2901 = vmatpush.msra.mxu0 %v2900
      %v2902 = vand.u32 %v319, 4294901760
      %v2903 = vsub.f32 %v319, %v2902
      %2904 = vmatpush.msra.mxu0 %v2903
      %v2905 = vand.u32 %v317, 4294901760
      %v2906 = vsub.f32 %v317, %v2905
      %2907 = vmatpush.msra.mxu0 %v2906
      %v2908 = vand.u32 %v315, 4294901760
      %v2909 = vsub.f32 %v315, %v2908
      %2910 = vmatpush.msra.mxu0 %v2909
      %v2911 = vand.u32 %v313, 4294901760
      %v2912 = vsub.f32 %v313, %v2911
      %2913 = vmatpush.msra.mxu0 %v2912
      %v2914 = vand.u32 %v311, 4294901760
      %v2915 = vsub.f32 %v311, %v2914
      %2916 = vmatpush.msra.mxu0 %v2915
      %v2917 = vand.u32 %v309, 4294901760
      %v2918 = vsub.f32 %v309, %v2917
      %2919 = vmatpush.msra.mxu0 %v2918
      %v2920 = vand.u32 %v307, 4294901760
      %v2921 = vsub.f32 %v307, %v2920
      %2922 = vmatpush.msra.mxu0 %v2921
      %v2923 = vand.u32 %v305, 4294901760
      %v2924 = vsub.f32 %v305, %v2923
      %2925 = vmatpush.msra.mxu0 %v2924
      %v2926 = vand.u32 %v344, 4294901760
      %v2927 = vsub.f32 %v344, %v2926
      %2928 = vmatmul.f32.gmra.mxu0 %v2927
      %v2929 = vpop.f32.mrf.mxu0
      %v2930 = vadd.f32 %v2876, %v2929
      %2931 = vdwg.mxu0
      %v2932 = vand.u32 %v335, 4294901760
      %2933 = vmatpush.msra.mxu0 %v2932
      %v2934 = vand.u32 %v333, 4294901760
      %2935 = vmatpush.msra.mxu0 %v2934
      %v2936 = vand.u32 %v331, 4294901760
      %2937 = vmatpush.msra.mxu0 %v2936
      %v2938 = vand.u32 %v329, 4294901760
      %2939 = vmatpush.msra.mxu0 %v2938
      %v2940 = vand.u32 %v327, 4294901760
      %2941 = vmatpush.msra.mxu0 %v2940
      %v2942 = vand.u32 %v325, 4294901760
      %2943 = vmatpush.msra.mxu0 %v2942
      %v2944 = vand.u32 %v323, 4294901760
      %2945 = vmatpush.msra.mxu0 %v2944
      %v2946 = vand.u32 %v321, 4294901760
      %2947 = vmatpush.msra.mxu0 %v2946
      %v2948 = vand.u32 %v319, 4294901760
      %2949 = vmatpush.msra.mxu0 %v2948
      %v2950 = vand.u32 %v317, 4294901760
      %2951 = vmatpush.msra.mxu0 %v2950
      %v2952 = vand.u32 %v315, 4294901760
      %2953 = vmatpush.msra.mxu0 %v2952
      %v2954 = vand.u32 %v313, 4294901760
      %2955 = vmatpush.msra.mxu0 %v2954
      %v2956 = vand.u32 %v311, 4294901760
      %2957 = vmatpush.msra.mxu0 %v2956
      %v2958 = vand.u32 %v309, 4294901760
      %2959 = vmatpush.msra.mxu0 %v2958
      %v2960 = vand.u32 %v307, 4294901760
      %2961 = vmatpush.msra.mxu0 %v2960
      %v2962 = vand.u32 %v305, 4294901760
      %2963 = vmatpush.msra.mxu0 %v2962
      %v2964 = vand.u32 %v344, 4294901760
      %v2965 = vsub.f32 %v344, %v2964
      %v2966 = vand.u32 %v2965, 4294901760
      %2967 = vmatmul.f32.gmra.mxu0 %v2966
      %v2968 = vpop.f32.mrf.mxu0
      %v2969 = vadd.f32 %v2930, %v2968
      %2970 = vdwg.mxu0
      %v2971 = vand.u32 %v335, 4294901760
      %v2972 = vsub.f32 %v335, %v2971
      %v2973 = vand.u32 %v2972, 4294901760
      %2974 = vmatpush.msra.mxu0 %v2973
      %v2975 = vand.u32 %v333, 4294901760
      %v2976 = vsub.f32 %v333, %v2975
      %v2977 = vand.u32 %v2976, 4294901760
      %2978 = vmatpush.msra.mxu0 %v2977
      %v2979 = vand.u32 %v331, 4294901760
      %v2980 = vsub.f32 %v331, %v2979
      %v2981 = vand.u32 %v2980, 4294901760
      %2982 = vmatpush.msra.mxu0 %v2981
      %v2983 = vand.u32 %v329, 4294901760
      %v2984 = vsub.f32 %v329, %v2983
      %v2985 = vand.u32 %v2984, 4294901760
      %2986 = vmatpush.msra.mxu0 %v2985
      %v2987 = vand.u32 %v327, 4294901760
      %v2988 = vsub.f32 %v327, %v2987
      %v2989 = vand.u32 %v2988, 4294901760
      %2990 = vmatpush.msra.mxu0 %v2989
      %v2991 = vand.u32 %v325, 4294901760
      %v2992 = vsub.f32 %v325, %v2991
      %v2993 = vand.u32 %v2992, 4294901760
      %2994 = vmatpush.msra.mxu0 %v2993
      %v2995 = vand.u32 %v323, 4294901760
      %v2996 = vsub.f32 %v323, %v2995
      %v2997 = vand.u32 %v2996, 4294901760
      %2998 = vmatpush.msra.mxu0 %v2997
      %v2999 = vand.u32 %v321, 4294901760
      %v3000 = vsub.f32 %v321, %v2999
      %v3001 = vand.u32 %v3000, 4294901760
      %3002 = vmatpush.msra.mxu0 %v3001
      %v3003 = vand.u32 %v319, 4294901760
      %v3004 = vsub.f32 %v319, %v3003
      %v3005 = vand.u32 %v3004, 4294901760
      %3006 = vmatpush.msra.mxu0 %v3005
      %v3007 = vand.u32 %v317, 4294901760
      %v3008 = vsub.f32 %v317, %v3007
      %v3009 = vand.u32 %v3008, 4294901760
      %3010 = vmatpush.msra.mxu0 %v3009
      %v3011 = vand.u32 %v315, 4294901760
      %v3012 = vsub.f32 %v315, %v3011
      %v3013 = vand.u32 %v3012, 4294901760
      %3014 = vmatpush.msra.mxu0 %v3013
      %v3015 = vand.u32 %v313, 4294901760
      %v3016 = vsub.f32 %v313, %v3015
      %v3017 = vand.u32 %v3016, 4294901760
      %3018 = vmatpush.msra.mxu0 %v3017
      %v3019 = vand.u32 %v311, 4294901760
      %v3020 = vsub.f32 %v311, %v3019
      %v3021 = vand.u32 %v3020, 4294901760
      %3022 = vmatpush.msra.mxu0 %v3021
      %v3023 = vand.u32 %v309, 4294901760
      %v3024 = vsub.f32 %v309, %v3023
      %v3025 = vand.u32 %v3024, 4294901760
      %3026 = vmatpush.msra.mxu0 %v3025
      %v3027 = vand.u32 %v307, 4294901760
      %v3028 = vsub.f32 %v307, %v3027
      %v3029 = vand.u32 %v3028, 4294901760
      %3030 = vmatpush.msra.mxu0 %v3029
      %v3031 = vand.u32 %v305, 4294901760
      %v3032 = vsub.f32 %v305, %v3031
      %v3033 = vand.u32 %v3032, 4294901760
      %3034 = vmatpush.msra.mxu0 %v3033
      %v3035 = vand.u32 %v344, 4294901760
      %3036 = vmatmul.f32.gmra.mxu0 %v3035
      %v3037 = vpop.f32.mrf.mxu0
      %v3038 = vadd.f32 %v2969, %v3037
      %3039 = vdwg.mxu0
      %v3040 = vand.u32 %v335, 4294901760
      %3041 = vmatpush.msra.mxu0 %v3040
      %v3042 = vand.u32 %v333, 4294901760
      %3043 = vmatpush.msra.mxu0 %v3042
      %v3044 = vand.u32 %v331, 4294901760
      %3045 = vmatpush.msra.mxu0 %v3044
      %v3046 = vand.u32 %v329, 4294901760
      %3047 = vmatpush.msra.mxu0 %v3046
      %v3048 = vand.u32 %v327, 4294901760
      %3049 = vmatpush.msra.mxu0 %v3048
      %v3050 = vand.u32 %v325, 4294901760
      %3051 = vmatpush.msra.mxu0 %v3050
      %v3052 = vand.u32 %v323, 4294901760
      %3053 = vmatpush.msra.mxu0 %v3052
      %v3054 = vand.u32 %v321, 4294901760
      %3055 = vmatpush.msra.mxu0 %v3054
      %v3056 = vand.u32 %v319, 4294901760
      %3057 = vmatpush.msra.mxu0 %v3056
      %v3058 = vand.u32 %v317, 4294901760
      %3059 = vmatpush.msra.mxu0 %v3058
      %v3060 = vand.u32 %v315, 4294901760
      %3061 = vmatpush.msra.mxu0 %v3060
      %v3062 = vand.u32 %v313, 4294901760
      %3063 = vmatpush.msra.mxu0 %v3062
      %v3064 = vand.u32 %v311, 4294901760
      %3065 = vmatpush.msra.mxu0 %v3064
      %v3066 = vand.u32 %v309, 4294901760
      %3067 = vmatpush.msra.mxu0 %v3066
      %v3068 = vand.u32 %v307, 4294901760
      %3069 = vmatpush.msra.mxu0 %v3068
      %v3070 = vand.u32 %v305, 4294901760
      %3071 = vmatpush.msra.mxu0 %v3070
      %v3072 = vand.u32 %v344, 4294901760
      %3073 = vmatmul.f32.gmra.mxu0 %v3072
      %v3074 = vpop.f32.mrf.mxu0
      %v3075 = vadd.f32 %v3038, %v3074
      %3076 = vdwg.mxu0
      %p3077 = scmp.eq.s32.totalorder %s20, 0
      // Predicated region
      $region29: #{_lambda_.2} parent=27 // pred_check
        %p3078 = pneg %p3077
      $region30: #{_lambda_.2} parent=27 // pred_check_branch
        %3080 = sbr.rel (%p3078) target = $region32
      $region31: #{_lambda_.2} parent=27 // pred_region
        %v3081 = vlaneseq
        %vm3082 = vcmp.ge.s32.totalorder %v3081, 0
        %vm3083 = vcmp.lt.s32.totalorder %v3081, 256
        %vm3084 = vmand %vm3082, %vm3083
        %3085 = vst.msk [vmem:[%s201] sm:$0x3] %vm3084, 0.0
        %3086 = vst.msk [vmem:[%s205] sm:$0x3] %vm3084, 0.0
      $region32: #{_lambda_.2} parent=27 // pred_fallthru
        _
      %v3087 = vld [vmem:[%s201] sm:$0x3]
      %vm3088 = vcmask 1043456
      %v3089 = vsel %vm3088, %v1711, 0.0
      %v3090 = vrot.slane %v3089, 4
      %v3091 = vadd.f32 %v3089, %v3090
      %v3092 = vrot.slane %v3091, 2
      %v3093 = vadd.f32 %v3091, %v3092
      %v3094 = vrot.slane %v3093, 1
      %v3095 = vadd.f32 %v3093, %v3094
      %v3096 = vsel %vm3088, %v3075, 0.0
      %v3097 = vrot.slane %v3096, 4
      %v3098 = vadd.f32 %v3096, %v3097
      %v3099 = vrot.slane %v3098, 2
      %v3100 = vadd.f32 %v3098, %v3099
      %v3101 = vrot.slane %v3100, 1
      %v3102 = vadd.f32 %v3100, %v3101
      %v3105 = vrot.slane %v3102, 7
      %vm3106 = vcmask 1040384
      %v3107 = vsel %vm3106, %v3095, %v3105
      %v3109 = vadd.f32 %v3087, %v3107
      %v3110 = vlaneseq
      %vm3111 = vcmp.ge.s32.totalorder %v3110, 0
      %vm3112 = vcmp.lt.s32.totalorder %v3110, 256
      %vm3113 = vmand %vm3111, %vm3112
      %3114 = vst.msk [vmem:[%s201] sm:$0x3] %vm3113, %v3109
      %v3115 = vld [vmem:[%s205] sm:$0x3]
      %v3116 = vmul.f32 %v1711, %v1711
      %v3117 = vmul.f32 %v3075, %v3075
      %v3118 = vsel %vm3088, %v3116, 0.0
      %v3119 = vrot.slane %v3118, 4
      %v3120 = vadd.f32 %v3118, %v3119
      %v3121 = vrot.slane %v3120, 2
      %v3122 = vadd.f32 %v3120, %v3121
      %v3123 = vrot.slane %v3122, 1
      %v3124 = vadd.f32 %v3122, %v3123
      %v3125 = vsel %vm3088, %v3117, 0.0
      %v3126 = vrot.slane %v3125, 4
      %v3127 = vadd.f32 %v3125, %v3126
      %v3128 = vrot.slane %v3127, 2
      %v3129 = vadd.f32 %v3127, %v3128
      %v3130 = vrot.slane %v3129, 1
      %v3131 = vadd.f32 %v3129, %v3130
      %v3134 = vrot.slane %v3131, 7
      %v3135 = vsel %vm3106, %v3124, %v3134
      %v3137 = vadd.f32 %v3115, %v3135
      %3138 = vst.msk [vmem:[%s205] sm:$0x3] %vm3113, %v3137
      %p3139 = scmp.lt.s32.totalorder %s19, 3
      %s3140 = scalar_select %p3139, %s19, 3
      %s3141 = smul.addr %s3140, 2
      %s3142 = scalar_lea.vmem %s2, %s3141
      %p3143 = scmp.lt.s32.totalorder %s19, 3
      %s3144 = scalar_select %p3143, %s19, 3
      %s3145 = smul.addr %s3144, 2
      %s3146 = scalar_lea.vmem %s3, %s3145
      // Predicated region
      $region33: #{_lambda_.2} parent=27 // pred_check
        %p3147 = pneg %p94
      $region34: #{_lambda_.2} parent=27 // pred_check_branch
        %3149 = sbr.rel (%p3147) target = $region36
      $region35: #{_lambda_.2} parent=27 // pred_region
        _
      $region36: #{_lambda_.2} parent=27 // pred_fallthru
        _
      // Predicated region
      $region37: #{_lambda_.2} parent=27 // pred_check
        %p3150 = pneg %p120
      $region38: #{_lambda_.2} parent=27 // pred_check_branch
        %3152 = sbr.rel (%p3150) target = $region40
      $region39: #{_lambda_.2} parent=27 // pred_region
        _
      $region40: #{_lambda_.2} parent=27 // pred_fallthru
        _
    $region28: #{_lambda_.2} parent=5 // pred_fallthru
      _
    %p3153 = scmp.le.s32.totalorder 2, %s10
    // Predicated region
    $region41: #{_lambda_.2} parent=5 // pred_check
      %p3154 = pneg %p3153
    $region42: #{_lambda_.2} parent=5 // pred_check_branch
      %3156 = sbr.rel (%p3154) target = $region44
    $region43: #{_lambda_.2} parent=5 // pred_region
      %s3157 = ssub.s32 %s10, 2
      // Predicated region
      $region45: #{_lambda_.2} parent=43 // pred_check
        %p3158 = pneg %p100
      $region46: #{_lambda_.2} parent=43 // pred_check_branch
        %3160 = sbr.rel (%p3158) target = $region48
      $region47: #{_lambda_.2} parent=43 // pred_region
        %p3161 = scmp.lt.s32.totalorder %s21, 3
        %s3162 = scalar_select %p3161, %s21, 3
        %s3163 = smul.addr %s3162, 2
        %s3164 = scalar_lea.vmem %s2, %s3163
      $region48: #{_lambda_.2} parent=43 // pred_fallthru
        _
      // Predicated region
      $region49: #{_lambda_.2} parent=43 // pred_check
        %p3165 = pneg %p126
      $region50: #{_lambda_.2} parent=43 // pred_check_branch
        %3167 = sbr.rel (%p3165) target = $region52
      $region51: #{_lambda_.2} parent=43 // pred_region
        %p3168 = scmp.lt.s32.totalorder %s21, 3
        %s3169 = scalar_select %p3168, %s21, 3
        %s3170 = smul.addr %s3169, 2
        %s3171 = scalar_lea.vmem %s3, %s3170
      $region52: #{_lambda_.2} parent=43 // pred_fallthru
        _
    $region44: #{_lambda_.2} parent=5 // pred_fallthru
      _
  $region6: #{_lambda_.2} parent=0 // loop_footer
    %s14 = sadd.s32 1, %s10
  $region7: #{_lambda_.2} parent=0 // loop_footer_branch
    %9 = sbr.rel target = $region3
  $region8: #{_lambda_.2} parent=0 // loop_exit
    _

// kernel: _lambda_.3
$region0: #{_lambda_.3}
  #allocation0 [shape = 'u32[]', space=smem, size = 0x4, offset = 0x4, fixed_abs, tag = 'smem constant byte address 0x4 - core index']
  #allocation1 [shape = 'u32[72,128]{1,0:T(1,128)}', space=vmem, size = 0x9000, scoped, tag = 'internal scratch']
  %s0 = inlined_call_operand.vmem [shape: f32[4,256], index: 0, kind: input, shape index: {}]
  %s1 = inlined_call_operand.vmem [shape: f32[4,256], index: 1, kind: input, shape index: {}]
  %s2 = inlined_call_operand.vmem [shape: f32[1,256], index: 2, kind: input, shape index: {}]
  %s3 = inlined_call_operand.vmem [shape: f32[1,256], index: 3, kind: input, shape index: {}]
  %s4 = inlined_call_operand.vmem [shape: f32[256,32], index: 4, kind: input, shape index: {}]
  %s5 = inlined_call_operand.vmem [shape: f32[1,32], index: 5, kind: input, shape index: {}]
  %s6 = inlined_call_operand.vmem [shape: f32[1,32], index: 6, kind: input, shape index: {}]
  %s7 = inlined_call_operand.vmem [shape: f32[32,16], index: 7, kind: input, shape index: {}]
  %s8 = inlined_call_operand.vmem [shape: f32[1,16], index: 8, kind: input, shape index: {}]
  %s9 = inlined_call_operand.vmem [shape: f32[1,16], index: 9, kind: input, shape index: {}]
  %s10 = inlined_call_operand.hbm [shape: f32[4,16], index: 10, kind: output, shape index: {}]
  %s11 = sld [smem:[#allocation0]]
  $region50: #{_lambda_.3} parent=0
    _
  %s13 = ssub.s32 1, %s11
  %s14 = scalar_select 0, %s13, %s11
  $region1: #{_lambda_.3} parent=0
    #allocation2 [shape = 'u8[2048]{0}', space=vmem, size = 0x800, scoped, tag = 'output window, operand 0, single buffered']
    #allocation3 [shape = 's32[1]{0}', space=sflag, size = 0x4, scoped, tag = 'scoped memory for _lambda_.3']
    %15 = vsyncpa [#allocation3], 0
    // Predicated region
    $region2: #{_lambda_.3} parent=1 // pred_check
      _
    $region3: #{_lambda_.3} parent=1 // pred_check_branch
      %17 = sbr.rel (0) target = $region5
    $region4: #{_lambda_.3} parent=1 // pred_region
      _
    $region5: #{_lambda_.3} parent=1 // pred_fallthru
      _
    // Predicated region
    $region6: #{_lambda_.3} parent=1 // pred_check
      _
    $region7: #{_lambda_.3} parent=1 // pred_check_branch
      %19 = sbr.rel (0) target = $region9
    $region8: #{_lambda_.3} parent=1 // pred_region
      _
    $region9: #{_lambda_.3} parent=1 // pred_fallthru
      _
    // Predicated region
    $region10: #{_lambda_.3} parent=1 // pred_check
      _
    $region11: #{_lambda_.3} parent=1 // pred_check_branch
      %21 = sbr.rel (0) target = $region13
    $region12: #{_lambda_.3} parent=1 // pred_region
      _
    $region13: #{_lambda_.3} parent=1 // pred_fallthru
      _
    // Predicated region
    $region14: #{_lambda_.3} parent=1 // pred_check
      _
    $region15: #{_lambda_.3} parent=1 // pred_check_branch
      %23 = sbr.rel (0) target = $region17
    $region16: #{_lambda_.3} parent=1 // pred_region
      _
    $region17: #{_lambda_.3} parent=1 // pred_fallthru
      _
    // Predicated region
    $region18: #{_lambda_.3} parent=1 // pred_check
      _
    $region19: #{_lambda_.3} parent=1 // pred_check_branch
      %25 = sbr.rel (0) target = $region21
    $region20: #{_lambda_.3} parent=1 // pred_region
      _
    $region21: #{_lambda_.3} parent=1 // pred_fallthru
      _
    // Predicated region
    $region22: #{_lambda_.3} parent=1 // pred_check
      _
    $region23: #{_lambda_.3} parent=1 // pred_check_branch
      %27 = sbr.rel (0) target = $region25
    $region24: #{_lambda_.3} parent=1 // pred_region
      _
    $region25: #{_lambda_.3} parent=1 // pred_fallthru
      _
    // Predicated region
    $region26: #{_lambda_.3} parent=1 // pred_check
      _
    $region27: #{_lambda_.3} parent=1 // pred_check_branch
      %29 = sbr.rel (0) target = $region29
    $region28: #{_lambda_.3} parent=1 // pred_region
      _
    $region29: #{_lambda_.3} parent=1 // pred_fallthru
      _
    // Predicated region
    $region30: #{_lambda_.3} parent=1 // pred_check
      _
    $region31: #{_lambda_.3} parent=1 // pred_check_branch
      %31 = sbr.rel (0) target = $region33
    $region32: #{_lambda_.3} parent=1 // pred_region
      _
    $region33: #{_lambda_.3} parent=1 // pred_fallthru
      _
    // Predicated region
    $region34: #{_lambda_.3} parent=1 // pred_check
      _
    $region35: #{_lambda_.3} parent=1 // pred_check_branch
      %33 = sbr.rel (0) target = $region37
    $region36: #{_lambda_.3} parent=1 // pred_region
      _
    $region37: #{_lambda_.3} parent=1 // pred_fallthru
      _
    // Predicated region
    $region38: #{_lambda_.3} parent=1 // pred_check
      _
    $region39: #{_lambda_.3} parent=1 // pred_check_branch
      %35 = sbr.rel (0) target = $region41
    $region40: #{_lambda_.3} parent=1 // pred_region
      _
    $region41: #{_lambda_.3} parent=1 // pred_fallthru
      _
    %v36 = vld [vmem:[%s0] sm:$0xff]
    %38 = vst [vmem:[#allocation1] ss:$2 sm:$0xff] %v36
    %v39 = vld.sshfl [vmem:[#allocation1] sm:$0xff pattern:$0x75316420]
    %v40 = vld.sshfl [vmem:[#allocation1 + $0x8] sm:$0xff pattern:$0x75316420]
    %vm43 = vcmask 1043456
    %v44 = vsel %vm43, %v39, 0.0
    %v45 = vrot.slane %v44, 4
    %v46 = vadd.f32 %v44, %v45
    %v47 = vrot.slane %v46, 2
    %v48 = vadd.f32 %v46, %v47
    %v49 = vrot.slane %v48, 1
    %v50 = vadd.f32 %v48, %v49
    %v51 = vsel %vm43, %v40, 0.0
    %v52 = vrot.slane %v51, 4
    %v53 = vadd.f32 %v51, %v52
    %v54 = vrot.slane %v53, 2
    %v55 = vadd.f32 %v53, %v54
    %v56 = vrot.slane %v55, 1
    %v57 = vadd.f32 %v55, %v56
    %v58 = vmul.f32 %v50, 0.0625
    %v59 = vmul.f32 %v57, 0.0625
    %v60 = vld [vmem:[%s1] sm:$0xff]
    %62 = vst [vmem:[#allocation1] ss:$2 sm:$0xff] %v60
    %v63 = vld.sshfl [vmem:[#allocation1] sm:$0xff pattern:$0x75316420]
    %v64 = vld.sshfl [vmem:[#allocation1 + $0x8] sm:$0xff pattern:$0x75316420]
    %v67 = vsel %vm43, %v63, 0.0
    %v68 = vrot.slane %v67, 4
    %v69 = vadd.f32 %v67, %v68
    %v70 = vrot.slane %v69, 2
    %v71 = vadd.f32 %v69, %v70
    %v72 = vrot.slane %v71, 1
    %v73 = vadd.f32 %v71, %v72
    %v74 = vsel %vm43, %v64, 0.0
    %v75 = vrot.slane %v74, 4
    %v76 = vadd.f32 %v74, %v75
    %v77 = vrot.slane %v76, 2
    %v78 = vadd.f32 %v76, %v77
    %v79 = vrot.slane %v78, 1
    %v80 = vadd.f32 %v78, %v79
    %v81 = vmul.f32 %v73, 0.0625
    %v82 = vmul.f32 %v80, 0.0625
    %v83 = vmul.f32 %v58, %v58
    %v84 = vmul.f32 %v59, %v59
    %v85 = vsub.f32 %v81, %v83
    %v86 = vsub.f32 %v82, %v84
    %v87 = vmax.f32 %v85, 0.0
    %v88 = vmax.f32 %v86, 0.0
    %v89 = vmul.f32 %v36, 0.25
    %v92 = vrot.slane %v59, 4
    %v93 = vsel %vm43, %v58, %v92
    %v95 = vsub.f32 %v89, %v93
    %v96 = vadd.f32 %v87, 1e-05
    %v97 = vadd.f32 %v88, 1e-05
    %v98 = vrsqrt.pop %v96
    %v99 = vmul.f32 %v98, %v96
    %v100 = vmul.f32 %v99, %v98
    %v101 = vmul.f32 0.5, %v100
    %v102 = vsub.f32 1.5, %v101
    %v103 = vmul.f32 %v98, %v102
    %vm104 = vweird.f32 %v96
    %vm105 = vweird.f32 %v98
    %vm106 = vmor %vm104, %vm105
    %v107 = vsel %vm106, %v98, %v103
    %v108 = vrsqrt.pop %v97
    %v109 = vmul.f32 %v108, %v97
    %v110 = vmul.f32 %v109, %v108
    %v111 = vmul.f32 0.5, %v110
    %v112 = vsub.f32 1.5, %v111
    %v113 = vmul.f32 %v108, %v112
    %vm114 = vweird.f32 %v97
    %vm115 = vweird.f32 %v108
    %vm116 = vmor %vm114, %vm115
    %v117 = vsel %vm116, %v108, %v113
    %v120 = vrot.slane %v117, 4
    %v121 = vsel %vm43, %v107, %v120
    %v123 = vmul.f32 %v95, %v121
    %v124 = vld [vmem:[%s2] sm:$0x3]
    %v126 = vperm.slane %v124, 0
    %v127 = vperm.slane %v124, 1
    %v128 = vrot.slane %v127, 4
    %v129 = vsel %vm43, %v126, %v128
    %v131 = vmul.f32 %v123, %v129
    %v132 = vld [vmem:[%s3] sm:$0x3]
    %v134 = vperm.slane %v132, 0
    %v135 = vperm.slane %v132, 1
    %v136 = vrot.slane %v135, 4
    %v137 = vsel %vm43, %v134, %v136
    %v139 = vadd.f32 %v131, %v137
    %v140 = vld [vmem:[%s4] sm:$0xff]
    %v141 = vld [vmem:[%s4 + $0x8] sm:$0xff]
    %v142 = vld [vmem:[%s4 + $0x10] sm:$0xff]
    %v143 = vld [vmem:[%s4 + $0x18] sm:$0xff]
    %v144 = vld [vmem:[%s4 + $0x20] sm:$0xff]
    %v145 = vld [vmem:[%s4 + $0x28] sm:$0xff]
    %v146 = vld [vmem:[%s4 + $0x30] sm:$0xff]
    %v147 = vld [vmem:[%s4 + $0x38] sm:$0xff]
    %v148 = vld [vmem:[%s4 + $0x40] sm:$0xff]
    %v149 = vld [vmem:[%s4 + $0x48] sm:$0xff]
    %v150 = vld [vmem:[%s4 + $0x50] sm:$0xff]
    %v151 = vld [vmem:[%s4 + $0x58] sm:$0xff]
    %v152 = vld [vmem:[%s4 + $0x60] sm:$0xff]
    %v153 = vld [vmem:[%s4 + $0x68] sm:$0xff]
    %v154 = vld [vmem:[%s4 + $0x70] sm:$0xff]
    %v155 = vld [vmem:[%s4 + $0x78] sm:$0xff]
    %v156 = vld [vmem:[%s4 + $0x80] sm:$0xff]
    %v157 = vld [vmem:[%s4 + $0x88] sm:$0xff]
    %v158 = vld [vmem:[%s4 + $0x90] sm:$0xff]
    %v159 = vld [vmem:[%s4 + $0x98] sm:$0xff]
    %v160 = vld [vmem:[%s4 + $0xa0] sm:$0xff]
    %v161 = vld [vmem:[%s4 + $0xa8] sm:$0xff]
    %v162 = vld [vmem:[%s4 + $0xb0] sm:$0xff]
    %v163 = vld [vmem:[%s4 + $0xb8] sm:$0xff]
    %v164 = vld [vmem:[%s4 + $0xc0] sm:$0xff]
    %v165 = vld [vmem:[%s4 + $0xc8] sm:$0xff]
    %v166 = vld [vmem:[%s4 + $0xd0] sm:$0xff]
    %v167 = vld [vmem:[%s4 + $0xd8] sm:$0xff]
    %v168 = vld [vmem:[%s4 + $0xe0] sm:$0xff]
    %v169 = vld [vmem:[%s4 + $0xe8] sm:$0xff]
    %v170 = vld [vmem:[%s4 + $0xf0] sm:$0xff]
    %v171 = vld [vmem:[%s4 + $0xf8] sm:$0xff]
    %173 = vst [vmem:[#allocation1] ss:$2 sm:$0xff] %v139
    %v174 = vld.sshfl [vmem:[#allocation1] sm:$0xff pattern:$0x75316420]
    %v175 = vld.sshfl [vmem:[#allocation1 + $0x8] sm:$0xff pattern:$0x75316420]
    %v178 = vand.u32 %v155, 4294901760
    %179 = vmatpush.msra.mxu0 %v178
    %v180 = vand.u32 %v154, 4294901760
    %181 = vmatpush.msra.mxu0 %v180
    %v182 = vand.u32 %v153, 4294901760
    %183 = vmatpush.msra.mxu0 %v182
    %v184 = vand.u32 %v152, 4294901760
    %185 = vmatpush.msra.mxu0 %v184
    %v186 = vand.u32 %v151, 4294901760
    %187 = vmatpush.msra.mxu0 %v186
    %v188 = vand.u32 %v150, 4294901760
    %189 = vmatpush.msra.mxu0 %v188
    %v190 = vand.u32 %v149, 4294901760
    %191 = vmatpush.msra.mxu0 %v190
    %v192 = vand.u32 %v148, 4294901760
    %193 = vmatpush.msra.mxu0 %v192
    %v194 = vand.u32 %v147, 4294901760
    %195 = vmatpush.msra.mxu0 %v194
    %v196 = vand.u32 %v146, 4294901760
    %197 = vmatpush.msra.mxu0 %v196
    %v198 = vand.u32 %v145, 4294901760
    %199 = vmatpush.msra.mxu0 %v198
    %v200 = vand.u32 %v144, 4294901760
    %201 = vmatpush.msra.mxu0 %v200
    %v202 = vand.u32 %v143, 4294901760
    %203 = vmatpush.msra.mxu0 %v202
    %v204 = vand.u32 %v142, 4294901760
    %205 = vmatpush.msra.mxu0 %v204
    %v206 = vand.u32 %v141, 4294901760
    %207 = vmatpush.msra.mxu0 %v206
    %v208 = vand.u32 %v140, 4294901760
    %209 = vmatpush.msra.mxu0 %v208
    %v210 = vand.u32 %v174, 4294901760
    %v211 = vsub.f32 %v174, %v210
    %v212 = vand.u32 %v211, 4294901760
    %v213 = vsub.f32 %v211, %v212
    %v214 = vand.u32 %v213, 4294901760
    %215 = vmatmul.f32.gmra.mxu0 %v214
    %v216 = vpop.f32.mrf.mxu0
    %v217 = vadd.f32 0.0, %v216
    %218 = vdwg.mxu0
    %v219 = vand.u32 %v155, 4294901760
    %v220 = vsub.f32 %v155, %v219
    %v221 = vand.u32 %v220, 4294901760
    %v222 = vsub.f32 %v220, %v221
    %v223 = vand.u32 %v222, 4294901760
    %224 = vmatpush.msra.mxu0 %v223
    %v225 = vand.u32 %v154, 4294901760
    %v226 = vsub.f32 %v154, %v225
    %v227 = vand.u32 %v226, 4294901760
    %v228 = vsub.f32 %v226, %v227
    %v229 = vand.u32 %v228, 4294901760
    %230 = vmatpush.msra.mxu0 %v229
    %v231 = vand.u32 %v153, 4294901760
    %v232 = vsub.f32 %v153, %v231
    %v233 = vand.u32 %v232, 4294901760
    %v234 = vsub.f32 %v232, %v233
    %v235 = vand.u32 %v234, 4294901760
    %236 = vmatpush.msra.mxu0 %v235
    %v237 = vand.u32 %v152, 4294901760
    %v238 = vsub.f32 %v152, %v237
    %v239 = vand.u32 %v238, 4294901760
    %v240 = vsub.f32 %v238, %v239
    %v241 = vand.u32 %v240, 4294901760
    %242 = vmatpush.msra.mxu0 %v241
    %v243 = vand.u32 %v151, 4294901760
    %v244 = vsub.f32 %v151, %v243
    %v245 = vand.u32 %v244, 4294901760
    %v246 = vsub.f32 %v244, %v245
    %v247 = vand.u32 %v246, 4294901760
    %248 = vmatpush.msra.mxu0 %v247
    %v249 = vand.u32 %v150, 4294901760
    %v250 = vsub.f32 %v150, %v249
    %v251 = vand.u32 %v250, 4294901760
    %v252 = vsub.f32 %v250, %v251
    %v253 = vand.u32 %v252, 4294901760
    %254 = vmatpush.msra.mxu0 %v253
    %v255 = vand.u32 %v149, 4294901760
    %v256 = vsub.f32 %v149, %v255
    %v257 = vand.u32 %v256, 4294901760
    %v258 = vsub.f32 %v256, %v257
    %v259 = vand.u32 %v258, 4294901760
    %260 = vmatpush.msra.mxu0 %v259
    %v261 = vand.u32 %v148, 4294901760
    %v262 = vsub.f32 %v148, %v261
    %v263 = vand.u32 %v262, 4294901760
    %v264 = vsub.f32 %v262, %v263
    %v265 = vand.u32 %v264, 4294901760
    %266 = vmatpush.msra.mxu0 %v265
    %v267 = vand.u32 %v147, 4294901760
    %v268 = vsub.f32 %v147, %v267
    %v269 = vand.u32 %v268, 4294901760
    %v270 = vsub.f32 %v268, %v269
    %v271 = vand.u32 %v270, 4294901760
    %272 = vmatpush.msra.mxu0 %v271
    %v273 = vand.u32 %v146, 4294901760
    %v274 = vsub.f32 %v146, %v273
    %v275 = vand.u32 %v274, 4294901760
    %v276 = vsub.f32 %v274, %v275
    %v277 = vand.u32 %v276, 4294901760
    %278 = vmatpush.msra.mxu0 %v277
    %v279 = vand.u32 %v145, 4294901760
    %v280 = vsub.f32 %v145, %v279
    %v281 = vand.u32 %v280, 4294901760
    %v282 = vsub.f32 %v280, %v281
    %v283 = vand.u32 %v282, 4294901760
    %284 = vmatpush.msra.mxu0 %v283
    %v285 = vand.u32 %v144, 4294901760
    %v286 = vsub.f32 %v144, %v285
    %v287 = vand.u32 %v286, 4294901760
    %v288 = vsub.f32 %v286, %v287
    %v289 = vand.u32 %v288, 4294901760
    %290 = vmatpush.msra.mxu0 %v289
    %v291 = vand.u32 %v143, 4294901760
    %v292 = vsub.f32 %v143, %v291
    %v293 = vand.u32 %v292, 4294901760
    %v294 = vsub.f32 %v292, %v293
    %v295 = vand.u32 %v294, 4294901760
    %296 = vmatpush.msra.mxu0 %v295
    %v297 = vand.u32 %v142, 4294901760
    %v298 = vsub.f32 %v142, %v297
    %v299 = vand.u32 %v298, 4294901760
    %v300 = vsub.f32 %v298, %v299
    %v301 = vand.u32 %v300, 4294901760
    %302 = vmatpush.msra.mxu0 %v301
    %v303 = vand.u32 %v141, 4294901760
    %v304 = vsub.f32 %v141, %v303
    %v305 = vand.u32 %v304, 4294901760
    %v306 = vsub.f32 %v304, %v305
    %v307 = vand.u32 %v306, 4294901760
    %308 = vmatpush.msra.mxu0 %v307
    %v309 = vand.u32 %v140, 4294901760
    %v310 = vsub.f32 %v140, %v309
    %v311 = vand.u32 %v310, 4294901760
    %v312 = vsub.f32 %v310, %v311
    %v313 = vand.u32 %v312, 4294901760
    %314 = vmatpush.msra.mxu0 %v313
    %v315 = vand.u32 %v174, 4294901760
    %316 = vmatmul.f32.gmra.mxu0 %v315
    %v317 = vpop.f32.mrf.mxu0
    %v318 = vadd.f32 %v217, %v317
    %319 = vdwg.mxu0
    %v320 = vand.u32 %v155, 4294901760
    %v321 = vsub.f32 %v155, %v320
    %322 = vmatpush.msra.mxu0 %v321
    %v323 = vand.u32 %v154, 4294901760
    %v324 = vsub.f32 %v154, %v323
    %325 = vmatpush.msra.mxu0 %v324
    %v326 = vand.u32 %v153, 4294901760
    %v327 = vsub.f32 %v153, %v326
    %328 = vmatpush.msra.mxu0 %v327
    %v329 = vand.u32 %v152, 4294901760
    %v330 = vsub.f32 %v152, %v329
    %331 = vmatpush.msra.mxu0 %v330
    %v332 = vand.u32 %v151, 4294901760
    %v333 = vsub.f32 %v151, %v332
    %334 = vmatpush.msra.mxu0 %v333
    %v335 = vand.u32 %v150, 4294901760
    %v336 = vsub.f32 %v150, %v335
    %337 = vmatpush.msra.mxu0 %v336
    %v338 = vand.u32 %v149, 4294901760
    %v339 = vsub.f32 %v149, %v338
    %340 = vmatpush.msra.mxu0 %v339
    %v341 = vand.u32 %v148, 4294901760
    %v342 = vsub.f32 %v148, %v341
    %343 = vmatpush.msra.mxu0 %v342
    %v344 = vand.u32 %v147, 4294901760
    %v345 = vsub.f32 %v147, %v344
    %346 = vmatpush.msra.mxu0 %v345
    %v347 = vand.u32 %v146, 4294901760
    %v348 = vsub.f32 %v146, %v347
    %349 = vmatpush.msra.mxu0 %v348
    %v350 = vand.u32 %v145, 4294901760
    %v351 = vsub.f32 %v145, %v350
    %352 = vmatpush.msra.mxu0 %v351
    %v353 = vand.u32 %v144, 4294901760
    %v354 = vsub.f32 %v144, %v353
    %355 = vmatpush.msra.mxu0 %v354
    %v356 = vand.u32 %v143, 4294901760
    %v357 = vsub.f32 %v143, %v356
    %358 = vmatpush.msra.mxu0 %v357
    %v359 = vand.u32 %v142, 4294901760
    %v360 = vsub.f32 %v142, %v359
    %361 = vmatpush.msra.mxu0 %v360
    %v362 = vand.u32 %v141, 4294901760
    %v363 = vsub.f32 %v141, %v362
    %364 = vmatpush.msra.mxu0 %v363
    %v365 = vand.u32 %v140, 4294901760
    %v366 = vsub.f32 %v140, %v365
    %367 = vmatpush.msra.mxu0 %v366
    %v368 = vand.u32 %v174, 4294901760
    %v369 = vsub.f32 %v174, %v368
    %370 = vmatmul.f32.gmra.mxu0 %v369
    %v371 = vpop.f32.mrf.mxu0
    %v372 = vadd.f32 %v318, %v371
    %373 = vdwg.mxu0
    %v374 = vand.u32 %v155, 4294901760
    %375 = vmatpush.msra.mxu0 %v374
    %v376 = vand.u32 %v154, 4294901760
    %377 = vmatpush.msra.mxu0 %v376
    %v378 = vand.u32 %v153, 4294901760
    %379 = vmatpush.msra.mxu0 %v378
    %v380 = vand.u32 %v152, 4294901760
    %381 = vmatpush.msra.mxu0 %v380
    %v382 = vand.u32 %v151, 4294901760
    %383 = vmatpush.msra.mxu0 %v382
    %v384 = vand.u32 %v150, 4294901760
    %385 = vmatpush.msra.mxu0 %v384
    %v386 = vand.u32 %v149, 4294901760
    %387 = vmatpush.msra.mxu0 %v386
    %v388 = vand.u32 %v148, 4294901760
    %389 = vmatpush.msra.mxu0 %v388
    %v390 = vand.u32 %v147, 4294901760
    %391 = vmatpush.msra.mxu0 %v390
    %v392 = vand.u32 %v146, 4294901760
    %393 = vmatpush.msra.mxu0 %v392
    %v394 = vand.u32 %v145, 4294901760
    %395 = vmatpush.msra.mxu0 %v394
    %v396 = vand.u32 %v144, 4294901760
    %397 = vmatpush.msra.mxu0 %v396
    %v398 = vand.u32 %v143, 4294901760
    %399 = vmatpush.msra.mxu0 %v398
    %v400 = vand.u32 %v142, 4294901760
    %401 = vmatpush.msra.mxu0 %v400
    %v402 = vand.u32 %v141, 4294901760
    %403 = vmatpush.msra.mxu0 %v402
    %v404 = vand.u32 %v140, 4294901760
    %405 = vmatpush.msra.mxu0 %v404
    %v406 = vand.u32 %v174, 4294901760
    %v407 = vsub.f32 %v174, %v406
    %v408 = vand.u32 %v407, 4294901760
    %409 = vmatmul.f32.gmra.mxu0 %v408
    %v410 = vpop.f32.mrf.mxu0
    %v411 = vadd.f32 %v372, %v410
    %412 = vdwg.mxu0
    %v413 = vand.u32 %v155, 4294901760
    %v414 = vsub.f32 %v155, %v413
    %v415 = vand.u32 %v414, 4294901760
    %416 = vmatpush.msra.mxu0 %v415
    %v417 = vand.u32 %v154, 4294901760
    %v418 = vsub.f32 %v154, %v417
    %v419 = vand.u32 %v418, 4294901760
    %420 = vmatpush.msra.mxu0 %v419
    %v421 = vand.u32 %v153, 4294901760
    %v422 = vsub.f32 %v153, %v421
    %v423 = vand.u32 %v422, 4294901760
    %424 = vmatpush.msra.mxu0 %v423
    %v425 = vand.u32 %v152, 4294901760
    %v426 = vsub.f32 %v152, %v425
    %v427 = vand.u32 %v426, 4294901760
    %428 = vmatpush.msra.mxu0 %v427
    %v429 = vand.u32 %v151, 4294901760
    %v430 = vsub.f32 %v151, %v429
    %v431 = vand.u32 %v430, 4294901760
    %432 = vmatpush.msra.mxu0 %v431
    %v433 = vand.u32 %v150, 4294901760
    %v434 = vsub.f32 %v150, %v433
    %v435 = vand.u32 %v434, 4294901760
    %436 = vmatpush.msra.mxu0 %v435
    %v437 = vand.u32 %v149, 4294901760
    %v438 = vsub.f32 %v149, %v437
    %v439 = vand.u32 %v438, 4294901760
    %440 = vmatpush.msra.mxu0 %v439
    %v441 = vand.u32 %v148, 4294901760
    %v442 = vsub.f32 %v148, %v441
    %v443 = vand.u32 %v442, 4294901760
    %444 = vmatpush.msra.mxu0 %v443
    %v445 = vand.u32 %v147, 4294901760
    %v446 = vsub.f32 %v147, %v445
    %v447 = vand.u32 %v446, 4294901760
    %448 = vmatpush.msra.mxu0 %v447
    %v449 = vand.u32 %v146, 4294901760
    %v450 = vsub.f32 %v146, %v449
    %v451 = vand.u32 %v450, 4294901760
    %452 = vmatpush.msra.mxu0 %v451
    %v453 = vand.u32 %v145, 4294901760
    %v454 = vsub.f32 %v145, %v453
    %v455 = vand.u32 %v454, 4294901760
    %456 = vmatpush.msra.mxu0 %v455
    %v457 = vand.u32 %v144, 4294901760
    %v458 = vsub.f32 %v144, %v457
    %v459 = vand.u32 %v458, 4294901760
    %460 = vmatpush.msra.mxu0 %v459
    %v461 = vand.u32 %v143, 4294901760
    %v462 = vsub.f32 %v143, %v461
    %v463 = vand.u32 %v462, 4294901760
    %464 = vmatpush.msra.mxu0 %v463
    %v465 = vand.u32 %v142, 4294901760
    %v466 = vsub.f32 %v142, %v465
    %v467 = vand.u32 %v466, 4294901760
    %468 = vmatpush.msra.mxu0 %v467
    %v469 = vand.u32 %v141, 4294901760
    %v470 = vsub.f32 %v141, %v469
    %v471 = vand.u32 %v470, 4294901760
    %472 = vmatpush.msra.mxu0 %v471
    %v473 = vand.u32 %v140, 4294901760
    %v474 = vsub.f32 %v140, %v473
    %v475 = vand.u32 %v474, 4294901760
    %476 = vmatpush.msra.mxu0 %v475
    %v477 = vand.u32 %v174, 4294901760
    %478 = vmatmul.f32.gmra.mxu0 %v477
    %v479 = vpop.f32.mrf.mxu0
    %v480 = vadd.f32 %v411, %v479
    %481 = vdwg.mxu0
    %v482 = vand.u32 %v155, 4294901760
    %483 = vmatpush.msra.mxu0 %v482
    %v484 = vand.u32 %v154, 4294901760
    %485 = vmatpush.msra.mxu0 %v484
    %v486 = vand.u32 %v153, 4294901760
    %487 = vmatpush.msra.mxu0 %v486
    %v488 = vand.u32 %v152, 4294901760
    %489 = vmatpush.msra.mxu0 %v488
    %v490 = vand.u32 %v151, 4294901760
    %491 = vmatpush.msra.mxu0 %v490
    %v492 = vand.u32 %v150, 4294901760
    %493 = vmatpush.msra.mxu0 %v492
    %v494 = vand.u32 %v149, 4294901760
    %495 = vmatpush.msra.mxu0 %v494
    %v496 = vand.u32 %v148, 4294901760
    %497 = vmatpush.msra.mxu0 %v496
    %v498 = vand.u32 %v147, 4294901760
    %499 = vmatpush.msra.mxu0 %v498
    %v500 = vand.u32 %v146, 4294901760
    %501 = vmatpush.msra.mxu0 %v500
    %v502 = vand.u32 %v145, 4294901760
    %503 = vmatpush.msra.mxu0 %v502
    %v504 = vand.u32 %v144, 4294901760
    %505 = vmatpush.msra.mxu0 %v504
    %v506 = vand.u32 %v143, 4294901760
    %507 = vmatpush.msra.mxu0 %v506
    %v508 = vand.u32 %v142, 4294901760
    %509 = vmatpush.msra.mxu0 %v508
    %v510 = vand.u32 %v141, 4294901760
    %511 = vmatpush.msra.mxu0 %v510
    %v512 = vand.u32 %v140, 4294901760
    %513 = vmatpush.msra.mxu0 %v512
    %v514 = vand.u32 %v174, 4294901760
    %515 = vmatmul.f32.gmra.mxu0 %v514
    %v516 = vpop.f32.mrf.mxu0
    %v517 = vadd.f32 %v480, %v516
    %518 = vdwg.mxu0
    %v519 = vand.u32 %v171, 4294901760
    %520 = vmatpush.msra.mxu0 %v519
    %v521 = vand.u32 %v170, 4294901760
    %522 = vmatpush.msra.mxu0 %v521
    %v523 = vand.u32 %v169, 4294901760
    %524 = vmatpush.msra.mxu0 %v523
    %v525 = vand.u32 %v168, 4294901760
    %526 = vmatpush.msra.mxu0 %v525
    %v527 = vand.u32 %v167, 4294901760
    %528 = vmatpush.msra.mxu0 %v527
    %v529 = vand.u32 %v166, 4294901760
    %530 = vmatpush.msra.mxu0 %v529
    %v531 = vand.u32 %v165, 4294901760
    %532 = vmatpush.msra.mxu0 %v531
    %v533 = vand.u32 %v164, 4294901760
    %534 = vmatpush.msra.mxu0 %v533
    %v535 = vand.u32 %v163, 4294901760
    %536 = vmatpush.msra.mxu0 %v535
    %v537 = vand.u32 %v162, 4294901760
    %538 = vmatpush.msra.mxu0 %v537
    %v539 = vand.u32 %v161, 4294901760
    %540 = vmatpush.msra.mxu0 %v539
    %v541 = vand.u32 %v160, 4294901760
    %542 = vmatpush.msra.mxu0 %v541
    %v543 = vand.u32 %v159, 4294901760
    %544 = vmatpush.msra.mxu0 %v543
    %v545 = vand.u32 %v158, 4294901760
    %546 = vmatpush.msra.mxu0 %v545
    %v547 = vand.u32 %v157, 4294901760
    %548 = vmatpush.msra.mxu0 %v547
    %v549 = vand.u32 %v156, 4294901760
    %550 = vmatpush.msra.mxu0 %v549
    %v551 = vand.u32 %v175, 4294901760
    %v552 = vsub.f32 %v175, %v551
    %v553 = vand.u32 %v552, 4294901760
    %v554 = vsub.f32 %v552, %v553
    %v555 = vand.u32 %v554, 4294901760
    %556 = vmatmul.f32.gmra.mxu0 %v555
    %v557 = vpop.f32.mrf.mxu0
    %v558 = vadd.f32 %v517, %v557
    %559 = vdwg.mxu0
    %v560 = vand.u32 %v171, 4294901760
    %v561 = vsub.f32 %v171, %v560
    %v562 = vand.u32 %v561, 4294901760
    %v563 = vsub.f32 %v561, %v562
    %v564 = vand.u32 %v563, 4294901760
    %565 = vmatpush.msra.mxu0 %v564
    %v566 = vand.u32 %v170, 4294901760
    %v567 = vsub.f32 %v170, %v566
    %v568 = vand.u32 %v567, 4294901760
    %v569 = vsub.f32 %v567, %v568
    %v570 = vand.u32 %v569, 4294901760
    %571 = vmatpush.msra.mxu0 %v570
    %v572 = vand.u32 %v169, 4294901760
    %v573 = vsub.f32 %v169, %v572
    %v574 = vand.u32 %v573, 4294901760
    %v575 = vsub.f32 %v573, %v574
    %v576 = vand.u32 %v575, 4294901760
    %577 = vmatpush.msra.mxu0 %v576
    %v578 = vand.u32 %v168, 4294901760
    %v579 = vsub.f32 %v168, %v578
    %v580 = vand.u32 %v579, 4294901760
    %v581 = vsub.f32 %v579, %v580
    %v582 = vand.u32 %v581, 4294901760
    %583 = vmatpush.msra.mxu0 %v582
    %v584 = vand.u32 %v167, 4294901760
    %v585 = vsub.f32 %v167, %v584
    %v586 = vand.u32 %v585, 4294901760
    %v587 = vsub.f32 %v585, %v586
    %v588 = vand.u32 %v587, 4294901760
    %589 = vmatpush.msra.mxu0 %v588
    %v590 = vand.u32 %v166, 4294901760
    %v591 = vsub.f32 %v166, %v590
    %v592 = vand.u32 %v591, 4294901760
    %v593 = vsub.f32 %v591, %v592
    %v594 = vand.u32 %v593, 4294901760
    %595 = vmatpush.msra.mxu0 %v594
    %v596 = vand.u32 %v165, 4294901760
    %v597 = vsub.f32 %v165, %v596
    %v598 = vand.u32 %v597, 4294901760
    %v599 = vsub.f32 %v597, %v598
    %v600 = vand.u32 %v599, 4294901760
    %601 = vmatpush.msra.mxu0 %v600
    %v602 = vand.u32 %v164, 4294901760
    %v603 = vsub.f32 %v164, %v602
    %v604 = vand.u32 %v603, 4294901760
    %v605 = vsub.f32 %v603, %v604
    %v606 = vand.u32 %v605, 4294901760
    %607 = vmatpush.msra.mxu0 %v606
    %v608 = vand.u32 %v163, 4294901760
    %v609 = vsub.f32 %v163, %v608
    %v610 = vand.u32 %v609, 4294901760
    %v611 = vsub.f32 %v609, %v610
    %v612 = vand.u32 %v611, 4294901760
    %613 = vmatpush.msra.mxu0 %v612
    %v614 = vand.u32 %v162, 4294901760
    %v615 = vsub.f32 %v162, %v614
    %v616 = vand.u32 %v615, 4294901760
    %v617 = vsub.f32 %v615, %v616
    %v618 = vand.u32 %v617, 4294901760
    %619 = vmatpush.msra.mxu0 %v618
    %v620 = vand.u32 %v161, 4294901760
    %v621 = vsub.f32 %v161, %v620
    %v622 = vand.u32 %v621, 4294901760
    %v623 = vsub.f32 %v621, %v622
    %v624 = vand.u32 %v623, 4294901760
    %625 = vmatpush.msra.mxu0 %v624
    %v626 = vand.u32 %v160, 4294901760
    %v627 = vsub.f32 %v160, %v626
    %v628 = vand.u32 %v627, 4294901760
    %v629 = vsub.f32 %v627, %v628
    %v630 = vand.u32 %v629, 4294901760
    %631 = vmatpush.msra.mxu0 %v630
    %v632 = vand.u32 %v159, 4294901760
    %v633 = vsub.f32 %v159, %v632
    %v634 = vand.u32 %v633, 4294901760
    %v635 = vsub.f32 %v633, %v634
    %v636 = vand.u32 %v635, 4294901760
    %637 = vmatpush.msra.mxu0 %v636
    %v638 = vand.u32 %v158, 4294901760
    %v639 = vsub.f32 %v158, %v638
    %v640 = vand.u32 %v639, 4294901760
    %v641 = vsub.f32 %v639, %v640
    %v642 = vand.u32 %v641, 4294901760
    %643 = vmatpush.msra.mxu0 %v642
    %v644 = vand.u32 %v157, 4294901760
    %v645 = vsub.f32 %v157, %v644
    %v646 = vand.u32 %v645, 4294901760
    %v647 = vsub.f32 %v645, %v646
    %v648 = vand.u32 %v647, 4294901760
    %649 = vmatpush.msra.mxu0 %v648
    %v650 = vand.u32 %v156, 4294901760
    %v651 = vsub.f32 %v156, %v650
    %v652 = vand.u32 %v651, 4294901760
    %v653 = vsub.f32 %v651, %v652
    %v654 = vand.u32 %v653, 4294901760
    %655 = vmatpush.msra.mxu0 %v654
    %v656 = vand.u32 %v175, 4294901760
    %657 = vmatmul.f32.gmra.mxu0 %v656
    %v658 = vpop.f32.mrf.mxu0
    %v659 = vadd.f32 %v558, %v658
    %660 = vdwg.mxu0
    %v661 = vand.u32 %v171, 4294901760
    %v662 = vsub.f32 %v171, %v661
    %663 = vmatpush.msra.mxu0 %v662
    %v664 = vand.u32 %v170, 4294901760
    %v665 = vsub.f32 %v170, %v664
    %666 = vmatpush.msra.mxu0 %v665
    %v667 = vand.u32 %v169, 4294901760
    %v668 = vsub.f32 %v169, %v667
    %669 = vmatpush.msra.mxu0 %v668
    %v670 = vand.u32 %v168, 4294901760
    %v671 = vsub.f32 %v168, %v670
    %672 = vmatpush.msra.mxu0 %v671
    %v673 = vand.u32 %v167, 4294901760
    %v674 = vsub.f32 %v167, %v673
    %675 = vmatpush.msra.mxu0 %v674
    %v676 = vand.u32 %v166, 4294901760
    %v677 = vsub.f32 %v166, %v676
    %678 = vmatpush.msra.mxu0 %v677
    %v679 = vand.u32 %v165, 4294901760
    %v680 = vsub.f32 %v165, %v679
    %681 = vmatpush.msra.mxu0 %v680
    %v682 = vand.u32 %v164, 4294901760
    %v683 = vsub.f32 %v164, %v682
    %684 = vmatpush.msra.mxu0 %v683
    %v685 = vand.u32 %v163, 4294901760
    %v686 = vsub.f32 %v163, %v685
    %687 = vmatpush.msra.mxu0 %v686
    %v688 = vand.u32 %v162, 4294901760
    %v689 = vsub.f32 %v162, %v688
    %690 = vmatpush.msra.mxu0 %v689
    %v691 = vand.u32 %v161, 4294901760
    %v692 = vsub.f32 %v161, %v691
    %693 = vmatpush.msra.mxu0 %v692
    %v694 = vand.u32 %v160, 4294901760
    %v695 = vsub.f32 %v160, %v694
    %696 = vmatpush.msra.mxu0 %v695
    %v697 = vand.u32 %v159, 4294901760
    %v698 = vsub.f32 %v159, %v697
    %699 = vmatpush.msra.mxu0 %v698
    %v700 = vand.u32 %v158, 4294901760
    %v701 = vsub.f32 %v158, %v700
    %702 = vmatpush.msra.mxu0 %v701
    %v703 = vand.u32 %v157, 4294901760
    %v704 = vsub.f32 %v157, %v703
    %705 = vmatpush.msra.mxu0 %v704
    %v706 = vand.u32 %v156, 4294901760
    %v707 = vsub.f32 %v156, %v706
    %708 = vmatpush.msra.mxu0 %v707
    %v709 = vand.u32 %v175, 4294901760
    %v710 = vsub.f32 %v175, %v709
    %711 = vmatmul.f32.gmra.mxu0 %v710
    %v712 = vpop.f32.mrf.mxu0
    %v713 = vadd.f32 %v659, %v712
    %714 = vdwg.mxu0
    %v715 = vand.u32 %v171, 4294901760
    %716 = vmatpush.msra.mxu0 %v715
    %v717 = vand.u32 %v170, 4294901760
    %718 = vmatpush.msra.mxu0 %v717
    %v719 = vand.u32 %v169, 4294901760
    %720 = vmatpush.msra.mxu0 %v719
    %v721 = vand.u32 %v168, 4294901760
    %722 = vmatpush.msra.mxu0 %v721
    %v723 = vand.u32 %v167, 4294901760
    %724 = vmatpush.msra.mxu0 %v723
    %v725 = vand.u32 %v166, 4294901760
    %726 = vmatpush.msra.mxu0 %v725
    %v727 = vand.u32 %v165, 4294901760
    %728 = vmatpush.msra.mxu0 %v727
    %v729 = vand.u32 %v164, 4294901760
    %730 = vmatpush.msra.mxu0 %v729
    %v731 = vand.u32 %v163, 4294901760
    %732 = vmatpush.msra.mxu0 %v731
    %v733 = vand.u32 %v162, 4294901760
    %734 = vmatpush.msra.mxu0 %v733
    %v735 = vand.u32 %v161, 4294901760
    %736 = vmatpush.msra.mxu0 %v735
    %v737 = vand.u32 %v160, 4294901760
    %738 = vmatpush.msra.mxu0 %v737
    %v739 = vand.u32 %v159, 4294901760
    %740 = vmatpush.msra.mxu0 %v739
    %v741 = vand.u32 %v158, 4294901760
    %742 = vmatpush.msra.mxu0 %v741
    %v743 = vand.u32 %v157, 4294901760
    %744 = vmatpush.msra.mxu0 %v743
    %v745 = vand.u32 %v156, 4294901760
    %746 = vmatpush.msra.mxu0 %v745
    %v747 = vand.u32 %v175, 4294901760
    %v748 = vsub.f32 %v175, %v747
    %v749 = vand.u32 %v748, 4294901760
    %750 = vmatmul.f32.gmra.mxu0 %v749
    %v751 = vpop.f32.mrf.mxu0
    %v752 = vadd.f32 %v713, %v751
    %753 = vdwg.mxu0
    %v754 = vand.u32 %v171, 4294901760
    %v755 = vsub.f32 %v171, %v754
    %v756 = vand.u32 %v755, 4294901760
    %757 = vmatpush.msra.mxu0 %v756
    %v758 = vand.u32 %v170, 4294901760
    %v759 = vsub.f32 %v170, %v758
    %v760 = vand.u32 %v759, 4294901760
    %761 = vmatpush.msra.mxu0 %v760
    %v762 = vand.u32 %v169, 4294901760
    %v763 = vsub.f32 %v169, %v762
    %v764 = vand.u32 %v763, 4294901760
    %765 = vmatpush.msra.mxu0 %v764
    %v766 = vand.u32 %v168, 4294901760
    %v767 = vsub.f32 %v168, %v766
    %v768 = vand.u32 %v767, 4294901760
    %769 = vmatpush.msra.mxu0 %v768
    %v770 = vand.u32 %v167, 4294901760
    %v771 = vsub.f32 %v167, %v770
    %v772 = vand.u32 %v771, 4294901760
    %773 = vmatpush.msra.mxu0 %v772
    %v774 = vand.u32 %v166, 4294901760
    %v775 = vsub.f32 %v166, %v774
    %v776 = vand.u32 %v775, 4294901760
    %777 = vmatpush.msra.mxu0 %v776
    %v778 = vand.u32 %v165, 4294901760
    %v779 = vsub.f32 %v165, %v778
    %v780 = vand.u32 %v779, 4294901760
    %781 = vmatpush.msra.mxu0 %v780
    %v782 = vand.u32 %v164, 4294901760
    %v783 = vsub.f32 %v164, %v782
    %v784 = vand.u32 %v783, 4294901760
    %785 = vmatpush.msra.mxu0 %v784
    %v786 = vand.u32 %v163, 4294901760
    %v787 = vsub.f32 %v163, %v786
    %v788 = vand.u32 %v787, 4294901760
    %789 = vmatpush.msra.mxu0 %v788
    %v790 = vand.u32 %v162, 4294901760
    %v791 = vsub.f32 %v162, %v790
    %v792 = vand.u32 %v791, 4294901760
    %793 = vmatpush.msra.mxu0 %v792
    %v794 = vand.u32 %v161, 4294901760
    %v795 = vsub.f32 %v161, %v794
    %v796 = vand.u32 %v795, 4294901760
    %797 = vmatpush.msra.mxu0 %v796
    %v798 = vand.u32 %v160, 4294901760
    %v799 = vsub.f32 %v160, %v798
    %v800 = vand.u32 %v799, 4294901760
    %801 = vmatpush.msra.mxu0 %v800
    %v802 = vand.u32 %v159, 4294901760
    %v803 = vsub.f32 %v159, %v802
    %v804 = vand.u32 %v803, 4294901760
    %805 = vmatpush.msra.mxu0 %v804
    %v806 = vand.u32 %v158, 4294901760
    %v807 = vsub.f32 %v158, %v806
    %v808 = vand.u32 %v807, 4294901760
    %809 = vmatpush.msra.mxu0 %v808
    %v810 = vand.u32 %v157, 4294901760
    %v811 = vsub.f32 %v157, %v810
    %v812 = vand.u32 %v811, 4294901760
    %813 = vmatpush.msra.mxu0 %v812
    %v814 = vand.u32 %v156, 4294901760
    %v815 = vsub.f32 %v156, %v814
    %v816 = vand.u32 %v815, 4294901760
    %817 = vmatpush.msra.mxu0 %v816
    %v818 = vand.u32 %v175, 4294901760
    %819 = vmatmul.f32.gmra.mxu0 %v818
    %v820 = vpop.f32.mrf.mxu0
    %v821 = vadd.f32 %v752, %v820
    %822 = vdwg.mxu0
    %v823 = vand.u32 %v171, 4294901760
    %824 = vmatpush.msra.mxu0 %v823
    %v825 = vand.u32 %v170, 4294901760
    %826 = vmatpush.msra.mxu0 %v825
    %v827 = vand.u32 %v169, 4294901760
    %828 = vmatpush.msra.mxu0 %v827
    %v829 = vand.u32 %v168, 4294901760
    %830 = vmatpush.msra.mxu0 %v829
    %v831 = vand.u32 %v167, 4294901760
    %832 = vmatpush.msra.mxu0 %v831
    %v833 = vand.u32 %v166, 4294901760
    %834 = vmatpush.msra.mxu0 %v833
    %v835 = vand.u32 %v165, 4294901760
    %836 = vmatpush.msra.mxu0 %v835
    %v837 = vand.u32 %v164, 4294901760
    %838 = vmatpush.msra.mxu0 %v837
    %v839 = vand.u32 %v163, 4294901760
    %840 = vmatpush.msra.mxu0 %v839
    %v841 = vand.u32 %v162, 4294901760
    %842 = vmatpush.msra.mxu0 %v841
    %v843 = vand.u32 %v161, 4294901760
    %844 = vmatpush.msra.mxu0 %v843
    %v845 = vand.u32 %v160, 4294901760
    %846 = vmatpush.msra.mxu0 %v845
    %v847 = vand.u32 %v159, 4294901760
    %848 = vmatpush.msra.mxu0 %v847
    %v849 = vand.u32 %v158, 4294901760
    %850 = vmatpush.msra.mxu0 %v849
    %v851 = vand.u32 %v157, 4294901760
    %852 = vmatpush.msra.mxu0 %v851
    %v853 = vand.u32 %v156, 4294901760
    %854 = vmatpush.msra.mxu0 %v853
    %v855 = vand.u32 %v175, 4294901760
    %856 = vmatmul.f32.gmra.mxu0 %v855
    %v857 = vpop.f32.mrf.mxu0
    %v858 = vadd.f32 %v821, %v857
    %859 = vdwg.mxu0
    %vm860 = vcmask 257024
    %v861 = vsel %vm860, %v858, 0.0
    %v862 = vrot.slane %v861, 4
    %v863 = vadd.f32 %v861, %v862
    %v864 = vrot.slane %v863, 2
    %v865 = vadd.f32 %v863, %v864
    %v866 = vrot.slane %v865, 1
    %v867 = vadd.f32 %v865, %v866
    %v868 = vrcp.pop 4.0
    %v869 = vmul.f32 4.0, %v868
    %v870 = vsub.f32 1.0, %v869
    %v871 = vmul.f32 %v868, %v870
    %v872 = vadd.f32 %v868, %v871
    %vm873 = vweird.f32 %v868
    %v874 = vsel %vm873, %v868, %v872
    %v875 = vmul.f32 %v867, %v874
    %v876 = vmul.f32 %v858, %v858
    %v877 = vsel %vm860, %v876, 0.0
    %v878 = vrot.slane %v877, 4
    %v879 = vadd.f32 %v877, %v878
    %v880 = vrot.slane %v879, 2
    %v881 = vadd.f32 %v879, %v880
    %v882 = vrot.slane %v881, 1
    %v883 = vadd.f32 %v881, %v882
    %v884 = vmul.f32 %v883, %v874
    %v885 = vmul.f32 %v875, %v875
    %v886 = vsub.f32 %v884, %v885
    %v887 = vmax.f32 %v886, 0.0
    %v888 = vsub.f32 %v858, %v875
    %v889 = vadd.f32 %v887, 1e-05
    %v890 = vrsqrt.pop %v889
    %v891 = vmul.f32 %v890, %v889
    %v892 = vmul.f32 %v891, %v890
    %v893 = vmul.f32 0.5, %v892
    %v894 = vsub.f32 1.5, %v893
    %v895 = vmul.f32 %v890, %v894
    %vm896 = vweird.f32 %v889
    %vm897 = vweird.f32 %v890
    %vm898 = vmor %vm896, %vm897
    %v899 = vsel %vm898, %v890, %v895
    %v900 = vmul.f32 %v888, %v899
    %v901 = vld [vmem:[%s5] sm:$0x1]
    %v903 = vperm.slane %v901, 0
    %v905 = vmul.f32 %v900, %v903
    %v906 = vld [vmem:[%s6] sm:$0x1]
    %v908 = vperm.slane %v906, 0
    %v910 = vadd.f32 %v905, %v908
    %v911 = vmax.f32 %v910, 0.0
    %v912 = vld [vmem:[%s7] sm:$0xff]
    %v913 = vld [vmem:[%s7 + $0x8] sm:$0xff]
    %v914 = vld [vmem:[%s7 + $0x10] sm:$0xff]
    %v915 = vld [vmem:[%s7 + $0x18] sm:$0xff]
    %vm916 = vcmask 261120
    %v918 = vsel %vm916, %v911, 0
    %920 = vmatpush.msra.mxu0 0.0
    %921 = vmatpush.msra.mxu0 0.0
    %922 = vmatpush.msra.mxu0 0.0
    %923 = vmatpush.msra.mxu0 0.0
    %924 = vmatpush.msra.mxu0 0.0
    %925 = vmatpush.msra.mxu0 0.0
    %926 = vmatpush.msra.mxu0 0.0
    %927 = vmatpush.msra.mxu0 0.0
    %928 = vmatpush.msra.mxu0 0.0
    %929 = vmatpush.msra.mxu0 0.0
    %930 = vmatpush.msra.mxu0 0.0
    %931 = vmatpush.msra.mxu0 0.0
    %v932 = vand.u32 %v915, 4294901760
    %933 = vmatpush.msra.mxu0 %v932
    %v934 = vand.u32 %v914, 4294901760
    %935 = vmatpush.msra.mxu0 %v934
    %v936 = vand.u32 %v913, 4294901760
    %937 = vmatpush.msra.mxu0 %v936
    %v938 = vand.u32 %v912, 4294901760
    %939 = vmatpush.msra.mxu0 %v938
    %v940 = vand.u32 %v918, 4294901760
    %v941 = vsub.f32 %v918, %v940
    %v942 = vand.u32 %v941, 4294901760
    %v943 = vsub.f32 %v941, %v942
    %v944 = vand.u32 %v943, 4294901760
    %945 = vmatmul.f32.gmra.mxu0 %v944
    %v946 = vpop.f32.mrf.mxu0
    %v947 = vadd.f32 0.0, %v946
    %948 = vdwg.mxu0
    %949 = vmatpush.msra.mxu0 0.0
    %950 = vmatpush.msra.mxu0 0.0
    %951 = vmatpush.msra.mxu0 0.0
    %952 = vmatpush.msra.mxu0 0.0
    %953 = vmatpush.msra.mxu0 0.0
    %954 = vmatpush.msra.mxu0 0.0
    %955 = vmatpush.msra.mxu0 0.0
    %956 = vmatpush.msra.mxu0 0.0
    %957 = vmatpush.msra.mxu0 0.0
    %958 = vmatpush.msra.mxu0 0.0
    %959 = vmatpush.msra.mxu0 0.0
    %960 = vmatpush.msra.mxu0 0.0
    %v961 = vand.u32 %v915, 4294901760
    %v962 = vsub.f32 %v915, %v961
    %v963 = vand.u32 %v962, 4294901760
    %v964 = vsub.f32 %v962, %v963
    %v965 = vand.u32 %v964, 4294901760
    %966 = vmatpush.msra.mxu0 %v965
    %v967 = vand.u32 %v914, 4294901760
    %v968 = vsub.f32 %v914, %v967
    %v969 = vand.u32 %v968, 4294901760
    %v970 = vsub.f32 %v968, %v969
    %v971 = vand.u32 %v970, 4294901760
    %972 = vmatpush.msra.mxu0 %v971
    %v973 = vand.u32 %v913, 4294901760
    %v974 = vsub.f32 %v913, %v973
    %v975 = vand.u32 %v974, 4294901760
    %v976 = vsub.f32 %v974, %v975
    %v977 = vand.u32 %v976, 4294901760
    %978 = vmatpush.msra.mxu0 %v977
    %v979 = vand.u32 %v912, 4294901760
    %v980 = vsub.f32 %v912, %v979
    %v981 = vand.u32 %v980, 4294901760
    %v982 = vsub.f32 %v980, %v981
    %v983 = vand.u32 %v982, 4294901760
    %984 = vmatpush.msra.mxu0 %v983
    %v985 = vand.u32 %v918, 4294901760
    %986 = vmatmul.f32.gmra.mxu0 %v985
    %v987 = vpop.f32.mrf.mxu0
    %v988 = vadd.f32 %v947, %v987
    %989 = vdwg.mxu0
    %990 = vmatpush.msra.mxu0 0.0
    %991 = vmatpush.msra.mxu0 0.0
    %992 = vmatpush.msra.mxu0 0.0
    %993 = vmatpush.msra.mxu0 0.0
    %994 = vmatpush.msra.mxu0 0.0
    %995 = vmatpush.msra.mxu0 0.0
    %996 = vmatpush.msra.mxu0 0.0
    %997 = vmatpush.msra.mxu0 0.0
    %998 = vmatpush.msra.mxu0 0.0
    %999 = vmatpush.msra.mxu0 0.0
    %1000 = vmatpush.msra.mxu0 0.0
    %1001 = vmatpush.msra.mxu0 0.0
    %v1002 = vand.u32 %v915, 4294901760
    %v1003 = vsub.f32 %v915, %v1002
    %1004 = vmatpush.msra.mxu0 %v1003
    %v1005 = vand.u32 %v914, 4294901760
    %v1006 = vsub.f32 %v914, %v1005
    %1007 = vmatpush.msra.mxu0 %v1006
    %v1008 = vand.u32 %v913, 4294901760
    %v1009 = vsub.f32 %v913, %v1008
    %1010 = vmatpush.msra.mxu0 %v1009
    %v1011 = vand.u32 %v912, 4294901760
    %v1012 = vsub.f32 %v912, %v1011
    %1013 = vmatpush.msra.mxu0 %v1012
    %v1014 = vand.u32 %v918, 4294901760
    %v1015 = vsub.f32 %v918, %v1014
    %1016 = vmatmul.f32.gmra.mxu0 %v1015
    %v1017 = vpop.f32.mrf.mxu0
    %v1018 = vadd.f32 %v988, %v1017
    %1019 = vdwg.mxu0
    %1020 = vmatpush.msra.mxu0 0.0
    %1021 = vmatpush.msra.mxu0 0.0
    %1022 = vmatpush.msra.mxu0 0.0
    %1023 = vmatpush.msra.mxu0 0.0
    %1024 = vmatpush.msra.mxu0 0.0
    %1025 = vmatpush.msra.mxu0 0.0
    %1026 = vmatpush.msra.mxu0 0.0
    %1027 = vmatpush.msra.mxu0 0.0
    %1028 = vmatpush.msra.mxu0 0.0
    %1029 = vmatpush.msra.mxu0 0.0
    %1030 = vmatpush.msra.mxu0 0.0
    %1031 = vmatpush.msra.mxu0 0.0
    %v1032 = vand.u32 %v915, 4294901760
    %1033 = vmatpush.msra.mxu0 %v1032
    %v1034 = vand.u32 %v914, 4294901760
    %1035 = vmatpush.msra.mxu0 %v1034
    %v1036 = vand.u32 %v913, 4294901760
    %1037 = vmatpush.msra.mxu0 %v1036
    %v1038 = vand.u32 %v912, 4294901760
    %1039 = vmatpush.msra.mxu0 %v1038
    %v1040 = vand.u32 %v918, 4294901760
    %v1041 = vsub.f32 %v918, %v1040
    %v1042 = vand.u32 %v1041, 4294901760
    %1043 = vmatmul.f32.gmra.mxu0 %v1042
    %v1044 = vpop.f32.mrf.mxu0
    %v1045 = vadd.f32 %v1018, %v1044
    %1046 = vdwg.mxu0
    %1047 = vmatpush.msra.mxu0 0.0
    %1048 = vmatpush.msra.mxu0 0.0
    %1049 = vmatpush.msra.mxu0 0.0
    %1050 = vmatpush.msra.mxu0 0.0
    %1051 = vmatpush.msra.mxu0 0.0
    %1052 = vmatpush.msra.mxu0 0.0
    %1053 = vmatpush.msra.mxu0 0.0
    %1054 = vmatpush.msra.mxu0 0.0
    %1055 = vmatpush.msra.mxu0 0.0
    %1056 = vmatpush.msra.mxu0 0.0
    %1057 = vmatpush.msra.mxu0 0.0
    %1058 = vmatpush.msra.mxu0 0.0
    %v1059 = vand.u32 %v915, 4294901760
    %v1060 = vsub.f32 %v915, %v1059
    %v1061 = vand.u32 %v1060, 4294901760
    %1062 = vmatpush.msra.mxu0 %v1061
    %v1063 = vand.u32 %v914, 4294901760
    %v1064 = vsub.f32 %v914, %v1063
    %v1065 = vand.u32 %v1064, 4294901760
    %1066 = vmatpush.msra.mxu0 %v1065
    %v1067 = vand.u32 %v913, 4294901760
    %v1068 = vsub.f32 %v913, %v1067
    %v1069 = vand.u32 %v1068, 4294901760
    %1070 = vmatpush.msra.mxu0 %v1069
    %v1071 = vand.u32 %v912, 4294901760
    %v1072 = vsub.f32 %v912, %v1071
    %v1073 = vand.u32 %v1072, 4294901760
    %1074 = vmatpush.msra.mxu0 %v1073
    %v1075 = vand.u32 %v918, 4294901760
    %1076 = vmatmul.f32.gmra.mxu0 %v1075
    %v1077 = vpop.f32.mrf.mxu0
    %v1078 = vadd.f32 %v1045, %v1077
    %1079 = vdwg.mxu0
    %1080 = vmatpush.msra.mxu0 0.0
    %1081 = vmatpush.msra.mxu0 0.0
    %1082 = vmatpush.msra.mxu0 0.0
    %1083 = vmatpush.msra.mxu0 0.0
    %1084 = vmatpush.msra.mxu0 0.0
    %1085 = vmatpush.msra.mxu0 0.0
    %1086 = vmatpush.msra.mxu0 0.0
    %1087 = vmatpush.msra.mxu0 0.0
    %1088 = vmatpush.msra.mxu0 0.0
    %1089 = vmatpush.msra.mxu0 0.0
    %1090 = vmatpush.msra.mxu0 0.0
    %1091 = vmatpush.msra.mxu0 0.0
    %v1092 = vand.u32 %v915, 4294901760
    %1093 = vmatpush.msra.mxu0 %v1092
    %v1094 = vand.u32 %v914, 4294901760
    %1095 = vmatpush.msra.mxu0 %v1094
    %v1096 = vand.u32 %v913, 4294901760
    %1097 = vmatpush.msra.mxu0 %v1096
    %v1098 = vand.u32 %v912, 4294901760
    %1099 = vmatpush.msra.mxu0 %v1098
    %v1100 = vand.u32 %v918, 4294901760
    %1101 = vmatmul.f32.gmra.mxu0 %v1100
    %v1102 = vpop.f32.mrf.mxu0
    %v1103 = vadd.f32 %v1078, %v1102
    %1104 = vdwg.mxu0
    %vm1105 = vcmask 125952
    %v1106 = vsel %vm1105, %v1103, 0.0
    %v1107 = vrot.slane %v1106, 4
    %v1108 = vadd.f32 %v1106, %v1107
    %v1109 = vrot.slane %v1108, 2
    %v1110 = vadd.f32 %v1108, %v1109
    %v1111 = vrot.slane %v1110, 1
    %v1112 = vadd.f32 %v1110, %v1111
    %v1113 = vmul.f32 %v1112, %v874
    %v1114 = vmul.f32 %v1103, %v1103
    %v1115 = vsel %vm1105, %v1114, 0.0
    %v1116 = vrot.slane %v1115, 4
    %v1117 = vadd.f32 %v1115, %v1116
    %v1118 = vrot.slane %v1117, 2
    %v1119 = vadd.f32 %v1117, %v1118
    %v1120 = vrot.slane %v1119, 1
    %v1121 = vadd.f32 %v1119, %v1120
    %v1122 = vmul.f32 %v1121, %v874
    %v1123 = vmul.f32 %v1113, %v1113
    %v1124 = vsub.f32 %v1122, %v1123
    %v1125 = vmax.f32 %v1124, 0.0
    %v1126 = vsub.f32 %v1103, %v1113
    %v1127 = vadd.f32 %v1125, 1e-05
    %v1128 = vrsqrt.pop %v1127
    %v1129 = vmul.f32 %v1128, %v1127
    %v1130 = vmul.f32 %v1129, %v1128
    %v1131 = vmul.f32 0.5, %v1130
    %v1132 = vsub.f32 1.5, %v1131
    %v1133 = vmul.f32 %v1128, %v1132
    %vm1134 = vweird.f32 %v1127
    %vm1135 = vweird.f32 %v1128
    %vm1136 = vmor %vm1134, %vm1135
    %v1137 = vsel %vm1136, %v1128, %v1133
    %v1138 = vmul.f32 %v1126, %v1137
    %v1139 = vld [vmem:[%s8] sm:$0x1]
    %v1141 = vperm.slane %v1139, 0
    %v1143 = vmul.f32 %v1138, %v1141
    %v1144 = vld [vmem:[%s9] sm:$0x1]
    %v1146 = vperm.slane %v1144, 0
    %v1148 = vadd.f32 %v1143, %v1146
    %1149 = vst.msk [vmem:[#allocation2] sm:$0xf] %vm1105, %v1148
    // Predicated region
    $region42: #{_lambda_.3} parent=1 // pred_check
      _
    $region43: #{_lambda_.3} parent=1 // pred_check_branch
      %1151 = sbr.rel (0) target = $region45
    $region44: #{_lambda_.3} parent=1 // pred_region
      %1153 = vsyncadd [#allocation3], 0
      %s1155 = sshll.u32 [#allocation2], 4
      %s1156 = int_to_ptr.vmem [resolvable:$true] %s1155
      %s1157 = sshll.u32 %s10, 4
      %s1158 = int_to_ptr.hbm [resolvable:$true] %s1157
      %1160 = dma.vmem_to_hbm [thread:$0]  %s1156, 64, %s1158, [#allocation3]
    $region45: #{_lambda_.3} parent=1 // pred_fallthru
      _
    // Predicated region
    $region46: #{_lambda_.3} parent=1 // pred_check
      _
    $region47: #{_lambda_.3} parent=1 // pred_check_branch
      %1162 = sbr.rel (0) target = $region49
    $region48: #{_lambda_.3} parent=1 // pred_region
      %1164 = dma.done [#allocation3], 64
    $region49: #{_lambda_.3} parent=1 // pred_fallthru
      _
    %1165 = vsyncpa [#allocation3], 1

</llo_original>
